<compile_context>
chip_gen: v7x
topology: tpu7x:2x2x1
jax: 0.10.0
libtpu: 0.0.40
codegen_flags: <defaults>
</compile_context>

<pallas_src>
import math

import jax
import jax.numpy as jnp
from jax.experimental import pallas as pl
from jax.experimental.pallas import tpu as pltpu

# ----------------------------- model config -----------------------------
BATCH       = 2
IMG_CH      = 3
IMG_SIZE    = 16
PATCH       = 8                        # -> 2x2 = 4 patches
WIDTH       = 32                       # clip_dim / vision width / text width
HEADS       = 2
HEAD_DIM    = WIDTH // HEADS
MLP_DIM     = 4 * WIDTH
V_LAYERS    = 2
T_LAYERS    = 2
EMBED_DIM   = 16                       # output projection dim
VOCAB       = 64
CTX_LEN     = 8
NUM_TASKS   = 3
NUM_EMBEDS  = 2                        # number of task-embedding tables
DTYPE       = jnp.float32
MXU_DTYPE   = jnp.bfloat16             # MXU operand dtype (f32 accumulation)

NUM_PATCHES = (IMG_SIZE // PATCH) ** 2
PATCH_DIM   = IMG_CH * PATCH * PATCH
VIS_SEQ     = NUM_EMBEDS + 1 + NUM_PATCHES          # 2 task + 1 cls + 4 patches = 7
VIS_SEQ_PAD = ((VIS_SEQ + 7) // 8) * 8              # pad to sublane multiple -> 8
Q_SCALE     = 1.0 / math.sqrt(HEAD_DIM)

# --------------------- packed "vector" slab layout (f32, [N_VEC_ROWS, 128]) ---------------------
VEC_COLS       = 128
ROW_V_CLS      = 0
ROW_V_POS      = 1                                   # rows 1..5 (cls + 4 patches)
ROW_T_POS      = ROW_V_POS + (NUM_PATCHES + 1)       # rows 6..13
ROW_V_LN_PRE   = ROW_T_POS + CTX_LEN                 # 14 (gain), 15 (bias)
ROW_V_LN_POST  = ROW_V_LN_PRE + 2                    # 16, 17
ROW_T_LN_F     = ROW_V_LN_POST + 2                   # 18, 19
ROW_LAYERS     = ROW_T_LN_F + 2                      # 20
ROWS_PER_LAYER = 8                                   # ln1_g, ln1_b, qkv_b, out_b, ln2_g, ln2_b, fc1_b, fc2_b
N_VEC_ROWS     = ROW_LAYERS + ROWS_PER_LAYER * (V_LAYERS + T_LAYERS)   # 52

# --------------------- packed matmul-weight slab 1 column layout (bf16, [L, 32, 288]) -----------
W1_QKV  = 0          # 96 cols   (q scale pre-folded)
W1_FC1  = 128        # 128 cols  (128-aligned)
W1_OUT  = 256        # 32 cols   (128-aligned)
W1_COLS = 288


# ----------------------------- in-kernel helpers -----------------------------
def _layernorm(x2, g, b):
    """Row-wise LayerNorm. x2: [M, D] f32; g, b: [1, D] f32."""
    mu = jnp.mean(x2, axis=-1, keepdims=True)
    xc = x2 - mu
    var = jnp.mean(xc * xc, axis=-1, keepdims=True)
    return xc * jax.lax.rsqrt(var + 1e-5) * g + b


def _attn_mask(seq, causal, valid_len):
    """Additive mask [S, S]: 0 where attendable, -1e30 otherwise (built once per tower)."""
    row = jax.lax.broadcasted_iota(jnp.int32, (seq, seq), 0)
    col = jax.lax.broadcasted_iota(jnp.int32, (seq, seq), 1)
    valid = col < valid_len
    if causal:
        valid = jnp.logical_and(valid, col <= row)
    return jnp.where(valid, 0.0, -1e30).astype(jnp.float32)


def _mha(qkv, out_w, batch, seq, mask):
    """Multi-head attention + output projection.

    qkv: [B*S, 3*W] f32 (q already scaled via folded weights); out_w: [W, W] bf16.
    Per-head static lane slices; each head's output is folded directly into the
    output projection (row slice of out_w) so no lane-axis concat is needed.
    """
    # TODO(synk): a single head-batched einsum (bqhd,bkhd->bhqk) would shave a few
    # instructions but needs a minor-dim-splitting reshape; static-slice loop kept
    # for lowering robustness (HEADS == 2 at this size).
    d, hd = WIDTH, HEAD_DIM
    acc = jnp.zeros((batch * seq, d), jnp.float32)
    for h in range(HEADS):
        qh = qkv[:, h * hd:(h + 1) * hd].reshape(batch, seq, hd).astype(MXU_DTYPE)
        kh = qkv[:, d + h * hd:d + (h + 1) * hd].reshape(batch, seq, hd).astype(MXU_DTYPE)
        vh = qkv[:, 2 * d + h * hd:2 * d + (h + 1) * hd].reshape(batch, seq, hd).astype(MXU_DTYPE)
        s = jnp.einsum('bqd,bkd->bqk', qh, kh, preferred_element_type=jnp.float32)
        s = s + mask                                   # [B,S,S] + [S,S]
        s = s - jnp.max(s, axis=-1, keepdims=True)
        p = jnp.exp(s)
        p = p * pl.reciprocal(jnp.sum(p, axis=-1, keepdims=True), approx=True)
        oh = jnp.einsum('bqk,bkd->bqd', p.astype(MXU_DTYPE), vh,
                        preferred_element_type=jnp.float32)
        acc = acc + jnp.dot(oh.reshape(batch * seq, hd).astype(MXU_DTYPE),
                            out_w[h * hd:(h + 1) * hd, :],
                            preferred_element_type=jnp.float32)
    return acc


def _blocks(x2, batch, seq, mask, layer_base, n_layers, vecs_ref, w1_ref, w2_ref):
    """Pre-LN residual attention blocks reading packed weight slabs with static offsets."""
    d = WIDTH
    for l in range(n_layers):
        li = layer_base + l
        r = ROW_LAYERS + li * ROWS_PER_LAYER
        ln1_g = vecs_ref[r + 0:r + 1, :d]
        ln1_b = vecs_ref[r + 1:r + 2, :d]
        qkv_b = vecs_ref[r + 2:r + 3, :3 * d]
        out_b = vecs_ref[r + 3:r + 4, :d]
        ln2_g = vecs_ref[r + 4:r + 5, :d]
        ln2_b = vecs_ref[r + 5:r + 6, :d]
        fc1_b = vecs_ref[r + 6:r + 7, :MLP_DIM]
        fc2_b = vecs_ref[r + 7:r + 8, :d]
        qkv_w = w1_ref[li, :, W1_QKV:W1_QKV + 3 * d]          # (W, 3W)  bf16
        fc1_w = w1_ref[li, :, W1_FC1:W1_FC1 + MLP_DIM]        # (W, MLP) bf16
        out_w = w1_ref[li, :, W1_OUT:W1_OUT + d]              # (W, W)   bf16
        fc2_w = w2_ref[li]                                    # (MLP, W) bf16

        # --- attention branch ---
        h = _layernorm(x2, ln1_g, ln1_b)
        qkv = jnp.dot(h.astype(MXU_DTYPE), qkv_w,
                      preferred_element_type=jnp.float32) + qkv_b
        x2 = x2 + _mha(qkv, out_w, batch, seq, mask) + out_b
        # --- MLP branch ---
        h = _layernorm(x2, ln2_g, ln2_b)
        h = jnp.dot(h.astype(MXU_DTYPE), fc1_w,
                    preferred_element_type=jnp.float32) + fc1_b
        # TODO(synk): reference CLIP may use exact-erf GELU or QuickGELU; tanh approx used here.
        h = jax.nn.gelu(h, approximate=True)
        h = jnp.dot(h.astype(MXU_DTYPE), fc2_w,
                    preferred_element_type=jnp.float32) + fc2_b
        x2 = x2 + h
    return x2


def _head(pooled, ln_g, ln_b, proj):
    """Final LayerNorm on the pooled token, output projection, L2-normalize."""
    pooled = _layernorm(pooled, ln_g, ln_b)
    feat = jnp.dot(pooled.astype(MXU_DTYPE), proj, preferred_element_type=jnp.float32)
    nrm = jnp.sum(feat * feat, axis=-1, keepdims=True)
    return feat * jax.lax.rsqrt(jnp.maximum(nrm, 1e-12))


# ----------------------------- fused two-tower kernel -----------------------------
def _clip_fused_kernel(eot_ref,                       # SMEM scalar prefetch: (B,) int32 EOT indices
                       patches_ref, task_ref, tok_ref, vecs_ref,
                       conv_w_ref, w1_ref, w2_ref, proj_ref,
                       o_ref):
    d = WIDTH

    # ---------------- vision tower (grid step 0) ----------------
    @pl.when(pl.program_id(0) == 0)
    def _vision_tower():
        bsz, n_patch, cpp = patches_ref.shape
        seq = VIS_SEQ_PAD
        # conv1 (stride == kernel, no bias) as one patch matmul on the MXU.
        pe = jnp.dot(patches_ref[...].reshape(bsz * n_patch, cpp).astype(MXU_DTYPE),
                     conv_w_ref[...], preferred_element_type=jnp.float32)
        pe = pe.reshape(bsz, n_patch, d) + \
            vecs_ref[ROW_V_POS + 1:ROW_V_POS + 1 + n_patch, :d][None]
        cls_row = vecs_ref[ROW_V_CLS:ROW_V_CLS + 1, :d] + \
            vecs_ref[ROW_V_POS:ROW_V_POS + 1, :d]
        cls_tok = jnp.broadcast_to(cls_row[None], (bsz, 1, d))
        pad_tok = jnp.zeros((bsz, seq - VIS_SEQ, d), jnp.float32)
        # Token assembly as a value: [task_0, task_1, cls, patch_0..3, pad]
        x = jnp.concatenate([task_ref[...], cls_tok, pe, pad_tok], axis=1)   # (B, 8, D)
        x2 = x.reshape(bsz * seq, d)
        x2 = _layernorm(x2, vecs_ref[ROW_V_LN_PRE:ROW_V_LN_PRE + 1, :d],
                        vecs_ref[ROW_V_LN_PRE + 1:ROW_V_LN_PRE + 2, :d])      # ln_pre
        mask = _attn_mask(seq, causal=False, valid_len=VIS_SEQ)              # pad key masked out
        x2 = _blocks(x2, bsz, seq, mask, 0, V_LAYERS, vecs_ref, w1_ref, w2_ref)
        pooled = x2.reshape(bsz, seq, d)[:, 0, :]     # token 0 == first task embedding (static slice)
        feat = _head(pooled,
                     vecs_ref[ROW_V_LN_POST:ROW_V_LN_POST + 1, :d],
                     vecs_ref[ROW_V_LN_POST + 1:ROW_V_LN_POST + 2, :d],
                     proj_ref[0])
        o_ref[...] = feat.reshape(1, bsz, EMBED_DIM).astype(o_ref.dtype)

    # ---------------- text tower (grid step 1) ----------------
    @pl.when(pl.program_id(0) == 1)
    def _text_tower():
        bsz, seq, _ = tok_ref.shape
        x = tok_ref[...] + vecs_ref[ROW_T_POS:ROW_T_POS + seq, :d][None]
        x2 = x.reshape(bsz * seq, d)
        mask = _attn_mask(seq, causal=True, valid_len=seq)
        x2 = _blocks(x2, bsz, seq, mask, V_LAYERS, T_LAYERS, vecs_ref, w1_ref, w2_ref)
        # EOT pooling from SMEM-prefetched indices (no host one-hot, no matmul).
        rows = []
        for b in range(bsz):
            e = eot_ref[b]
            sel = (jax.lax.broadcasted_iota(jnp.int32, (seq, d), 0) == e).astype(jnp.float32)
            rows.append(jnp.sum(x2[b * seq:(b + 1) * seq, :] * sel, axis=0, keepdims=True))
        pooled = jnp.concatenate(rows, axis=0)                                # (B, D)
        feat = _head(pooled,
                     vecs_ref[ROW_T_LN_F:ROW_T_LN_F + 1, :d],
                     vecs_ref[ROW_T_LN_F + 1:ROW_T_LN_F + 2, :d],
                     proj_ref[1])
        o_ref[...] = feat.reshape(1, bsz, EMBED_DIM).astype(o_ref.dtype)


# ----------------------------- parameter init -----------------------------
def _init_blocks(key, num_layers, width, mlp_dim, prefix):
    k1, k2, k3, k4 = jax.random.split(key, 4)
    s = 0.02
    L = num_layers
    return {
        prefix + "ln1_g": jnp.ones((L, width), DTYPE),
        prefix + "ln1_b": jnp.zeros((L, width), DTYPE),
        prefix + "qkv_w": (s * jax.random.normal(k1, (L, width, 3 * width))).astype(DTYPE),
        prefix + "qkv_b": jnp.zeros((L, 3 * width), DTYPE),
        prefix + "out_w": (s * jax.random.normal(k2, (L, width, width))).astype(DTYPE),
        prefix + "out_b": jnp.zeros((L, width), DTYPE),
        prefix + "ln2_g": jnp.ones((L, width), DTYPE),
        prefix + "ln2_b": jnp.zeros((L, width), DTYPE),
        prefix + "fc1_w": (s * jax.random.normal(k3, (L, width, mlp_dim))).astype(DTYPE),
        prefix + "fc1_b": jnp.zeros((L, mlp_dim), DTYPE),
        prefix + "fc2_w": (s * jax.random.normal(k4, (L, mlp_dim, width))).astype(DTYPE),
        prefix + "fc2_b": jnp.zeros((L, width), DTYPE),
    }


def init_params(key):
    keys = jax.random.split(key, 10)
    s = 0.02
    params = {
        # vision tower
        "v_conv_w": (s * jax.random.normal(keys[0], (PATCH_DIM, WIDTH))).astype(DTYPE),
        "v_cls": (s * jax.random.normal(keys[1], (1, WIDTH))).astype(DTYPE),
        "v_pos": (s * jax.random.normal(keys[2], (NUM_PATCHES + 1, WIDTH))).astype(DTYPE),
        "v_ln_pre_g": jnp.ones((1, WIDTH), DTYPE),
        "v_ln_pre_b": jnp.zeros((1, WIDTH), DTYPE),
        "v_ln_post_g": jnp.ones((1, WIDTH), DTYPE),
        "v_ln_post_b": jnp.zeros((1, WIDTH), DTYPE),
        "v_proj": (s * jax.random.normal(keys[3], (WIDTH, EMBED_DIM))).astype(DTYPE),
        # task embedding tables (nn.ModuleList of nn.Embedding(num_tasks, clip_dim))
        "task_emb": [(s * jax.random.normal(keys[4 + i], (NUM_TASKS, WIDTH))).astype(DTYPE)
                     for i in range(NUM_EMBEDS)],
        # text tower
        "t_tok_emb": (s * jax.random.normal(keys[6], (VOCAB, WIDTH))).astype(DTYPE),
        "t_pos": (s * jax.random.normal(keys[7], (CTX_LEN, WIDTH))).astype(DTYPE),
        "t_ln_f_g": jnp.ones((1, WIDTH), DTYPE),
        "t_ln_f_b": jnp.zeros((1, WIDTH), DTYPE),
        "t_proj": (s * jax.random.normal(keys[8], (WIDTH, EMBED_DIM))).astype(DTYPE),
        "logit_scale": jnp.asarray(math.log(1.0 / 0.07), DTYPE),
    }
    kv, kt = jax.random.split(keys[9])
    params.update(_init_blocks(kv, V_LAYERS, WIDTH, MLP_DIM, "v_"))
    params.update(_init_blocks(kt, T_LAYERS, WIDTH, MLP_DIM, "t_"))
    return params


# ----------------------------- host-side weight packing (one-time) -----------------------------
def _pad_cols(m, cols=VEC_COLS):
    m = jnp.asarray(m, jnp.float32)
    if m.ndim == 1:
        m = m.reshape(1, -1)
    return jnp.pad(m, ((0, 0), (0, cols - m.shape[1])))


def pack_params(p):
    """Pack the many small weights into a few lane-dense slabs (done once, outside jit)."""
    rows = [
        _pad_cols(p["v_cls"]),                         # ROW_V_CLS
        _pad_cols(p["v_pos"]),                         # ROW_V_POS .. +NUM_PATCHES
        _pad_cols(p["t_pos"]),                         # ROW_T_POS .. +CTX_LEN-1
        _pad_cols(p["v_ln_pre_g"]), _pad_cols(p["v_ln_pre_b"]),
        _pad_cols(p["v_ln_post_g"]), _pad_cols(p["v_ln_post_b"]),
        _pad_cols(p["t_ln_f_g"]), _pad_cols(p["t_ln_f_b"]),
    ]
    w1_blocks, w2_blocks = [], []
    for prefix, n_layers in (("v_", V_LAYERS), ("t_", T_LAYERS)):
        for l in range(n_layers):
            # fold 1/sqrt(head_dim) into the q part of weight AND bias
            qkv_b = p[prefix + "qkv_b"][l].at[:WIDTH].multiply(Q_SCALE)
            rows += [
                _pad_cols(p[prefix + "ln1_g"][l]), _pad_cols(p[prefix + "ln1_b"][l]),
                _pad_cols(qkv_b), _pad_cols(p[prefix + "out_b"][l]),
                _pad_cols(p[prefix + "ln2_g"][l]), _pad_cols(p[prefix + "ln2_b"][l]),
                _pad_cols(p[prefix + "fc1_b"][l]), _pad_cols(p[prefix + "fc2_b"][l]),
            ]
            qkv_w = p[prefix + "qkv_w"][l].at[:, :WIDTH].multiply(Q_SCALE)
            blk = jnp.zeros((WIDTH, W1_COLS), jnp.float32)
            blk = blk.at[:, W1_QKV:W1_QKV + 3 * WIDTH].set(qkv_w)
            blk = blk.at[:, W1_FC1:W1_FC1 + MLP_DIM].set(p[prefix + "fc1_w"][l])
            blk = blk.at[:, W1_OUT:W1_OUT + WIDTH].set(p[prefix + "out_w"][l])
            w1_blocks.append(blk)
            w2_blocks.append(p[prefix + "fc2_w"][l])
    vecs = jnp.concatenate(rows, axis=0)
    assert vecs.shape == (N_VEC_ROWS, VEC_COLS)
    return {
        "vecs": vecs,                                                 # f32  [52, 128]
        "w1": jnp.stack(w1_blocks, 0).astype(MXU_DTYPE),              # bf16 [4, 32, 288]
        "w2": jnp.stack(w2_blocks, 0).astype(MXU_DTYPE),              # bf16 [4, 128, 32]
        "conv_w": p["v_conv_w"].astype(MXU_DTYPE),                    # bf16 [192, 32]
        "proj": jnp.stack([p["v_proj"], p["t_proj"]], 0).astype(MXU_DTYPE),  # bf16 [2, 32, 16]
        "task_emb": p["task_emb"],
        "t_tok_emb": p["t_tok_emb"],
        "logit_scale": p["logit_scale"],
    }


# ----------------------------- host-side forward -----------------------------
def clip_wrapper_forward(packed, images, texts, tasks):
    """CLIPWrapper.forward (output_dict=False, logit_bias=None, method='first')."""
    B, C, H, W_ = images.shape
    gh, gw = H // PATCH, W_ // PATCH
    n_patch = gh * gw
    # NCHW -> [B, Np, C*P*P] patch vectors (matches conv1 weight order C,kh,kw).  XLA glue.
    patches = (images.reshape(B, C, gh, PATCH, gw, PATCH)
               .transpose(0, 2, 4, 1, 3, 5)
               .reshape(B, n_patch, C * PATCH * PATCH))
    # Embedding gathers + EOT argmax stay as tiny XLA glue.
    task_embeds = jnp.stack([jnp.take(t, tasks, axis=0) for t in packed["task_emb"]],
                            axis=1)                                    # [B, NE, D]
    tok = jnp.take(packed["t_tok_emb"], texts, axis=0)                 # [B, L, D]
    eot = jnp.argmax(texts, axis=-1).astype(jnp.int32)                 # CLIP: highest id = EOT

    def resident(shape):                                               # full array, fetched once
        nd = len(shape)
        return pl.BlockSpec(shape, lambda i, _eot, _nd=nd: (0,) * _nd)

    grid_spec = pltpu.PrefetchScalarGridSpec(
        num_scalar_prefetch=1,                                         # eot -> SMEM
        grid=(2,),                                                     # 0 = vision, 1 = text
        in_specs=[
            resident(patches.shape), resident(task_embeds.shape), resident(tok.shape),
            resident(packed["vecs"].shape), resident(packed["conv_w"].shape),
            resident(packed["w1"].shape), resident(packed["w2"].shape),
            resident(packed["proj"].shape),
        ],
        out_specs=pl.BlockSpec((1, B, EMBED_DIM), lambda i, _eot: (i, 0, 0)),
    )
    feats = pl.pallas_call(
        _clip_fused_kernel,
        out_shape=jax.ShapeDtypeStruct((2, B, EMBED_DIM), DTYPE),
        grid_spec=grid_spec,
        compiler_params=pltpu.CompilerParams(
            dimension_semantics=("parallel",)),        # v7x: towers on separate TensorCores
    )(eot, patches, task_embeds, tok, packed["vecs"], packed["conv_w"],
      packed["w1"], packed["w2"], packed["proj"])

    image_features = feats[0]
    text_features = feats[1]
    return image_features, text_features, jnp.exp(packed["logit_scale"])


# ----------------------------- main -----------------------------
if __name__ == "__main__":
    key = jax.random.PRNGKey(0)
    k_params, k_img, k_txt, k_task = jax.random.split(key, 4)

    params = pack_params(init_params(k_params))
    images = jax.random.normal(k_img, (BATCH, IMG_CH, IMG_SIZE, IMG_SIZE), DTYPE)
    texts = jax.random.randint(k_txt, (BATCH, CTX_LEN), 0, VOCAB, dtype=jnp.int32)
    tasks = jax.random.randint(k_task, (BATCH,), 0, NUM_TASKS, dtype=jnp.int32)

    fwd = jax.jit(clip_wrapper_forward)
    img_feat, txt_feat, logit_scale = fwd(params, images, texts, tasks)
    jax.block_until_ready((img_feat, txt_feat, logit_scale))

    assert img_feat.shape == (BATCH, EMBED_DIM)
    assert txt_feat.shape == (BATCH, EMBED_DIM)
    # features are L2-normalized
    assert bool(jnp.allclose(jnp.linalg.norm(img_feat, axis=-1), 1.0, atol=1e-4))
    assert bool(jnp.allclose(jnp.linalg.norm(txt_feat, axis=-1), 1.0, atol=1e-4))
    assert bool(jnp.isfinite(logit_scale))
    print("KERNEL_OK")
</pallas_src>

<mosaic_0001>
module attributes {stable_mosaic.version = 11 : i64} {
  func.func @_clip_fused_kernel(%arg0: i32, %arg1: memref<2xi32, #tpu.memory_space<smem>>, %arg2: memref<2x4x192xf32, #tpu.memory_space<vmem>>, %arg3: memref<2x2x32xf32, #tpu.memory_space<vmem>>, %arg4: memref<2x8x32xf32, #tpu.memory_space<vmem>>, %arg5: memref<52x128xf32, #tpu.memory_space<vmem>>, %arg6: memref<192x32xbf16, #tpu.memory_space<vmem>>, %arg7: memref<4x32x288xbf16, #tpu.memory_space<vmem>>, %arg8: memref<4x128x32xbf16, #tpu.memory_space<vmem>>, %arg9: memref<2x32x16xbf16, #tpu.memory_space<vmem>>, %arg10: memref<1x2x16xf32, #tpu.memory_space<vmem>>) attributes {dimension_semantics = [#tpu.dimension_semantics<parallel>], iteration_bounds = array<i64: 2>, scalar_prefetch = 1 : i64, scratch_operands = 0 : i64, tpu.core_type = #tpu.core_type<tc>, window_params = [{pipeline_mode = #tpu.pipeline_mode<synchronous>, transform_indices = @transform_0, window_bounds = array<i64: 2, 4, 192>}, {pipeline_mode = #tpu.pipeline_mode<synchronous>, transform_indices = @transform_1, window_bounds = array<i64: 2, 2, 32>}, {pipeline_mode = #tpu.pipeline_mode<synchronous>, transform_indices = @transform_2, window_bounds = array<i64: 2, 8, 32>}, {pipeline_mode = #tpu.pipeline_mode<synchronous>, transform_indices = @transform_3, window_bounds = array<i64: 52, 128>}, {pipeline_mode = #tpu.pipeline_mode<synchronous>, transform_indices = @transform_4, window_bounds = array<i64: 192, 32>}, {pipeline_mode = #tpu.pipeline_mode<synchronous>, transform_indices = @transform_5, window_bounds = array<i64: 4, 32, 288>}, {pipeline_mode = #tpu.pipeline_mode<synchronous>, transform_indices = @transform_6, window_bounds = array<i64: 4, 128, 32>}, {pipeline_mode = #tpu.pipeline_mode<synchronous>, transform_indices = @transform_7, window_bounds = array<i64: 2, 32, 16>}, {transform_indices = @transform_8, window_bounds = array<i64: 1, 2, 16>}]} {
    %c0_i32 = arith.constant 0 : i32
    %0 = arith.cmpi eq, %arg0, %c0_i32 : i32
    %1 = arith.extui %0 : i1 to i32
    %c0_i32_0 = arith.constant 0 : i32
    %2 = arith.cmpi ne, %1, %c0_i32_0 : i32
    scf.if %2 {
      %c0 = arith.constant 0 : index
      %c0_2 = arith.constant 0 : index
      %c0_3 = arith.constant 0 : index
      %6 = vector.load %arg2[%c0, %c0_2, %c0_3] : memref<2x4x192xf32, #tpu.memory_space<vmem>>, vector<2x4x192xf32>
      %7 = vector.shape_cast %6 : vector<2x4x192xf32> to vector<8x192xf32>
      %8 = arith.truncf %7 : vector<8x192xf32> to vector<8x192xbf16>
      %c0_4 = arith.constant 0 : index
      %c0_5 = arith.constant 0 : index
      %9 = vector.load %arg6[%c0_4, %c0_5] : memref<192x32xbf16, #tpu.memory_space<vmem>>, vector<192x32xbf16>
      %cst = arith.constant dense<0.000000e+00> : vector<8x32xf32>
      %10 = tpu.matmul %8, %9, %cst {dimension_numbers = #tpu.dot_dimension_numbers<[1], [0], [0], [1], [0, 0, 1, 1], [], []>} : vector<8x192xbf16>, vector<192x32xbf16>, vector<8x32xf32> -> vector<8x32xf32>
      %11 = vector.shape_cast %10 : vector<8x32xf32> to vector<2x4x32xf32>
      %c2 = arith.constant 2 : index
      %c0_6 = arith.constant 0 : index
      %12 = vector.load %arg5[%c2, %c0_6] : memref<52x128xf32, #tpu.memory_space<vmem>>, vector<4x32xf32>
      %13 = vector.shape_cast %12 : vector<4x32xf32> to vector<1x4x32xf32>
      %14 = vector.broadcast %13 : vector<1x4x32xf32> to vector<2x4x32xf32>
      %15 = arith.addf %11, %14 : vector<2x4x32xf32>
      %c0_7 = arith.constant 0 : index
      %c0_8 = arith.constant 0 : index
      %16 = vector.load %arg5[%c0_7, %c0_8] : memref<52x128xf32, #tpu.memory_space<vmem>>, vector<1x32xf32>
      %c1 = arith.constant 1 : index
      %c0_9 = arith.constant 0 : index
      %17 = vector.load %arg5[%c1, %c0_9] : memref<52x128xf32, #tpu.memory_space<vmem>>, vector<1x32xf32>
      %18 = arith.addf %16, %17 : vector<1x32xf32>
      %19 = vector.shape_cast %18 : vector<1x32xf32> to vector<1x1x32xf32>
      %20 = vector.shape_cast %19 : vector<1x1x32xf32> to vector<1x1x32xf32>
      %21 = vector.broadcast %20 : vector<1x1x32xf32> to vector<2x1x32xf32>
      %cst_10 = arith.constant 0.000000e+00 : f32
      %22 = vector.broadcast %cst_10 : f32 to vector<2x1x32xf32>
      %c0_11 = arith.constant 0 : index
      %c0_12 = arith.constant 0 : index
      %c0_13 = arith.constant 0 : index
      %23 = vector.load %arg3[%c0_11, %c0_12, %c0_13] : memref<2x2x32xf32, #tpu.memory_space<vmem>>, vector<2x2x32xf32>
      %24 = tpu.concatenate %23, %21, %15, %22 in 1 : vector<2x2x32xf32>, vector<2x1x32xf32>, vector<2x4x32xf32>, vector<2x1x32xf32> -> vector<2x8x32xf32>
      %25 = vector.shape_cast %24 : vector<2x8x32xf32> to vector<16x32xf32>
      %c14 = arith.constant 14 : index
      %c0_14 = arith.constant 0 : index
      %26 = vector.load %arg5[%c14, %c0_14] : memref<52x128xf32, #tpu.memory_space<vmem>>, vector<1x32xf32>
      %c15 = arith.constant 15 : index
      %c0_15 = arith.constant 0 : index
      %27 = vector.load %arg5[%c15, %c0_15] : memref<52x128xf32, #tpu.memory_space<vmem>>, vector<1x32xf32>
      %cst_16 = arith.constant dense<0.000000e+00> : vector<16xf32>
      %28 = vector.multi_reduction <add>, %25, %cst_16 [1] : vector<16x32xf32> to vector<16xf32>
      %29 = vector.shape_cast %28 : vector<16xf32> to vector<16x1xf32>
      %cst_17 = arith.constant 3.200000e+01 : f32
      %30 = vector.broadcast %cst_17 : f32 to vector<16x1xf32>
      %31 = arith.divf %29, %30 : vector<16x1xf32>
      %32 = vector.broadcast %31 : vector<16x1xf32> to vector<16x32xf32>
      %33 = arith.subf %25, %32 : vector<16x32xf32>
      %34 = arith.mulf %33, %33 : vector<16x32xf32>
      %cst_18 = arith.constant dense<0.000000e+00> : vector<16xf32>
      %35 = vector.multi_reduction <add>, %34, %cst_18 [1] : vector<16x32xf32> to vector<16xf32>
      %36 = vector.shape_cast %35 : vector<16xf32> to vector<16x1xf32>
      %cst_19 = arith.constant 3.200000e+01 : f32
      %37 = vector.broadcast %cst_19 : f32 to vector<16x1xf32>
      %38 = arith.divf %36, %37 : vector<16x1xf32>
      %cst_20 = arith.constant 9.99999974E-6 : f32
      %39 = vector.broadcast %cst_20 : f32 to vector<16x1xf32>
      %40 = arith.addf %38, %39 : vector<16x1xf32>
      %41 = math.rsqrt %40 : vector<16x1xf32>
      %42 = vector.broadcast %41 : vector<16x1xf32> to vector<16x32xf32>
      %43 = arith.mulf %33, %42 : vector<16x32xf32>
      %44 = vector.broadcast %26 : vector<1x32xf32> to vector<16x32xf32>
      %45 = arith.mulf %43, %44 : vector<16x32xf32>
      %46 = vector.broadcast %27 : vector<1x32xf32> to vector<16x32xf32>
      %47 = arith.addf %45, %46 : vector<16x32xf32>
      %48 = tpu.iota {dimensions = array<i32: 1>} : vector<8x8xi32>
      %c7_i32 = arith.constant 7 : i32
      %49 = vector.broadcast %c7_i32 : i32 to vector<8x8xi32>
      %50 = arith.cmpi slt, %48, %49 : vector<8x8xi32>
      %cst_21 = arith.constant 0.000000e+00 : f32
      %cst_22 = arith.constant -1.000000e+30 : f32
      %51 = vector.broadcast %cst_21 : f32 to vector<8x8xf32>
      %52 = vector.broadcast %cst_22 : f32 to vector<8x8xf32>
      %53 = arith.select %50, %51, %52 : vector<8x8xi1>, vector<8x8xf32>
      %c20 = arith.constant 20 : index
      %c0_23 = arith.constant 0 : index
      %54 = vector.load %arg5[%c20, %c0_23] : memref<52x128xf32, #tpu.memory_space<vmem>>, vector<1x32xf32>
      %c21 = arith.constant 21 : index
      %c0_24 = arith.constant 0 : index
      %55 = vector.load %arg5[%c21, %c0_24] : memref<52x128xf32, #tpu.memory_space<vmem>>, vector<1x32xf32>
      %c22 = arith.constant 22 : index
      %c0_25 = arith.constant 0 : index
      %56 = vector.load %arg5[%c22, %c0_25] : memref<52x128xf32, #tpu.memory_space<vmem>>, vector<1x96xf32>
      %c23 = arith.constant 23 : index
      %c0_26 = arith.constant 0 : index
      %57 = vector.load %arg5[%c23, %c0_26] : memref<52x128xf32, #tpu.memory_space<vmem>>, vector<1x32xf32>
      %c24 = arith.constant 24 : index
      %c0_27 = arith.constant 0 : index
      %58 = vector.load %arg5[%c24, %c0_27] : memref<52x128xf32, #tpu.memory_space<vmem>>, vector<1x32xf32>
      %c25 = arith.constant 25 : index
      %c0_28 = arith.constant 0 : index
      %59 = vector.load %arg5[%c25, %c0_28] : memref<52x128xf32, #tpu.memory_space<vmem>>, vector<1x32xf32>
      %c26 = arith.constant 26 : index
      %c0_29 = arith.constant 0 : index
      %60 = vector.load %arg5[%c26, %c0_29] : memref<52x128xf32, #tpu.memory_space<vmem>>, vector<1x128xf32>
      %c27 = arith.constant 27 : index
      %c0_30 = arith.constant 0 : index
      %61 = vector.load %arg5[%c27, %c0_30] : memref<52x128xf32, #tpu.memory_space<vmem>>, vector<1x32xf32>
      %c0_31 = arith.constant 0 : index
      %c0_32 = arith.constant 0 : index
      %c0_33 = arith.constant 0 : index
      %62 = vector.load %arg7[%c0_31, %c0_32, %c0_33] : memref<4x32x288xbf16, #tpu.memory_space<vmem>>, vector<1x32x96xbf16>
      %63 = vector.shape_cast %62 : vector<1x32x96xbf16> to vector<32x96xbf16>
      %c0_34 = arith.constant 0 : index
      %c0_35 = arith.constant 0 : index
      %c128 = arith.constant 128 : index
      %64 = vector.load %arg7[%c0_34, %c0_35, %c128] : memref<4x32x288xbf16, #tpu.memory_space<vmem>>, vector<1x32x128xbf16>
      %65 = vector.shape_cast %64 : vector<1x32x128xbf16> to vector<32x128xbf16>
      %c0_36 = arith.constant 0 : index
      %c0_37 = arith.constant 0 : index
      %c256 = arith.constant 256 : index
      %66 = vector.load %arg7[%c0_36, %c0_37, %c256] : memref<4x32x288xbf16, #tpu.memory_space<vmem>>, vector<1x32x32xbf16>
      %67 = vector.shape_cast %66 : vector<1x32x32xbf16> to vector<32x32xbf16>
      %c0_38 = arith.constant 0 : index
      %c0_39 = arith.constant 0 : index
      %c0_40 = arith.constant 0 : index
      %68 = vector.load %arg8[%c0_38, %c0_39, %c0_40] : memref<4x128x32xbf16, #tpu.memory_space<vmem>>, vector<1x128x32xbf16>
      %69 = vector.shape_cast %68 : vector<1x128x32xbf16> to vector<128x32xbf16>
      %cst_41 = arith.constant dense<0.000000e+00> : vector<16xf32>
      %70 = vector.multi_reduction <add>, %47, %cst_41 [1] : vector<16x32xf32> to vector<16xf32>
      %71 = vector.shape_cast %70 : vector<16xf32> to vector<16x1xf32>
      %cst_42 = arith.constant 3.200000e+01 : f32
      %72 = vector.broadcast %cst_42 : f32 to vector<16x1xf32>
      %73 = arith.divf %71, %72 : vector<16x1xf32>
      %74 = vector.broadcast %73 : vector<16x1xf32> to vector<16x32xf32>
      %75 = arith.subf %47, %74 : vector<16x32xf32>
      %76 = arith.mulf %75, %75 : vector<16x32xf32>
      %cst_43 = arith.constant dense<0.000000e+00> : vector<16xf32>
      %77 = vector.multi_reduction <add>, %76, %cst_43 [1] : vector<16x32xf32> to vector<16xf32>
      %78 = vector.shape_cast %77 : vector<16xf32> to vector<16x1xf32>
      %cst_44 = arith.constant 3.200000e+01 : f32
      %79 = vector.broadcast %cst_44 : f32 to vector<16x1xf32>
      %80 = arith.divf %78, %79 : vector<16x1xf32>
      %cst_45 = arith.constant 9.99999974E-6 : f32
      %81 = vector.broadcast %cst_45 : f32 to vector<16x1xf32>
      %82 = arith.addf %80, %81 : vector<16x1xf32>
      %83 = math.rsqrt %82 : vector<16x1xf32>
      %84 = vector.broadcast %83 : vector<16x1xf32> to vector<16x32xf32>
      %85 = arith.mulf %75, %84 : vector<16x32xf32>
      %86 = vector.broadcast %54 : vector<1x32xf32> to vector<16x32xf32>
      %87 = arith.mulf %85, %86 : vector<16x32xf32>
      %88 = vector.broadcast %55 : vector<1x32xf32> to vector<16x32xf32>
      %89 = arith.addf %87, %88 : vector<16x32xf32>
      %90 = arith.truncf %89 : vector<16x32xf32> to vector<16x32xbf16>
      %cst_46 = arith.constant dense<0.000000e+00> : vector<16x96xf32>
      %91 = tpu.matmul %90, %63, %cst_46 {dimension_numbers = #tpu.dot_dimension_numbers<[1], [0], [0], [1], [0, 0, 1, 1], [], []>} : vector<16x32xbf16>, vector<32x96xbf16>, vector<16x96xf32> -> vector<16x96xf32>
      %92 = vector.broadcast %56 : vector<1x96xf32> to vector<16x96xf32>
      %93 = arith.addf %91, %92 : vector<16x96xf32>
      %cst_47 = arith.constant 0.000000e+00 : f32
      %94 = vector.broadcast %cst_47 : f32 to vector<16x32xf32>
      %95 = vector.extract_strided_slice %93 {offsets = [0, 0], sizes = [16, 16], strides = [1, 1]} : vector<16x96xf32> to vector<16x16xf32>
      %96 = vector.shape_cast %95 : vector<16x16xf32> to vector<2x8x16xf32>
      %97 = arith.truncf %96 : vector<2x8x16xf32> to vector<2x8x16xbf16>
      %98 = vector.extract_strided_slice %93 {offsets = [0, 32], sizes = [16, 16], strides = [1, 1]} : vector<16x96xf32> to vector<16x16xf32>
      %99 = vector.shape_cast %98 : vector<16x16xf32> to vector<2x8x16xf32>
      %100 = arith.truncf %99 : vector<2x8x16xf32> to vector<2x8x16xbf16>
      %101 = vector.extract_strided_slice %93 {offsets = [0, 64], sizes = [16, 16], strides = [1, 1]} : vector<16x96xf32> to vector<16x16xf32>
      %102 = vector.shape_cast %101 : vector<16x16xf32> to vector<2x8x16xf32>
      %103 = arith.truncf %102 : vector<2x8x16xf32> to vector<2x8x16xbf16>
      "tpu.trace_start"() <{level = 10 : i32, message = "bqd,bkd->bqk"}> : () -> ()
      %cst_48 = arith.constant dense<0.000000e+00> : vector<2x8x8xf32>
      %104 = tpu.matmul %97, %100, %cst_48 {dimension_numbers = #tpu.dot_dimension_numbers<[2], [2], [1], [1], [0, 0, 0, 1, 1, 1], [0], [0]>} : vector<2x8x16xbf16>, vector<2x8x16xbf16>, vector<2x8x8xf32> -> vector<2x8x8xf32>
      "tpu.trace_stop"() : () -> ()
      %105 = vector.shape_cast %53 : vector<8x8xf32> to vector<1x8x8xf32>
      %106 = vector.broadcast %105 : vector<1x8x8xf32> to vector<2x8x8xf32>
      %107 = arith.addf %104, %106 : vector<2x8x8xf32>
      %cst_49 = arith.constant dense<0xFF800000> : vector<2x8xf32>
      %108 = vector.multi_reduction <maximumf>, %107, %cst_49 [2] : vector<2x8x8xf32> to vector<2x8xf32>
      %109 = vector.shape_cast %108 : vector<2x8xf32> to vector<2x8x1xf32>
      %110 = vector.broadcast %109 : vector<2x8x1xf32> to vector<2x8x8xf32>
      %111 = arith.subf %107, %110 : vector<2x8x8xf32>
      %112 = math.exp %111 : vector<2x8x8xf32>
      %cst_50 = arith.constant dense<0.000000e+00> : vector<2x8xf32>
      %113 = vector.multi_reduction <add>, %112, %cst_50 [2] : vector<2x8x8xf32> to vector<2x8xf32>
      %114 = vector.shape_cast %113 : vector<2x8xf32> to vector<2x8x1xf32>
      %115 = tpu.reciprocal %114 {approx = true} : vector<2x8x1xf32> -> vector<2x8x1xf32>
      %116 = vector.broadcast %115 : vector<2x8x1xf32> to vector<2x8x8xf32>
      %117 = arith.mulf %112, %116 : vector<2x8x8xf32>
      %118 = arith.truncf %117 : vector<2x8x8xf32> to vector<2x8x8xbf16>
      "tpu.trace_start"() <{level = 10 : i32, message = "bqk,bkd->bqd"}> : () -> ()
      %cst_51 = arith.constant dense<0.000000e+00> : vector<2x8x16xf32>
      %119 = tpu.matmul %118, %103, %cst_51 {dimension_numbers = #tpu.dot_dimension_numbers<[2], [1], [1], [2], [0, 0, 0, 1, 1, 2], [0], [0]>} : vector<2x8x8xbf16>, vector<2x8x16xbf16>, vector<2x8x16xf32> -> vector<2x8x16xf32>
      "tpu.trace_stop"() : () -> ()
      %120 = vector.shape_cast %119 : vector<2x8x16xf32> to vector<16x16xf32>
      %121 = arith.truncf %120 : vector<16x16xf32> to vector<16x16xbf16>
      %122 = vector.extract_strided_slice %67 {offsets = [0, 0], sizes = [16, 32], strides = [1, 1]} : vector<32x32xbf16> to vector<16x32xbf16>
      %cst_52 = arith.constant dense<0.000000e+00> : vector<16x32xf32>
      %123 = tpu.matmul %121, %122, %cst_52 {dimension_numbers = #tpu.dot_dimension_numbers<[1], [0], [0], [1], [0, 0, 1, 1], [], []>} : vector<16x16xbf16>, vector<16x32xbf16>, vector<16x32xf32> -> vector<16x32xf32>
      %124 = arith.addf %94, %123 : vector<16x32xf32>
      %125 = vector.extract_strided_slice %93 {offsets = [0, 16], sizes = [16, 16], strides = [1, 1]} : vector<16x96xf32> to vector<16x16xf32>
      %126 = vector.shape_cast %125 : vector<16x16xf32> to vector<2x8x16xf32>
      %127 = arith.truncf %126 : vector<2x8x16xf32> to vector<2x8x16xbf16>
      %128 = vector.extract_strided_slice %93 {offsets = [0, 48], sizes = [16, 16], strides = [1, 1]} : vector<16x96xf32> to vector<16x16xf32>
      %129 = vector.shape_cast %128 : vector<16x16xf32> to vector<2x8x16xf32>
      %130 = arith.truncf %129 : vector<2x8x16xf32> to vector<2x8x16xbf16>
      %131 = vector.extract_strided_slice %93 {offsets = [0, 80], sizes = [16, 16], strides = [1, 1]} : vector<16x96xf32> to vector<16x16xf32>
      %132 = vector.shape_cast %131 : vector<16x16xf32> to vector<2x8x16xf32>
      %133 = arith.truncf %132 : vector<2x8x16xf32> to vector<2x8x16xbf16>
      "tpu.trace_start"() <{level = 10 : i32, message = "bqd,bkd->bqk"}> : () -> ()
      %cst_53 = arith.constant dense<0.000000e+00> : vector<2x8x8xf32>
      %134 = tpu.matmul %127, %130, %cst_53 {dimension_numbers = #tpu.dot_dimension_numbers<[2], [2], [1], [1], [0, 0, 0, 1, 1, 1], [0], [0]>} : vector<2x8x16xbf16>, vector<2x8x16xbf16>, vector<2x8x8xf32> -> vector<2x8x8xf32>
      "tpu.trace_stop"() : () -> ()
      %135 = vector.shape_cast %53 : vector<8x8xf32> to vector<1x8x8xf32>
      %136 = vector.broadcast %135 : vector<1x8x8xf32> to vector<2x8x8xf32>
      %137 = arith.addf %134, %136 : vector<2x8x8xf32>
      %cst_54 = arith.constant dense<0xFF800000> : vector<2x8xf32>
      %138 = vector.multi_reduction <maximumf>, %137, %cst_54 [2] : vector<2x8x8xf32> to vector<2x8xf32>
      %139 = vector.shape_cast %138 : vector<2x8xf32> to vector<2x8x1xf32>
      %140 = vector.broadcast %139 : vector<2x8x1xf32> to vector<2x8x8xf32>
      %141 = arith.subf %137, %140 : vector<2x8x8xf32>
      %142 = math.exp %141 : vector<2x8x8xf32>
      %cst_55 = arith.constant dense<0.000000e+00> : vector<2x8xf32>
      %143 = vector.multi_reduction <add>, %142, %cst_55 [2] : vector<2x8x8xf32> to vector<2x8xf32>
      %144 = vector.shape_cast %143 : vector<2x8xf32> to vector<2x8x1xf32>
      %145 = tpu.reciprocal %144 {approx = true} : vector<2x8x1xf32> -> vector<2x8x1xf32>
      %146 = vector.broadcast %145 : vector<2x8x1xf32> to vector<2x8x8xf32>
      %147 = arith.mulf %142, %146 : vector<2x8x8xf32>
      %148 = arith.truncf %147 : vector<2x8x8xf32> to vector<2x8x8xbf16>
      "tpu.trace_start"() <{level = 10 : i32, message = "bqk,bkd->bqd"}> : () -> ()
      %cst_56 = arith.constant dense<0.000000e+00> : vector<2x8x16xf32>
      %149 = tpu.matmul %148, %133, %cst_56 {dimension_numbers = #tpu.dot_dimension_numbers<[2], [1], [1], [2], [0, 0, 0, 1, 1, 2], [0], [0]>} : vector<2x8x8xbf16>, vector<2x8x16xbf16>, vector<2x8x16xf32> -> vector<2x8x16xf32>
      "tpu.trace_stop"() : () -> ()
      %150 = vector.shape_cast %149 : vector<2x8x16xf32> to vector<16x16xf32>
      %151 = arith.truncf %150 : vector<16x16xf32> to vector<16x16xbf16>
      %152 = vector.extract_strided_slice %67 {offsets = [16, 0], sizes = [16, 32], strides = [1, 1]} : vector<32x32xbf16> to vector<16x32xbf16>
      %cst_57 = arith.constant dense<0.000000e+00> : vector<16x32xf32>
      %153 = tpu.matmul %151, %152, %cst_57 {dimension_numbers = #tpu.dot_dimension_numbers<[1], [0], [0], [1], [0, 0, 1, 1], [], []>} : vector<16x16xbf16>, vector<16x32xbf16>, vector<16x32xf32> -> vector<16x32xf32>
      %154 = arith.addf %124, %153 : vector<16x32xf32>
      %155 = arith.addf %47, %154 : vector<16x32xf32>
      %156 = vector.broadcast %57 : vector<1x32xf32> to vector<16x32xf32>
      %157 = arith.addf %155, %156 : vector<16x32xf32>
      %cst_58 = arith.constant dense<0.000000e+00> : vector<16xf32>
      %158 = vector.multi_reduction <add>, %157, %cst_58 [1] : vector<16x32xf32> to vector<16xf32>
      %159 = vector.shape_cast %158 : vector<16xf32> to vector<16x1xf32>
      %cst_59 = arith.constant 3.200000e+01 : f32
      %160 = vector.broadcast %cst_59 : f32 to vector<16x1xf32>
      %161 = arith.divf %159, %160 : vector<16x1xf32>
      %162 = vector.broadcast %161 : vector<16x1xf32> to vector<16x32xf32>
      %163 = arith.subf %157, %162 : vector<16x32xf32>
      %164 = arith.mulf %163, %163 : vector<16x32xf32>
      %cst_60 = arith.constant dense<0.000000e+00> : vector<16xf32>
      %165 = vector.multi_reduction <add>, %164, %cst_60 [1] : vector<16x32xf32> to vector<16xf32>
      %166 = vector.shape_cast %165 : vector<16xf32> to vector<16x1xf32>
      %cst_61 = arith.constant 3.200000e+01 : f32
      %167 = vector.broadcast %cst_61 : f32 to vector<16x1xf32>
      %168 = arith.divf %166, %167 : vector<16x1xf32>
      %cst_62 = arith.constant 9.99999974E-6 : f32
      %169 = vector.broadcast %cst_62 : f32 to vector<16x1xf32>
      %170 = arith.addf %168, %169 : vector<16x1xf32>
      %171 = math.rsqrt %170 : vector<16x1xf32>
      %172 = vector.broadcast %171 : vector<16x1xf32> to vector<16x32xf32>
      %173 = arith.mulf %163, %172 : vector<16x32xf32>
      %174 = vector.broadcast %58 : vector<1x32xf32> to vector<16x32xf32>
      %175 = arith.mulf %173, %174 : vector<16x32xf32>
      %176 = vector.broadcast %59 : vector<1x32xf32> to vector<16x32xf32>
      %177 = arith.addf %175, %176 : vector<16x32xf32>
      %178 = arith.truncf %177 : vector<16x32xf32> to vector<16x32xbf16>
      %cst_63 = arith.constant dense<0.000000e+00> : vector<16x128xf32>
      %179 = tpu.matmul %178, %65, %cst_63 {dimension_numbers = #tpu.dot_dimension_numbers<[1], [0], [0], [1], [0, 0, 1, 1], [], []>} : vector<16x32xbf16>, vector<32x128xbf16>, vector<16x128xf32> -> vector<16x128xf32>
      %180 = vector.broadcast %60 : vector<1x128xf32> to vector<16x128xf32>
      %181 = arith.addf %179, %180 : vector<16x128xf32>
      %182 = arith.mulf %181, %181 : vector<16x128xf32>
      %183 = arith.mulf %181, %182 : vector<16x128xf32>
      %cst_64 = arith.constant 4.471500e-02 : f32
      %184 = vector.broadcast %cst_64 : f32 to vector<16x128xf32>
      %185 = arith.mulf %184, %183 : vector<16x128xf32>
      %186 = arith.addf %181, %185 : vector<16x128xf32>
      %cst_65 = arith.constant 0.797884583 : f32
      %187 = vector.broadcast %cst_65 : f32 to vector<16x128xf32>
      %188 = arith.mulf %187, %186 : vector<16x128xf32>
      %189 = math.tanh %188 : vector<16x128xf32>
      %cst_66 = arith.constant 1.000000e+00 : f32
      %190 = vector.broadcast %cst_66 : f32 to vector<16x128xf32>
      %191 = arith.addf %190, %189 : vector<16x128xf32>
      %cst_67 = arith.constant 5.000000e-01 : f32
      %192 = vector.broadcast %cst_67 : f32 to vector<16x128xf32>
      %193 = arith.mulf %192, %191 : vector<16x128xf32>
      %194 = arith.mulf %181, %193 : vector<16x128xf32>
      %195 = arith.truncf %194 : vector<16x128xf32> to vector<16x128xbf16>
      %cst_68 = arith.constant dense<0.000000e+00> : vector<16x32xf32>
      %196 = tpu.matmul %195, %69, %cst_68 {dimension_numbers = #tpu.dot_dimension_numbers<[1], [0], [0], [1], [0, 0, 1, 1], [], []>} : vector<16x128xbf16>, vector<128x32xbf16>, vector<16x32xf32> -> vector<16x32xf32>
      %197 = vector.broadcast %61 : vector<1x32xf32> to vector<16x32xf32>
      %198 = arith.addf %196, %197 : vector<16x32xf32>
      %199 = arith.addf %157, %198 : vector<16x32xf32>
      %c28 = arith.constant 28 : index
      %c0_69 = arith.constant 0 : index
      %200 = vector.load %arg5[%c28, %c0_69] : memref<52x128xf32, #tpu.memory_space<vmem>>, vector<1x32xf32>
      %c29 = arith.constant 29 : index
      %c0_70 = arith.constant 0 : index
      %201 = vector.load %arg5[%c29, %c0_70] : memref<52x128xf32, #tpu.memory_space<vmem>>, vector<1x32xf32>
      %c30 = arith.constant 30 : index
      %c0_71 = arith.constant 0 : index
      %202 = vector.load %arg5[%c30, %c0_71] : memref<52x128xf32, #tpu.memory_space<vmem>>, vector<1x96xf32>
      %c31 = arith.constant 31 : index
      %c0_72 = arith.constant 0 : index
      %203 = vector.load %arg5[%c31, %c0_72] : memref<52x128xf32, #tpu.memory_space<vmem>>, vector<1x32xf32>
      %c32 = arith.constant 32 : index
      %c0_73 = arith.constant 0 : index
      %204 = vector.load %arg5[%c32, %c0_73] : memref<52x128xf32, #tpu.memory_space<vmem>>, vector<1x32xf32>
      %c33 = arith.constant 33 : index
      %c0_74 = arith.constant 0 : index
      %205 = vector.load %arg5[%c33, %c0_74] : memref<52x128xf32, #tpu.memory_space<vmem>>, vector<1x32xf32>
      %c34 = arith.constant 34 : index
      %c0_75 = arith.constant 0 : index
      %206 = vector.load %arg5[%c34, %c0_75] : memref<52x128xf32, #tpu.memory_space<vmem>>, vector<1x128xf32>
      %c35 = arith.constant 35 : index
      %c0_76 = arith.constant 0 : index
      %207 = vector.load %arg5[%c35, %c0_76] : memref<52x128xf32, #tpu.memory_space<vmem>>, vector<1x32xf32>
      %c1_77 = arith.constant 1 : index
      %c0_78 = arith.constant 0 : index
      %c0_79 = arith.constant 0 : index
      %208 = vector.load %arg7[%c1_77, %c0_78, %c0_79] : memref<4x32x288xbf16, #tpu.memory_space<vmem>>, vector<1x32x96xbf16>
      %209 = vector.shape_cast %208 : vector<1x32x96xbf16> to vector<32x96xbf16>
      %c1_80 = arith.constant 1 : index
      %c0_81 = arith.constant 0 : index
      %c128_82 = arith.constant 128 : index
      %210 = vector.load %arg7[%c1_80, %c0_81, %c128_82] : memref<4x32x288xbf16, #tpu.memory_space<vmem>>, vector<1x32x128xbf16>
      %211 = vector.shape_cast %210 : vector<1x32x128xbf16> to vector<32x128xbf16>
      %c1_83 = arith.constant 1 : index
      %c0_84 = arith.constant 0 : index
      %c256_85 = arith.constant 256 : index
      %212 = vector.load %arg7[%c1_83, %c0_84, %c256_85] : memref<4x32x288xbf16, #tpu.memory_space<vmem>>, vector<1x32x32xbf16>
      %213 = vector.shape_cast %212 : vector<1x32x32xbf16> to vector<32x32xbf16>
      %c1_86 = arith.constant 1 : index
      %c0_87 = arith.constant 0 : index
      %c0_88 = arith.constant 0 : index
      %214 = vector.load %arg8[%c1_86, %c0_87, %c0_88] : memref<4x128x32xbf16, #tpu.memory_space<vmem>>, vector<1x128x32xbf16>
      %215 = vector.shape_cast %214 : vector<1x128x32xbf16> to vector<128x32xbf16>
      %cst_89 = arith.constant dense<0.000000e+00> : vector<16xf32>
      %216 = vector.multi_reduction <add>, %199, %cst_89 [1] : vector<16x32xf32> to vector<16xf32>
      %217 = vector.shape_cast %216 : vector<16xf32> to vector<16x1xf32>
      %cst_90 = arith.constant 3.200000e+01 : f32
      %218 = vector.broadcast %cst_90 : f32 to vector<16x1xf32>
      %219 = arith.divf %217, %218 : vector<16x1xf32>
      %220 = vector.broadcast %219 : vector<16x1xf32> to vector<16x32xf32>
      %221 = arith.subf %199, %220 : vector<16x32xf32>
      %222 = arith.mulf %221, %221 : vector<16x32xf32>
      %cst_91 = arith.constant dense<0.000000e+00> : vector<16xf32>
      %223 = vector.multi_reduction <add>, %222, %cst_91 [1] : vector<16x32xf32> to vector<16xf32>
      %224 = vector.shape_cast %223 : vector<16xf32> to vector<16x1xf32>
      %cst_92 = arith.constant 3.200000e+01 : f32
      %225 = vector.broadcast %cst_92 : f32 to vector<16x1xf32>
      %226 = arith.divf %224, %225 : vector<16x1xf32>
      %cst_93 = arith.constant 9.99999974E-6 : f32
      %227 = vector.broadcast %cst_93 : f32 to vector<16x1xf32>
      %228 = arith.addf %226, %227 : vector<16x1xf32>
      %229 = math.rsqrt %228 : vector<16x1xf32>
      %230 = vector.broadcast %229 : vector<16x1xf32> to vector<16x32xf32>
      %231 = arith.mulf %221, %230 : vector<16x32xf32>
      %232 = vector.broadcast %200 : vector<1x32xf32> to vector<16x32xf32>
      %233 = arith.mulf %231, %232 : vector<16x32xf32>
      %234 = vector.broadcast %201 : vector<1x32xf32> to vector<16x32xf32>
      %235 = arith.addf %233, %234 : vector<16x32xf32>
      %236 = arith.truncf %235 : vector<16x32xf32> to vector<16x32xbf16>
      %cst_94 = arith.constant dense<0.000000e+00> : vector<16x96xf32>
      %237 = tpu.matmul %236, %209, %cst_94 {dimension_numbers = #tpu.dot_dimension_numbers<[1], [0], [0], [1], [0, 0, 1, 1], [], []>} : vector<16x32xbf16>, vector<32x96xbf16>, vector<16x96xf32> -> vector<16x96xf32>
      %238 = vector.broadcast %202 : vector<1x96xf32> to vector<16x96xf32>
      %239 = arith.addf %237, %238 : vector<16x96xf32>
      %cst_95 = arith.constant 0.000000e+00 : f32
      %240 = vector.broadcast %cst_95 : f32 to vector<16x32xf32>
      %241 = vector.extract_strided_slice %239 {offsets = [0, 0], sizes = [16, 16], strides = [1, 1]} : vector<16x96xf32> to vector<16x16xf32>
      %242 = vector.shape_cast %241 : vector<16x16xf32> to vector<2x8x16xf32>
      %243 = arith.truncf %242 : vector<2x8x16xf32> to vector<2x8x16xbf16>
      %244 = vector.extract_strided_slice %239 {offsets = [0, 32], sizes = [16, 16], strides = [1, 1]} : vector<16x96xf32> to vector<16x16xf32>
      %245 = vector.shape_cast %244 : vector<16x16xf32> to vector<2x8x16xf32>
      %246 = arith.truncf %245 : vector<2x8x16xf32> to vector<2x8x16xbf16>
      %247 = vector.extract_strided_slice %239 {offsets = [0, 64], sizes = [16, 16], strides = [1, 1]} : vector<16x96xf32> to vector<16x16xf32>
      %248 = vector.shape_cast %247 : vector<16x16xf32> to vector<2x8x16xf32>
      %249 = arith.truncf %248 : vector<2x8x16xf32> to vector<2x8x16xbf16>
      "tpu.trace_start"() <{level = 10 : i32, message = "bqd,bkd->bqk"}> : () -> ()
      %cst_96 = arith.constant dense<0.000000e+00> : vector<2x8x8xf32>
      %250 = tpu.matmul %243, %246, %cst_96 {dimension_numbers = #tpu.dot_dimension_numbers<[2], [2], [1], [1], [0, 0, 0, 1, 1, 1], [0], [0]>} : vector<2x8x16xbf16>, vector<2x8x16xbf16>, vector<2x8x8xf32> -> vector<2x8x8xf32>
      "tpu.trace_stop"() : () -> ()
      %251 = vector.shape_cast %53 : vector<8x8xf32> to vector<1x8x8xf32>
      %252 = vector.broadcast %251 : vector<1x8x8xf32> to vector<2x8x8xf32>
      %253 = arith.addf %250, %252 : vector<2x8x8xf32>
      %cst_97 = arith.constant dense<0xFF800000> : vector<2x8xf32>
      %254 = vector.multi_reduction <maximumf>, %253, %cst_97 [2] : vector<2x8x8xf32> to vector<2x8xf32>
      %255 = vector.shape_cast %254 : vector<2x8xf32> to vector<2x8x1xf32>
      %256 = vector.broadcast %255 : vector<2x8x1xf32> to vector<2x8x8xf32>
      %257 = arith.subf %253, %256 : vector<2x8x8xf32>
      %258 = math.exp %257 : vector<2x8x8xf32>
      %cst_98 = arith.constant dense<0.000000e+00> : vector<2x8xf32>
      %259 = vector.multi_reduction <add>, %258, %cst_98 [2] : vector<2x8x8xf32> to vector<2x8xf32>
      %260 = vector.shape_cast %259 : vector<2x8xf32> to vector<2x8x1xf32>
      %261 = tpu.reciprocal %260 {approx = true} : vector<2x8x1xf32> -> vector<2x8x1xf32>
      %262 = vector.broadcast %261 : vector<2x8x1xf32> to vector<2x8x8xf32>
      %263 = arith.mulf %258, %262 : vector<2x8x8xf32>
      %264 = arith.truncf %263 : vector<2x8x8xf32> to vector<2x8x8xbf16>
      "tpu.trace_start"() <{level = 10 : i32, message = "bqk,bkd->bqd"}> : () -> ()
      %cst_99 = arith.constant dense<0.000000e+00> : vector<2x8x16xf32>
      %265 = tpu.matmul %264, %249, %cst_99 {dimension_numbers = #tpu.dot_dimension_numbers<[2], [1], [1], [2], [0, 0, 0, 1, 1, 2], [0], [0]>} : vector<2x8x8xbf16>, vector<2x8x16xbf16>, vector<2x8x16xf32> -> vector<2x8x16xf32>
      "tpu.trace_stop"() : () -> ()
      %266 = vector.shape_cast %265 : vector<2x8x16xf32> to vector<16x16xf32>
      %267 = arith.truncf %266 : vector<16x16xf32> to vector<16x16xbf16>
      %268 = vector.extract_strided_slice %213 {offsets = [0, 0], sizes = [16, 32], strides = [1, 1]} : vector<32x32xbf16> to vector<16x32xbf16>
      %cst_100 = arith.constant dense<0.000000e+00> : vector<16x32xf32>
      %269 = tpu.matmul %267, %268, %cst_100 {dimension_numbers = #tpu.dot_dimension_numbers<[1], [0], [0], [1], [0, 0, 1, 1], [], []>} : vector<16x16xbf16>, vector<16x32xbf16>, vector<16x32xf32> -> vector<16x32xf32>
      %270 = arith.addf %240, %269 : vector<16x32xf32>
      %271 = vector.extract_strided_slice %239 {offsets = [0, 16], sizes = [16, 16], strides = [1, 1]} : vector<16x96xf32> to vector<16x16xf32>
      %272 = vector.shape_cast %271 : vector<16x16xf32> to vector<2x8x16xf32>
      %273 = arith.truncf %272 : vector<2x8x16xf32> to vector<2x8x16xbf16>
      %274 = vector.extract_strided_slice %239 {offsets = [0, 48], sizes = [16, 16], strides = [1, 1]} : vector<16x96xf32> to vector<16x16xf32>
      %275 = vector.shape_cast %274 : vector<16x16xf32> to vector<2x8x16xf32>
      %276 = arith.truncf %275 : vector<2x8x16xf32> to vector<2x8x16xbf16>
      %277 = vector.extract_strided_slice %239 {offsets = [0, 80], sizes = [16, 16], strides = [1, 1]} : vector<16x96xf32> to vector<16x16xf32>
      %278 = vector.shape_cast %277 : vector<16x16xf32> to vector<2x8x16xf32>
      %279 = arith.truncf %278 : vector<2x8x16xf32> to vector<2x8x16xbf16>
      "tpu.trace_start"() <{level = 10 : i32, message = "bqd,bkd->bqk"}> : () -> ()
      %cst_101 = arith.constant dense<0.000000e+00> : vector<2x8x8xf32>
      %280 = tpu.matmul %273, %276, %cst_101 {dimension_numbers = #tpu.dot_dimension_numbers<[2], [2], [1], [1], [0, 0, 0, 1, 1, 1], [0], [0]>} : vector<2x8x16xbf16>, vector<2x8x16xbf16>, vector<2x8x8xf32> -> vector<2x8x8xf32>
      "tpu.trace_stop"() : () -> ()
      %281 = vector.shape_cast %53 : vector<8x8xf32> to vector<1x8x8xf32>
      %282 = vector.broadcast %281 : vector<1x8x8xf32> to vector<2x8x8xf32>
      %283 = arith.addf %280, %282 : vector<2x8x8xf32>
      %cst_102 = arith.constant dense<0xFF800000> : vector<2x8xf32>
      %284 = vector.multi_reduction <maximumf>, %283, %cst_102 [2] : vector<2x8x8xf32> to vector<2x8xf32>
      %285 = vector.shape_cast %284 : vector<2x8xf32> to vector<2x8x1xf32>
      %286 = vector.broadcast %285 : vector<2x8x1xf32> to vector<2x8x8xf32>
      %287 = arith.subf %283, %286 : vector<2x8x8xf32>
      %288 = math.exp %287 : vector<2x8x8xf32>
      %cst_103 = arith.constant dense<0.000000e+00> : vector<2x8xf32>
      %289 = vector.multi_reduction <add>, %288, %cst_103 [2] : vector<2x8x8xf32> to vector<2x8xf32>
      %290 = vector.shape_cast %289 : vector<2x8xf32> to vector<2x8x1xf32>
      %291 = tpu.reciprocal %290 {approx = true} : vector<2x8x1xf32> -> vector<2x8x1xf32>
      %292 = vector.broadcast %291 : vector<2x8x1xf32> to vector<2x8x8xf32>
      %293 = arith.mulf %288, %292 : vector<2x8x8xf32>
      %294 = arith.truncf %293 : vector<2x8x8xf32> to vector<2x8x8xbf16>
      "tpu.trace_start"() <{level = 10 : i32, message = "bqk,bkd->bqd"}> : () -> ()
      %cst_104 = arith.constant dense<0.000000e+00> : vector<2x8x16xf32>
      %295 = tpu.matmul %294, %279, %cst_104 {dimension_numbers = #tpu.dot_dimension_numbers<[2], [1], [1], [2], [0, 0, 0, 1, 1, 2], [0], [0]>} : vector<2x8x8xbf16>, vector<2x8x16xbf16>, vector<2x8x16xf32> -> vector<2x8x16xf32>
      "tpu.trace_stop"() : () -> ()
      %296 = vector.shape_cast %295 : vector<2x8x16xf32> to vector<16x16xf32>
      %297 = arith.truncf %296 : vector<16x16xf32> to vector<16x16xbf16>
      %298 = vector.extract_strided_slice %213 {offsets = [16, 0], sizes = [16, 32], strides = [1, 1]} : vector<32x32xbf16> to vector<16x32xbf16>
      %cst_105 = arith.constant dense<0.000000e+00> : vector<16x32xf32>
      %299 = tpu.matmul %297, %298, %cst_105 {dimension_numbers = #tpu.dot_dimension_numbers<[1], [0], [0], [1], [0, 0, 1, 1], [], []>} : vector<16x16xbf16>, vector<16x32xbf16>, vector<16x32xf32> -> vector<16x32xf32>
      %300 = arith.addf %270, %299 : vector<16x32xf32>
      %301 = arith.addf %199, %300 : vector<16x32xf32>
      %302 = vector.broadcast %203 : vector<1x32xf32> to vector<16x32xf32>
      %303 = arith.addf %301, %302 : vector<16x32xf32>
      %cst_106 = arith.constant dense<0.000000e+00> : vector<16xf32>
      %304 = vector.multi_reduction <add>, %303, %cst_106 [1] : vector<16x32xf32> to vector<16xf32>
      %305 = vector.shape_cast %304 : vector<16xf32> to vector<16x1xf32>
      %cst_107 = arith.constant 3.200000e+01 : f32
      %306 = vector.broadcast %cst_107 : f32 to vector<16x1xf32>
      %307 = arith.divf %305, %306 : vector<16x1xf32>
      %308 = vector.broadcast %307 : vector<16x1xf32> to vector<16x32xf32>
      %309 = arith.subf %303, %308 : vector<16x32xf32>
      %310 = arith.mulf %309, %309 : vector<16x32xf32>
      %cst_108 = arith.constant dense<0.000000e+00> : vector<16xf32>
      %311 = vector.multi_reduction <add>, %310, %cst_108 [1] : vector<16x32xf32> to vector<16xf32>
      %312 = vector.shape_cast %311 : vector<16xf32> to vector<16x1xf32>
      %cst_109 = arith.constant 3.200000e+01 : f32
      %313 = vector.broadcast %cst_109 : f32 to vector<16x1xf32>
      %314 = arith.divf %312, %313 : vector<16x1xf32>
      %cst_110 = arith.constant 9.99999974E-6 : f32
      %315 = vector.broadcast %cst_110 : f32 to vector<16x1xf32>
      %316 = arith.addf %314, %315 : vector<16x1xf32>
      %317 = math.rsqrt %316 : vector<16x1xf32>
      %318 = vector.broadcast %317 : vector<16x1xf32> to vector<16x32xf32>
      %319 = arith.mulf %309, %318 : vector<16x32xf32>
      %320 = vector.broadcast %204 : vector<1x32xf32> to vector<16x32xf32>
      %321 = arith.mulf %319, %320 : vector<16x32xf32>
      %322 = vector.broadcast %205 : vector<1x32xf32> to vector<16x32xf32>
      %323 = arith.addf %321, %322 : vector<16x32xf32>
      %324 = arith.truncf %323 : vector<16x32xf32> to vector<16x32xbf16>
      %cst_111 = arith.constant dense<0.000000e+00> : vector<16x128xf32>
      %325 = tpu.matmul %324, %211, %cst_111 {dimension_numbers = #tpu.dot_dimension_numbers<[1], [0], [0], [1], [0, 0, 1, 1], [], []>} : vector<16x32xbf16>, vector<32x128xbf16>, vector<16x128xf32> -> vector<16x128xf32>
      %326 = vector.broadcast %206 : vector<1x128xf32> to vector<16x128xf32>
      %327 = arith.addf %325, %326 : vector<16x128xf32>
      %328 = arith.mulf %327, %327 : vector<16x128xf32>
      %329 = arith.mulf %327, %328 : vector<16x128xf32>
      %cst_112 = arith.constant 4.471500e-02 : f32
      %330 = vector.broadcast %cst_112 : f32 to vector<16x128xf32>
      %331 = arith.mulf %330, %329 : vector<16x128xf32>
      %332 = arith.addf %327, %331 : vector<16x128xf32>
      %cst_113 = arith.constant 0.797884583 : f32
      %333 = vector.broadcast %cst_113 : f32 to vector<16x128xf32>
      %334 = arith.mulf %333, %332 : vector<16x128xf32>
      %335 = math.tanh %334 : vector<16x128xf32>
      %cst_114 = arith.constant 1.000000e+00 : f32
      %336 = vector.broadcast %cst_114 : f32 to vector<16x128xf32>
      %337 = arith.addf %336, %335 : vector<16x128xf32>
      %cst_115 = arith.constant 5.000000e-01 : f32
      %338 = vector.broadcast %cst_115 : f32 to vector<16x128xf32>
      %339 = arith.mulf %338, %337 : vector<16x128xf32>
      %340 = arith.mulf %327, %339 : vector<16x128xf32>
      %341 = arith.truncf %340 : vector<16x128xf32> to vector<16x128xbf16>
      %cst_116 = arith.constant dense<0.000000e+00> : vector<16x32xf32>
      %342 = tpu.matmul %341, %215, %cst_116 {dimension_numbers = #tpu.dot_dimension_numbers<[1], [0], [0], [1], [0, 0, 1, 1], [], []>} : vector<16x128xbf16>, vector<128x32xbf16>, vector<16x32xf32> -> vector<16x32xf32>
      %343 = vector.broadcast %207 : vector<1x32xf32> to vector<16x32xf32>
      %344 = arith.addf %342, %343 : vector<16x32xf32>
      %345 = arith.addf %303, %344 : vector<16x32xf32>
      %346 = vector.shape_cast %345 : vector<16x32xf32> to vector<2x8x32xf32>
      %347 = vector.extract_strided_slice %346 {offsets = [0, 0, 0], sizes = [2, 1, 32], strides = [1, 1, 1]} : vector<2x8x32xf32> to vector<2x1x32xf32>
      %348 = vector.shape_cast %347 : vector<2x1x32xf32> to vector<2x32xf32>
      %c16 = arith.constant 16 : index
      %c0_117 = arith.constant 0 : index
      %349 = vector.load %arg5[%c16, %c0_117] : memref<52x128xf32, #tpu.memory_space<vmem>>, vector<1x32xf32>
      %c17 = arith.constant 17 : index
      %c0_118 = arith.constant 0 : index
      %350 = vector.load %arg5[%c17, %c0_118] : memref<52x128xf32, #tpu.memory_space<vmem>>, vector<1x32xf32>
      %c0_119 = arith.constant 0 : index
      %c0_120 = arith.constant 0 : index
      %c0_121 = arith.constant 0 : index
      %351 = vector.load %arg9[%c0_119, %c0_120, %c0_121] : memref<2x32x16xbf16, #tpu.memory_space<vmem>>, vector<1x32x16xbf16>
      %352 = vector.shape_cast %351 : vector<1x32x16xbf16> to vector<32x16xbf16>
      %cst_122 = arith.constant dense<0.000000e+00> : vector<2xf32>
      %353 = vector.multi_reduction <add>, %348, %cst_122 [1] : vector<2x32xf32> to vector<2xf32>
      %354 = vector.shape_cast %353 : vector<2xf32> to vector<2x1xf32>
      %cst_123 = arith.constant 3.200000e+01 : f32
      %355 = vector.broadcast %cst_123 : f32 to vector<2x1xf32>
      %356 = arith.divf %354, %355 : vector<2x1xf32>
      %357 = vector.broadcast %356 : vector<2x1xf32> to vector<2x32xf32>
      %358 = arith.subf %348, %357 : vector<2x32xf32>
      %359 = arith.mulf %358, %358 : vector<2x32xf32>
      %cst_124 = arith.constant dense<0.000000e+00> : vector<2xf32>
      %360 = vector.multi_reduction <add>, %359, %cst_124 [1] : vector<2x32xf32> to vector<2xf32>
      %361 = vector.shape_cast %360 : vector<2xf32> to vector<2x1xf32>
      %cst_125 = arith.constant 3.200000e+01 : f32
      %362 = vector.broadcast %cst_125 : f32 to vector<2x1xf32>
      %363 = arith.divf %361, %362 : vector<2x1xf32>
      %cst_126 = arith.constant 9.99999974E-6 : f32
      %364 = vector.broadcast %cst_126 : f32 to vector<2x1xf32>
      %365 = arith.addf %363, %364 : vector<2x1xf32>
      %366 = math.rsqrt %365 : vector<2x1xf32>
      %367 = vector.broadcast %366 : vector<2x1xf32> to vector<2x32xf32>
      %368 = arith.mulf %358, %367 : vector<2x32xf32>
      %369 = vector.broadcast %349 : vector<1x32xf32> to vector<2x32xf32>
      %370 = arith.mulf %368, %369 : vector<2x32xf32>
      %371 = vector.broadcast %350 : vector<1x32xf32> to vector<2x32xf32>
      %372 = arith.addf %370, %371 : vector<2x32xf32>
      %373 = arith.truncf %372 : vector<2x32xf32> to vector<2x32xbf16>
      %cst_127 = arith.constant dense<0.000000e+00> : vector<2x16xf32>
      %374 = tpu.matmul %373, %352, %cst_127 {dimension_numbers = #tpu.dot_dimension_numbers<[1], [0], [0], [1], [0, 0, 1, 1], [], []>} : vector<2x32xbf16>, vector<32x16xbf16>, vector<2x16xf32> -> vector<2x16xf32>
      %375 = arith.mulf %374, %374 : vector<2x16xf32>
      %cst_128 = arith.constant dense<0.000000e+00> : vector<2xf32>
      %376 = vector.multi_reduction <add>, %375, %cst_128 [1] : vector<2x16xf32> to vector<2xf32>
      %377 = vector.shape_cast %376 : vector<2xf32> to vector<2x1xf32>
      %cst_129 = arith.constant 9.99999996E-13 : f32
      %378 = vector.broadcast %cst_129 : f32 to vector<2x1xf32>
      %379 = arith.maximumf %377, %378 : vector<2x1xf32>
      %380 = math.rsqrt %379 : vector<2x1xf32>
      %381 = vector.broadcast %380 : vector<2x1xf32> to vector<2x16xf32>
      %382 = arith.mulf %374, %381 : vector<2x16xf32>
      %383 = vector.shape_cast %382 : vector<2x16xf32> to vector<1x2x16xf32>
      %c0_130 = arith.constant 0 : index
      %c0_131 = arith.constant 0 : index
      %c0_132 = arith.constant 0 : index
      %384 = vector.load %arg10[%c0_130, %c0_131, %c0_132] : memref<1x2x16xf32, #tpu.memory_space<vmem>>, vector<1x2x16xf32>
      tpu.vector_store %arg10[%c0_130, %c0_131, %c0_132], %383 {strides = array<i32>} : memref<1x2x16xf32, #tpu.memory_space<vmem>>, vector<1x2x16xf32>,
    } else {
    }
    %c1_i32 = arith.constant 1 : i32
    %3 = arith.cmpi eq, %arg0, %c1_i32 : i32
    %4 = arith.extui %3 : i1 to i32
    %c0_i32_1 = arith.constant 0 : i32
    %5 = arith.cmpi ne, %4, %c0_i32_1 : i32
    scf.if %5 {
      %c0 = arith.constant 0 : index
      %c0_2 = arith.constant 0 : index
      %c0_3 = arith.constant 0 : index
      %6 = vector.load %arg4[%c0, %c0_2, %c0_3] : memref<2x8x32xf32, #tpu.memory_space<vmem>>, vector<2x8x32xf32>
      %c6 = arith.constant 6 : index
      %c0_4 = arith.constant 0 : index
      %7 = vector.load %arg5[%c6, %c0_4] : memref<52x128xf32, #tpu.memory_space<vmem>>, vector<8x32xf32>
      %8 = vector.shape_cast %7 : vector<8x32xf32> to vector<1x8x32xf32>
      %9 = vector.broadcast %8 : vector<1x8x32xf32> to vector<2x8x32xf32>
      %10 = arith.addf %6, %9 : vector<2x8x32xf32>
      %11 = vector.shape_cast %10 : vector<2x8x32xf32> to vector<16x32xf32>
      %12 = tpu.iota {dimensions = array<i32: 0>} : vector<8x8xi32>
      %13 = tpu.iota {dimensions = array<i32: 1>} : vector<8x8xi32>
      %c8_i32 = arith.constant 8 : i32
      %14 = vector.broadcast %c8_i32 : i32 to vector<8x8xi32>
      %15 = arith.cmpi slt, %13, %14 : vector<8x8xi32>
      %16 = arith.cmpi sle, %13, %12 : vector<8x8xi32>
      %17 = arith.andi %15, %16 : vector<8x8xi1>
      %cst = arith.constant 0.000000e+00 : f32
      %cst_5 = arith.constant -1.000000e+30 : f32
      %18 = vector.broadcast %cst : f32 to vector<8x8xf32>
      %19 = vector.broadcast %cst_5 : f32 to vector<8x8xf32>
      %20 = arith.select %17, %18, %19 : vector<8x8xi1>, vector<8x8xf32>
      %c36 = arith.constant 36 : index
      %c0_6 = arith.constant 0 : index
      %21 = vector.load %arg5[%c36, %c0_6] : memref<52x128xf32, #tpu.memory_space<vmem>>, vector<1x32xf32>
      %c37 = arith.constant 37 : index
      %c0_7 = arith.constant 0 : index
      %22 = vector.load %arg5[%c37, %c0_7] : memref<52x128xf32, #tpu.memory_space<vmem>>, vector<1x32xf32>
      %c38 = arith.constant 38 : index
      %c0_8 = arith.constant 0 : index
      %23 = vector.load %arg5[%c38, %c0_8] : memref<52x128xf32, #tpu.memory_space<vmem>>, vector<1x96xf32>
      %c39 = arith.constant 39 : index
      %c0_9 = arith.constant 0 : index
      %24 = vector.load %arg5[%c39, %c0_9] : memref<52x128xf32, #tpu.memory_space<vmem>>, vector<1x32xf32>
      %c40 = arith.constant 40 : index
      %c0_10 = arith.constant 0 : index
      %25 = vector.load %arg5[%c40, %c0_10] : memref<52x128xf32, #tpu.memory_space<vmem>>, vector<1x32xf32>
      %c41 = arith.constant 41 : index
      %c0_11 = arith.constant 0 : index
      %26 = vector.load %arg5[%c41, %c0_11] : memref<52x128xf32, #tpu.memory_space<vmem>>, vector<1x32xf32>
      %c42 = arith.constant 42 : index
      %c0_12 = arith.constant 0 : index
      %27 = vector.load %arg5[%c42, %c0_12] : memref<52x128xf32, #tpu.memory_space<vmem>>, vector<1x128xf32>
      %c43 = arith.constant 43 : index
      %c0_13 = arith.constant 0 : index
      %28 = vector.load %arg5[%c43, %c0_13] : memref<52x128xf32, #tpu.memory_space<vmem>>, vector<1x32xf32>
      %c2 = arith.constant 2 : index
      %c0_14 = arith.constant 0 : index
      %c0_15 = arith.constant 0 : index
      %29 = vector.load %arg7[%c2, %c0_14, %c0_15] : memref<4x32x288xbf16, #tpu.memory_space<vmem>>, vector<1x32x96xbf16>
      %30 = vector.shape_cast %29 : vector<1x32x96xbf16> to vector<32x96xbf16>
      %c2_16 = arith.constant 2 : index
      %c0_17 = arith.constant 0 : index
      %c128 = arith.constant 128 : index
      %31 = vector.load %arg7[%c2_16, %c0_17, %c128] : memref<4x32x288xbf16, #tpu.memory_space<vmem>>, vector<1x32x128xbf16>
      %32 = vector.shape_cast %31 : vector<1x32x128xbf16> to vector<32x128xbf16>
      %c2_18 = arith.constant 2 : index
      %c0_19 = arith.constant 0 : index
      %c256 = arith.constant 256 : index
      %33 = vector.load %arg7[%c2_18, %c0_19, %c256] : memref<4x32x288xbf16, #tpu.memory_space<vmem>>, vector<1x32x32xbf16>
      %34 = vector.shape_cast %33 : vector<1x32x32xbf16> to vector<32x32xbf16>
      %c2_20 = arith.constant 2 : index
      %c0_21 = arith.constant 0 : index
      %c0_22 = arith.constant 0 : index
      %35 = vector.load %arg8[%c2_20, %c0_21, %c0_22] : memref<4x128x32xbf16, #tpu.memory_space<vmem>>, vector<1x128x32xbf16>
      %36 = vector.shape_cast %35 : vector<1x128x32xbf16> to vector<128x32xbf16>
      %cst_23 = arith.constant dense<0.000000e+00> : vector<16xf32>
      %37 = vector.multi_reduction <add>, %11, %cst_23 [1] : vector<16x32xf32> to vector<16xf32>
      %38 = vector.shape_cast %37 : vector<16xf32> to vector<16x1xf32>
      %cst_24 = arith.constant 3.200000e+01 : f32
      %39 = vector.broadcast %cst_24 : f32 to vector<16x1xf32>
      %40 = arith.divf %38, %39 : vector<16x1xf32>
      %41 = vector.broadcast %40 : vector<16x1xf32> to vector<16x32xf32>
      %42 = arith.subf %11, %41 : vector<16x32xf32>
      %43 = arith.mulf %42, %42 : vector<16x32xf32>
      %cst_25 = arith.constant dense<0.000000e+00> : vector<16xf32>
      %44 = vector.multi_reduction <add>, %43, %cst_25 [1] : vector<16x32xf32> to vector<16xf32>
      %45 = vector.shape_cast %44 : vector<16xf32> to vector<16x1xf32>
      %cst_26 = arith.constant 3.200000e+01 : f32
      %46 = vector.broadcast %cst_26 : f32 to vector<16x1xf32>
      %47 = arith.divf %45, %46 : vector<16x1xf32>
      %cst_27 = arith.constant 9.99999974E-6 : f32
      %48 = vector.broadcast %cst_27 : f32 to vector<16x1xf32>
      %49 = arith.addf %47, %48 : vector<16x1xf32>
      %50 = math.rsqrt %49 : vector<16x1xf32>
      %51 = vector.broadcast %50 : vector<16x1xf32> to vector<16x32xf32>
      %52 = arith.mulf %42, %51 : vector<16x32xf32>
      %53 = vector.broadcast %21 : vector<1x32xf32> to vector<16x32xf32>
      %54 = arith.mulf %52, %53 : vector<16x32xf32>
      %55 = vector.broadcast %22 : vector<1x32xf32> to vector<16x32xf32>
      %56 = arith.addf %54, %55 : vector<16x32xf32>
      %57 = arith.truncf %56 : vector<16x32xf32> to vector<16x32xbf16>
      %cst_28 = arith.constant dense<0.000000e+00> : vector<16x96xf32>
      %58 = tpu.matmul %57, %30, %cst_28 {dimension_numbers = #tpu.dot_dimension_numbers<[1], [0], [0], [1], [0, 0, 1, 1], [], []>} : vector<16x32xbf16>, vector<32x96xbf16>, vector<16x96xf32> -> vector<16x96xf32>
      %59 = vector.broadcast %23 : vector<1x96xf32> to vector<16x96xf32>
      %60 = arith.addf %58, %59 : vector<16x96xf32>
      %cst_29 = arith.constant 0.000000e+00 : f32
      %61 = vector.broadcast %cst_29 : f32 to vector<16x32xf32>
      %62 = vector.extract_strided_slice %60 {offsets = [0, 0], sizes = [16, 16], strides = [1, 1]} : vector<16x96xf32> to vector<16x16xf32>
      %63 = vector.shape_cast %62 : vector<16x16xf32> to vector<2x8x16xf32>
      %64 = arith.truncf %63 : vector<2x8x16xf32> to vector<2x8x16xbf16>
      %65 = vector.extract_strided_slice %60 {offsets = [0, 32], sizes = [16, 16], strides = [1, 1]} : vector<16x96xf32> to vector<16x16xf32>
      %66 = vector.shape_cast %65 : vector<16x16xf32> to vector<2x8x16xf32>
      %67 = arith.truncf %66 : vector<2x8x16xf32> to vector<2x8x16xbf16>
      %68 = vector.extract_strided_slice %60 {offsets = [0, 64], sizes = [16, 16], strides = [1, 1]} : vector<16x96xf32> to vector<16x16xf32>
      %69 = vector.shape_cast %68 : vector<16x16xf32> to vector<2x8x16xf32>
      %70 = arith.truncf %69 : vector<2x8x16xf32> to vector<2x8x16xbf16>
      "tpu.trace_start"() <{level = 10 : i32, message = "bqd,bkd->bqk"}> : () -> ()
      %cst_30 = arith.constant dense<0.000000e+00> : vector<2x8x8xf32>
      %71 = tpu.matmul %64, %67, %cst_30 {dimension_numbers = #tpu.dot_dimension_numbers<[2], [2], [1], [1], [0, 0, 0, 1, 1, 1], [0], [0]>} : vector<2x8x16xbf16>, vector<2x8x16xbf16>, vector<2x8x8xf32> -> vector<2x8x8xf32>
      "tpu.trace_stop"() : () -> ()
      %72 = vector.shape_cast %20 : vector<8x8xf32> to vector<1x8x8xf32>
      %73 = vector.broadcast %72 : vector<1x8x8xf32> to vector<2x8x8xf32>
      %74 = arith.addf %71, %73 : vector<2x8x8xf32>
      %cst_31 = arith.constant dense<0xFF800000> : vector<2x8xf32>
      %75 = vector.multi_reduction <maximumf>, %74, %cst_31 [2] : vector<2x8x8xf32> to vector<2x8xf32>
      %76 = vector.shape_cast %75 : vector<2x8xf32> to vector<2x8x1xf32>
      %77 = vector.broadcast %76 : vector<2x8x1xf32> to vector<2x8x8xf32>
      %78 = arith.subf %74, %77 : vector<2x8x8xf32>
      %79 = math.exp %78 : vector<2x8x8xf32>
      %cst_32 = arith.constant dense<0.000000e+00> : vector<2x8xf32>
      %80 = vector.multi_reduction <add>, %79, %cst_32 [2] : vector<2x8x8xf32> to vector<2x8xf32>
      %81 = vector.shape_cast %80 : vector<2x8xf32> to vector<2x8x1xf32>
      %82 = tpu.reciprocal %81 {approx = true} : vector<2x8x1xf32> -> vector<2x8x1xf32>
      %83 = vector.broadcast %82 : vector<2x8x1xf32> to vector<2x8x8xf32>
      %84 = arith.mulf %79, %83 : vector<2x8x8xf32>
      %85 = arith.truncf %84 : vector<2x8x8xf32> to vector<2x8x8xbf16>
      "tpu.trace_start"() <{level = 10 : i32, message = "bqk,bkd->bqd"}> : () -> ()
      %cst_33 = arith.constant dense<0.000000e+00> : vector<2x8x16xf32>
      %86 = tpu.matmul %85, %70, %cst_33 {dimension_numbers = #tpu.dot_dimension_numbers<[2], [1], [1], [2], [0, 0, 0, 1, 1, 2], [0], [0]>} : vector<2x8x8xbf16>, vector<2x8x16xbf16>, vector<2x8x16xf32> -> vector<2x8x16xf32>
      "tpu.trace_stop"() : () -> ()
      %87 = vector.shape_cast %86 : vector<2x8x16xf32> to vector<16x16xf32>
      %88 = arith.truncf %87 : vector<16x16xf32> to vector<16x16xbf16>
      %89 = vector.extract_strided_slice %34 {offsets = [0, 0], sizes = [16, 32], strides = [1, 1]} : vector<32x32xbf16> to vector<16x32xbf16>
      %cst_34 = arith.constant dense<0.000000e+00> : vector<16x32xf32>
      %90 = tpu.matmul %88, %89, %cst_34 {dimension_numbers = #tpu.dot_dimension_numbers<[1], [0], [0], [1], [0, 0, 1, 1], [], []>} : vector<16x16xbf16>, vector<16x32xbf16>, vector<16x32xf32> -> vector<16x32xf32>
      %91 = arith.addf %61, %90 : vector<16x32xf32>
      %92 = vector.extract_strided_slice %60 {offsets = [0, 16], sizes = [16, 16], strides = [1, 1]} : vector<16x96xf32> to vector<16x16xf32>
      %93 = vector.shape_cast %92 : vector<16x16xf32> to vector<2x8x16xf32>
      %94 = arith.truncf %93 : vector<2x8x16xf32> to vector<2x8x16xbf16>
      %95 = vector.extract_strided_slice %60 {offsets = [0, 48], sizes = [16, 16], strides = [1, 1]} : vector<16x96xf32> to vector<16x16xf32>
      %96 = vector.shape_cast %95 : vector<16x16xf32> to vector<2x8x16xf32>
      %97 = arith.truncf %96 : vector<2x8x16xf32> to vector<2x8x16xbf16>
      %98 = vector.extract_strided_slice %60 {offsets = [0, 80], sizes = [16, 16], strides = [1, 1]} : vector<16x96xf32> to vector<16x16xf32>
      %99 = vector.shape_cast %98 : vector<16x16xf32> to vector<2x8x16xf32>
      %100 = arith.truncf %99 : vector<2x8x16xf32> to vector<2x8x16xbf16>
      "tpu.trace_start"() <{level = 10 : i32, message = "bqd,bkd->bqk"}> : () -> ()
      %cst_35 = arith.constant dense<0.000000e+00> : vector<2x8x8xf32>
      %101 = tpu.matmul %94, %97, %cst_35 {dimension_numbers = #tpu.dot_dimension_numbers<[2], [2], [1], [1], [0, 0, 0, 1, 1, 1], [0], [0]>} : vector<2x8x16xbf16>, vector<2x8x16xbf16>, vector<2x8x8xf32> -> vector<2x8x8xf32>
      "tpu.trace_stop"() : () -> ()
      %102 = vector.shape_cast %20 : vector<8x8xf32> to vector<1x8x8xf32>
      %103 = vector.broadcast %102 : vector<1x8x8xf32> to vector<2x8x8xf32>
      %104 = arith.addf %101, %103 : vector<2x8x8xf32>
      %cst_36 = arith.constant dense<0xFF800000> : vector<2x8xf32>
      %105 = vector.multi_reduction <maximumf>, %104, %cst_36 [2] : vector<2x8x8xf32> to vector<2x8xf32>
      %106 = vector.shape_cast %105 : vector<2x8xf32> to vector<2x8x1xf32>
      %107 = vector.broadcast %106 : vector<2x8x1xf32> to vector<2x8x8xf32>
      %108 = arith.subf %104, %107 : vector<2x8x8xf32>
      %109 = math.exp %108 : vector<2x8x8xf32>
      %cst_37 = arith.constant dense<0.000000e+00> : vector<2x8xf32>
      %110 = vector.multi_reduction <add>, %109, %cst_37 [2] : vector<2x8x8xf32> to vector<2x8xf32>
      %111 = vector.shape_cast %110 : vector<2x8xf32> to vector<2x8x1xf32>
      %112 = tpu.reciprocal %111 {approx = true} : vector<2x8x1xf32> -> vector<2x8x1xf32>
      %113 = vector.broadcast %112 : vector<2x8x1xf32> to vector<2x8x8xf32>
      %114 = arith.mulf %109, %113 : vector<2x8x8xf32>
      %115 = arith.truncf %114 : vector<2x8x8xf32> to vector<2x8x8xbf16>
      "tpu.trace_start"() <{level = 10 : i32, message = "bqk,bkd->bqd"}> : () -> ()
      %cst_38 = arith.constant dense<0.000000e+00> : vector<2x8x16xf32>
      %116 = tpu.matmul %115, %100, %cst_38 {dimension_numbers = #tpu.dot_dimension_numbers<[2], [1], [1], [2], [0, 0, 0, 1, 1, 2], [0], [0]>} : vector<2x8x8xbf16>, vector<2x8x16xbf16>, vector<2x8x16xf32> -> vector<2x8x16xf32>
      "tpu.trace_stop"() : () -> ()
      %117 = vector.shape_cast %116 : vector<2x8x16xf32> to vector<16x16xf32>
      %118 = arith.truncf %117 : vector<16x16xf32> to vector<16x16xbf16>
      %119 = vector.extract_strided_slice %34 {offsets = [16, 0], sizes = [16, 32], strides = [1, 1]} : vector<32x32xbf16> to vector<16x32xbf16>
      %cst_39 = arith.constant dense<0.000000e+00> : vector<16x32xf32>
      %120 = tpu.matmul %118, %119, %cst_39 {dimension_numbers = #tpu.dot_dimension_numbers<[1], [0], [0], [1], [0, 0, 1, 1], [], []>} : vector<16x16xbf16>, vector<16x32xbf16>, vector<16x32xf32> -> vector<16x32xf32>
      %121 = arith.addf %91, %120 : vector<16x32xf32>
      %122 = arith.addf %11, %121 : vector<16x32xf32>
      %123 = vector.broadcast %24 : vector<1x32xf32> to vector<16x32xf32>
      %124 = arith.addf %122, %123 : vector<16x32xf32>
      %cst_40 = arith.constant dense<0.000000e+00> : vector<16xf32>
      %125 = vector.multi_reduction <add>, %124, %cst_40 [1] : vector<16x32xf32> to vector<16xf32>
      %126 = vector.shape_cast %125 : vector<16xf32> to vector<16x1xf32>
      %cst_41 = arith.constant 3.200000e+01 : f32
      %127 = vector.broadcast %cst_41 : f32 to vector<16x1xf32>
      %128 = arith.divf %126, %127 : vector<16x1xf32>
      %129 = vector.broadcast %128 : vector<16x1xf32> to vector<16x32xf32>
      %130 = arith.subf %124, %129 : vector<16x32xf32>
      %131 = arith.mulf %130, %130 : vector<16x32xf32>
      %cst_42 = arith.constant dense<0.000000e+00> : vector<16xf32>
      %132 = vector.multi_reduction <add>, %131, %cst_42 [1] : vector<16x32xf32> to vector<16xf32>
      %133 = vector.shape_cast %132 : vector<16xf32> to vector<16x1xf32>
      %cst_43 = arith.constant 3.200000e+01 : f32
      %134 = vector.broadcast %cst_43 : f32 to vector<16x1xf32>
      %135 = arith.divf %133, %134 : vector<16x1xf32>
      %cst_44 = arith.constant 9.99999974E-6 : f32
      %136 = vector.broadcast %cst_44 : f32 to vector<16x1xf32>
      %137 = arith.addf %135, %136 : vector<16x1xf32>
      %138 = math.rsqrt %137 : vector<16x1xf32>
      %139 = vector.broadcast %138 : vector<16x1xf32> to vector<16x32xf32>
      %140 = arith.mulf %130, %139 : vector<16x32xf32>
      %141 = vector.broadcast %25 : vector<1x32xf32> to vector<16x32xf32>
      %142 = arith.mulf %140, %141 : vector<16x32xf32>
      %143 = vector.broadcast %26 : vector<1x32xf32> to vector<16x32xf32>
      %144 = arith.addf %142, %143 : vector<16x32xf32>
      %145 = arith.truncf %144 : vector<16x32xf32> to vector<16x32xbf16>
      %cst_45 = arith.constant dense<0.000000e+00> : vector<16x128xf32>
      %146 = tpu.matmul %145, %32, %cst_45 {dimension_numbers = #tpu.dot_dimension_numbers<[1], [0], [0], [1], [0, 0, 1, 1], [], []>} : vector<16x32xbf16>, vector<32x128xbf16>, vector<16x128xf32> -> vector<16x128xf32>
      %147 = vector.broadcast %27 : vector<1x128xf32> to vector<16x128xf32>
      %148 = arith.addf %146, %147 : vector<16x128xf32>
      %149 = arith.mulf %148, %148 : vector<16x128xf32>
      %150 = arith.mulf %148, %149 : vector<16x128xf32>
      %cst_46 = arith.constant 4.471500e-02 : f32
      %151 = vector.broadcast %cst_46 : f32 to vector<16x128xf32>
      %152 = arith.mulf %151, %150 : vector<16x128xf32>
      %153 = arith.addf %148, %152 : vector<16x128xf32>
      %cst_47 = arith.constant 0.797884583 : f32
      %154 = vector.broadcast %cst_47 : f32 to vector<16x128xf32>
      %155 = arith.mulf %154, %153 : vector<16x128xf32>
      %156 = math.tanh %155 : vector<16x128xf32>
      %cst_48 = arith.constant 1.000000e+00 : f32
      %157 = vector.broadcast %cst_48 : f32 to vector<16x128xf32>
      %158 = arith.addf %157, %156 : vector<16x128xf32>
      %cst_49 = arith.constant 5.000000e-01 : f32
      %159 = vector.broadcast %cst_49 : f32 to vector<16x128xf32>
      %160 = arith.mulf %159, %158 : vector<16x128xf32>
      %161 = arith.mulf %148, %160 : vector<16x128xf32>
      %162 = arith.truncf %161 : vector<16x128xf32> to vector<16x128xbf16>
      %cst_50 = arith.constant dense<0.000000e+00> : vector<16x32xf32>
      %163 = tpu.matmul %162, %36, %cst_50 {dimension_numbers = #tpu.dot_dimension_numbers<[1], [0], [0], [1], [0, 0, 1, 1], [], []>} : vector<16x128xbf16>, vector<128x32xbf16>, vector<16x32xf32> -> vector<16x32xf32>
      %164 = vector.broadcast %28 : vector<1x32xf32> to vector<16x32xf32>
      %165 = arith.addf %163, %164 : vector<16x32xf32>
      %166 = arith.addf %124, %165 : vector<16x32xf32>
      %c44 = arith.constant 44 : index
      %c0_51 = arith.constant 0 : index
      %167 = vector.load %arg5[%c44, %c0_51] : memref<52x128xf32, #tpu.memory_space<vmem>>, vector<1x32xf32>
      %c45 = arith.constant 45 : index
      %c0_52 = arith.constant 0 : index
      %168 = vector.load %arg5[%c45, %c0_52] : memref<52x128xf32, #tpu.memory_space<vmem>>, vector<1x32xf32>
      %c46 = arith.constant 46 : index
      %c0_53 = arith.constant 0 : index
      %169 = vector.load %arg5[%c46, %c0_53] : memref<52x128xf32, #tpu.memory_space<vmem>>, vector<1x96xf32>
      %c47 = arith.constant 47 : index
      %c0_54 = arith.constant 0 : index
      %170 = vector.load %arg5[%c47, %c0_54] : memref<52x128xf32, #tpu.memory_space<vmem>>, vector<1x32xf32>
      %c48 = arith.constant 48 : index
      %c0_55 = arith.constant 0 : index
      %171 = vector.load %arg5[%c48, %c0_55] : memref<52x128xf32, #tpu.memory_space<vmem>>, vector<1x32xf32>
      %c49 = arith.constant 49 : index
      %c0_56 = arith.constant 0 : index
      %172 = vector.load %arg5[%c49, %c0_56] : memref<52x128xf32, #tpu.memory_space<vmem>>, vector<1x32xf32>
      %c50 = arith.constant 50 : index
      %c0_57 = arith.constant 0 : index
      %173 = vector.load %arg5[%c50, %c0_57] : memref<52x128xf32, #tpu.memory_space<vmem>>, vector<1x128xf32>
      %c51 = arith.constant 51 : index
      %c0_58 = arith.constant 0 : index
      %174 = vector.load %arg5[%c51, %c0_58] : memref<52x128xf32, #tpu.memory_space<vmem>>, vector<1x32xf32>
      %c3 = arith.constant 3 : index
      %c0_59 = arith.constant 0 : index
      %c0_60 = arith.constant 0 : index
      %175 = vector.load %arg7[%c3, %c0_59, %c0_60] : memref<4x32x288xbf16, #tpu.memory_space<vmem>>, vector<1x32x96xbf16>
      %176 = vector.shape_cast %175 : vector<1x32x96xbf16> to vector<32x96xbf16>
      %c3_61 = arith.constant 3 : index
      %c0_62 = arith.constant 0 : index
      %c128_63 = arith.constant 128 : index
      %177 = vector.load %arg7[%c3_61, %c0_62, %c128_63] : memref<4x32x288xbf16, #tpu.memory_space<vmem>>, vector<1x32x128xbf16>
      %178 = vector.shape_cast %177 : vector<1x32x128xbf16> to vector<32x128xbf16>
      %c3_64 = arith.constant 3 : index
      %c0_65 = arith.constant 0 : index
      %c256_66 = arith.constant 256 : index
      %179 = vector.load %arg7[%c3_64, %c0_65, %c256_66] : memref<4x32x288xbf16, #tpu.memory_space<vmem>>, vector<1x32x32xbf16>
      %180 = vector.shape_cast %179 : vector<1x32x32xbf16> to vector<32x32xbf16>
      %c3_67 = arith.constant 3 : index
      %c0_68 = arith.constant 0 : index
      %c0_69 = arith.constant 0 : index
      %181 = vector.load %arg8[%c3_67, %c0_68, %c0_69] : memref<4x128x32xbf16, #tpu.memory_space<vmem>>, vector<1x128x32xbf16>
      %182 = vector.shape_cast %181 : vector<1x128x32xbf16> to vector<128x32xbf16>
      %cst_70 = arith.constant dense<0.000000e+00> : vector<16xf32>
      %183 = vector.multi_reduction <add>, %166, %cst_70 [1] : vector<16x32xf32> to vector<16xf32>
      %184 = vector.shape_cast %183 : vector<16xf32> to vector<16x1xf32>
      %cst_71 = arith.constant 3.200000e+01 : f32
      %185 = vector.broadcast %cst_71 : f32 to vector<16x1xf32>
      %186 = arith.divf %184, %185 : vector<16x1xf32>
      %187 = vector.broadcast %186 : vector<16x1xf32> to vector<16x32xf32>
      %188 = arith.subf %166, %187 : vector<16x32xf32>
      %189 = arith.mulf %188, %188 : vector<16x32xf32>
      %cst_72 = arith.constant dense<0.000000e+00> : vector<16xf32>
      %190 = vector.multi_reduction <add>, %189, %cst_72 [1] : vector<16x32xf32> to vector<16xf32>
      %191 = vector.shape_cast %190 : vector<16xf32> to vector<16x1xf32>
      %cst_73 = arith.constant 3.200000e+01 : f32
      %192 = vector.broadcast %cst_73 : f32 to vector<16x1xf32>
      %193 = arith.divf %191, %192 : vector<16x1xf32>
      %cst_74 = arith.constant 9.99999974E-6 : f32
      %194 = vector.broadcast %cst_74 : f32 to vector<16x1xf32>
      %195 = arith.addf %193, %194 : vector<16x1xf32>
      %196 = math.rsqrt %195 : vector<16x1xf32>
      %197 = vector.broadcast %196 : vector<16x1xf32> to vector<16x32xf32>
      %198 = arith.mulf %188, %197 : vector<16x32xf32>
      %199 = vector.broadcast %167 : vector<1x32xf32> to vector<16x32xf32>
      %200 = arith.mulf %198, %199 : vector<16x32xf32>
      %201 = vector.broadcast %168 : vector<1x32xf32> to vector<16x32xf32>
      %202 = arith.addf %200, %201 : vector<16x32xf32>
      %203 = arith.truncf %202 : vector<16x32xf32> to vector<16x32xbf16>
      %cst_75 = arith.constant dense<0.000000e+00> : vector<16x96xf32>
      %204 = tpu.matmul %203, %176, %cst_75 {dimension_numbers = #tpu.dot_dimension_numbers<[1], [0], [0], [1], [0, 0, 1, 1], [], []>} : vector<16x32xbf16>, vector<32x96xbf16>, vector<16x96xf32> -> vector<16x96xf32>
      %205 = vector.broadcast %169 : vector<1x96xf32> to vector<16x96xf32>
      %206 = arith.addf %204, %205 : vector<16x96xf32>
      %cst_76 = arith.constant 0.000000e+00 : f32
      %207 = vector.broadcast %cst_76 : f32 to vector<16x32xf32>
      %208 = vector.extract_strided_slice %206 {offsets = [0, 0], sizes = [16, 16], strides = [1, 1]} : vector<16x96xf32> to vector<16x16xf32>
      %209 = vector.shape_cast %208 : vector<16x16xf32> to vector<2x8x16xf32>
      %210 = arith.truncf %209 : vector<2x8x16xf32> to vector<2x8x16xbf16>
      %211 = vector.extract_strided_slice %206 {offsets = [0, 32], sizes = [16, 16], strides = [1, 1]} : vector<16x96xf32> to vector<16x16xf32>
      %212 = vector.shape_cast %211 : vector<16x16xf32> to vector<2x8x16xf32>
      %213 = arith.truncf %212 : vector<2x8x16xf32> to vector<2x8x16xbf16>
      %214 = vector.extract_strided_slice %206 {offsets = [0, 64], sizes = [16, 16], strides = [1, 1]} : vector<16x96xf32> to vector<16x16xf32>
      %215 = vector.shape_cast %214 : vector<16x16xf32> to vector<2x8x16xf32>
      %216 = arith.truncf %215 : vector<2x8x16xf32> to vector<2x8x16xbf16>
      "tpu.trace_start"() <{level = 10 : i32, message = "bqd,bkd->bqk"}> : () -> ()
      %cst_77 = arith.constant dense<0.000000e+00> : vector<2x8x8xf32>
      %217 = tpu.matmul %210, %213, %cst_77 {dimension_numbers = #tpu.dot_dimension_numbers<[2], [2], [1], [1], [0, 0, 0, 1, 1, 1], [0], [0]>} : vector<2x8x16xbf16>, vector<2x8x16xbf16>, vector<2x8x8xf32> -> vector<2x8x8xf32>
      "tpu.trace_stop"() : () -> ()
      %218 = vector.shape_cast %20 : vector<8x8xf32> to vector<1x8x8xf32>
      %219 = vector.broadcast %218 : vector<1x8x8xf32> to vector<2x8x8xf32>
      %220 = arith.addf %217, %219 : vector<2x8x8xf32>
      %cst_78 = arith.constant dense<0xFF800000> : vector<2x8xf32>
      %221 = vector.multi_reduction <maximumf>, %220, %cst_78 [2] : vector<2x8x8xf32> to vector<2x8xf32>
      %222 = vector.shape_cast %221 : vector<2x8xf32> to vector<2x8x1xf32>
      %223 = vector.broadcast %222 : vector<2x8x1xf32> to vector<2x8x8xf32>
      %224 = arith.subf %220, %223 : vector<2x8x8xf32>
      %225 = math.exp %224 : vector<2x8x8xf32>
      %cst_79 = arith.constant dense<0.000000e+00> : vector<2x8xf32>
      %226 = vector.multi_reduction <add>, %225, %cst_79 [2] : vector<2x8x8xf32> to vector<2x8xf32>
      %227 = vector.shape_cast %226 : vector<2x8xf32> to vector<2x8x1xf32>
      %228 = tpu.reciprocal %227 {approx = true} : vector<2x8x1xf32> -> vector<2x8x1xf32>
      %229 = vector.broadcast %228 : vector<2x8x1xf32> to vector<2x8x8xf32>
      %230 = arith.mulf %225, %229 : vector<2x8x8xf32>
      %231 = arith.truncf %230 : vector<2x8x8xf32> to vector<2x8x8xbf16>
      "tpu.trace_start"() <{level = 10 : i32, message = "bqk,bkd->bqd"}> : () -> ()
      %cst_80 = arith.constant dense<0.000000e+00> : vector<2x8x16xf32>
      %232 = tpu.matmul %231, %216, %cst_80 {dimension_numbers = #tpu.dot_dimension_numbers<[2], [1], [1], [2], [0, 0, 0, 1, 1, 2], [0], [0]>} : vector<2x8x8xbf16>, vector<2x8x16xbf16>, vector<2x8x16xf32> -> vector<2x8x16xf32>
      "tpu.trace_stop"() : () -> ()
      %233 = vector.shape_cast %232 : vector<2x8x16xf32> to vector<16x16xf32>
      %234 = arith.truncf %233 : vector<16x16xf32> to vector<16x16xbf16>
      %235 = vector.extract_strided_slice %180 {offsets = [0, 0], sizes = [16, 32], strides = [1, 1]} : vector<32x32xbf16> to vector<16x32xbf16>
      %cst_81 = arith.constant dense<0.000000e+00> : vector<16x32xf32>
      %236 = tpu.matmul %234, %235, %cst_81 {dimension_numbers = #tpu.dot_dimension_numbers<[1], [0], [0], [1], [0, 0, 1, 1], [], []>} : vector<16x16xbf16>, vector<16x32xbf16>, vector<16x32xf32> -> vector<16x32xf32>
      %237 = arith.addf %207, %236 : vector<16x32xf32>
      %238 = vector.extract_strided_slice %206 {offsets = [0, 16], sizes = [16, 16], strides = [1, 1]} : vector<16x96xf32> to vector<16x16xf32>
      %239 = vector.shape_cast %238 : vector<16x16xf32> to vector<2x8x16xf32>
      %240 = arith.truncf %239 : vector<2x8x16xf32> to vector<2x8x16xbf16>
      %241 = vector.extract_strided_slice %206 {offsets = [0, 48], sizes = [16, 16], strides = [1, 1]} : vector<16x96xf32> to vector<16x16xf32>
      %242 = vector.shape_cast %241 : vector<16x16xf32> to vector<2x8x16xf32>
      %243 = arith.truncf %242 : vector<2x8x16xf32> to vector<2x8x16xbf16>
      %244 = vector.extract_strided_slice %206 {offsets = [0, 80], sizes = [16, 16], strides = [1, 1]} : vector<16x96xf32> to vector<16x16xf32>
      %245 = vector.shape_cast %244 : vector<16x16xf32> to vector<2x8x16xf32>
      %246 = arith.truncf %245 : vector<2x8x16xf32> to vector<2x8x16xbf16>
      "tpu.trace_start"() <{level = 10 : i32, message = "bqd,bkd->bqk"}> : () -> ()
      %cst_82 = arith.constant dense<0.000000e+00> : vector<2x8x8xf32>
      %247 = tpu.matmul %240, %243, %cst_82 {dimension_numbers = #tpu.dot_dimension_numbers<[2], [2], [1], [1], [0, 0, 0, 1, 1, 1], [0], [0]>} : vector<2x8x16xbf16>, vector<2x8x16xbf16>, vector<2x8x8xf32> -> vector<2x8x8xf32>
      "tpu.trace_stop"() : () -> ()
      %248 = vector.shape_cast %20 : vector<8x8xf32> to vector<1x8x8xf32>
      %249 = vector.broadcast %248 : vector<1x8x8xf32> to vector<2x8x8xf32>
      %250 = arith.addf %247, %249 : vector<2x8x8xf32>
      %cst_83 = arith.constant dense<0xFF800000> : vector<2x8xf32>
      %251 = vector.multi_reduction <maximumf>, %250, %cst_83 [2] : vector<2x8x8xf32> to vector<2x8xf32>
      %252 = vector.shape_cast %251 : vector<2x8xf32> to vector<2x8x1xf32>
      %253 = vector.broadcast %252 : vector<2x8x1xf32> to vector<2x8x8xf32>
      %254 = arith.subf %250, %253 : vector<2x8x8xf32>
      %255 = math.exp %254 : vector<2x8x8xf32>
      %cst_84 = arith.constant dense<0.000000e+00> : vector<2x8xf32>
      %256 = vector.multi_reduction <add>, %255, %cst_84 [2] : vector<2x8x8xf32> to vector<2x8xf32>
      %257 = vector.shape_cast %256 : vector<2x8xf32> to vector<2x8x1xf32>
      %258 = tpu.reciprocal %257 {approx = true} : vector<2x8x1xf32> -> vector<2x8x1xf32>
      %259 = vector.broadcast %258 : vector<2x8x1xf32> to vector<2x8x8xf32>
      %260 = arith.mulf %255, %259 : vector<2x8x8xf32>
      %261 = arith.truncf %260 : vector<2x8x8xf32> to vector<2x8x8xbf16>
      "tpu.trace_start"() <{level = 10 : i32, message = "bqk,bkd->bqd"}> : () -> ()
      %cst_85 = arith.constant dense<0.000000e+00> : vector<2x8x16xf32>
      %262 = tpu.matmul %261, %246, %cst_85 {dimension_numbers = #tpu.dot_dimension_numbers<[2], [1], [1], [2], [0, 0, 0, 1, 1, 2], [0], [0]>} : vector<2x8x8xbf16>, vector<2x8x16xbf16>, vector<2x8x16xf32> -> vector<2x8x16xf32>
      "tpu.trace_stop"() : () -> ()
      %263 = vector.shape_cast %262 : vector<2x8x16xf32> to vector<16x16xf32>
      %264 = arith.truncf %263 : vector<16x16xf32> to vector<16x16xbf16>
      %265 = vector.extract_strided_slice %180 {offsets = [16, 0], sizes = [16, 32], strides = [1, 1]} : vector<32x32xbf16> to vector<16x32xbf16>
      %cst_86 = arith.constant dense<0.000000e+00> : vector<16x32xf32>
      %266 = tpu.matmul %264, %265, %cst_86 {dimension_numbers = #tpu.dot_dimension_numbers<[1], [0], [0], [1], [0, 0, 1, 1], [], []>} : vector<16x16xbf16>, vector<16x32xbf16>, vector<16x32xf32> -> vector<16x32xf32>
      %267 = arith.addf %237, %266 : vector<16x32xf32>
      %268 = arith.addf %166, %267 : vector<16x32xf32>
      %269 = vector.broadcast %170 : vector<1x32xf32> to vector<16x32xf32>
      %270 = arith.addf %268, %269 : vector<16x32xf32>
      %cst_87 = arith.constant dense<0.000000e+00> : vector<16xf32>
      %271 = vector.multi_reduction <add>, %270, %cst_87 [1] : vector<16x32xf32> to vector<16xf32>
      %272 = vector.shape_cast %271 : vector<16xf32> to vector<16x1xf32>
      %cst_88 = arith.constant 3.200000e+01 : f32
      %273 = vector.broadcast %cst_88 : f32 to vector<16x1xf32>
      %274 = arith.divf %272, %273 : vector<16x1xf32>
      %275 = vector.broadcast %274 : vector<16x1xf32> to vector<16x32xf32>
      %276 = arith.subf %270, %275 : vector<16x32xf32>
      %277 = arith.mulf %276, %276 : vector<16x32xf32>
      %cst_89 = arith.constant dense<0.000000e+00> : vector<16xf32>
      %278 = vector.multi_reduction <add>, %277, %cst_89 [1] : vector<16x32xf32> to vector<16xf32>
      %279 = vector.shape_cast %278 : vector<16xf32> to vector<16x1xf32>
      %cst_90 = arith.constant 3.200000e+01 : f32
      %280 = vector.broadcast %cst_90 : f32 to vector<16x1xf32>
      %281 = arith.divf %279, %280 : vector<16x1xf32>
      %cst_91 = arith.constant 9.99999974E-6 : f32
      %282 = vector.broadcast %cst_91 : f32 to vector<16x1xf32>
      %283 = arith.addf %281, %282 : vector<16x1xf32>
      %284 = math.rsqrt %283 : vector<16x1xf32>
      %285 = vector.broadcast %284 : vector<16x1xf32> to vector<16x32xf32>
      %286 = arith.mulf %276, %285 : vector<16x32xf32>
      %287 = vector.broadcast %171 : vector<1x32xf32> to vector<16x32xf32>
      %288 = arith.mulf %286, %287 : vector<16x32xf32>
      %289 = vector.broadcast %172 : vector<1x32xf32> to vector<16x32xf32>
      %290 = arith.addf %288, %289 : vector<16x32xf32>
      %291 = arith.truncf %290 : vector<16x32xf32> to vector<16x32xbf16>
      %cst_92 = arith.constant dense<0.000000e+00> : vector<16x128xf32>
      %292 = tpu.matmul %291, %178, %cst_92 {dimension_numbers = #tpu.dot_dimension_numbers<[1], [0], [0], [1], [0, 0, 1, 1], [], []>} : vector<16x32xbf16>, vector<32x128xbf16>, vector<16x128xf32> -> vector<16x128xf32>
      %293 = vector.broadcast %173 : vector<1x128xf32> to vector<16x128xf32>
      %294 = arith.addf %292, %293 : vector<16x128xf32>
      %295 = arith.mulf %294, %294 : vector<16x128xf32>
      %296 = arith.mulf %294, %295 : vector<16x128xf32>
      %cst_93 = arith.constant 4.471500e-02 : f32
      %297 = vector.broadcast %cst_93 : f32 to vector<16x128xf32>
      %298 = arith.mulf %297, %296 : vector<16x128xf32>
      %299 = arith.addf %294, %298 : vector<16x128xf32>
      %cst_94 = arith.constant 0.797884583 : f32
      %300 = vector.broadcast %cst_94 : f32 to vector<16x128xf32>
      %301 = arith.mulf %300, %299 : vector<16x128xf32>
      %302 = math.tanh %301 : vector<16x128xf32>
      %cst_95 = arith.constant 1.000000e+00 : f32
      %303 = vector.broadcast %cst_95 : f32 to vector<16x128xf32>
      %304 = arith.addf %303, %302 : vector<16x128xf32>
      %cst_96 = arith.constant 5.000000e-01 : f32
      %305 = vector.broadcast %cst_96 : f32 to vector<16x128xf32>
      %306 = arith.mulf %305, %304 : vector<16x128xf32>
      %307 = arith.mulf %294, %306 : vector<16x128xf32>
      %308 = arith.truncf %307 : vector<16x128xf32> to vector<16x128xbf16>
      %cst_97 = arith.constant dense<0.000000e+00> : vector<16x32xf32>
      %309 = tpu.matmul %308, %182, %cst_97 {dimension_numbers = #tpu.dot_dimension_numbers<[1], [0], [0], [1], [0, 0, 1, 1], [], []>} : vector<16x128xbf16>, vector<128x32xbf16>, vector<16x32xf32> -> vector<16x32xf32>
      %310 = vector.broadcast %174 : vector<1x32xf32> to vector<16x32xf32>
      %311 = arith.addf %309, %310 : vector<16x32xf32>
      %312 = arith.addf %270, %311 : vector<16x32xf32>
      %c0_98 = arith.constant 0 : index
      %313 = memref.load %arg1[%c0_98] : memref<2xi32, #tpu.memory_space<smem>>
      %314 = tpu.iota {dimensions = array<i32: 0>} : vector<8x32xi32>
      %315 = vector.broadcast %313 : i32 to vector<8x32xi32>
      %316 = arith.cmpi eq, %314, %315 : vector<8x32xi32>
      %317 = arith.extui %316 : vector<8x32xi1> to vector<8x32xi32>
      %318 = arith.sitofp %317 : vector<8x32xi32> to vector<8x32xf32>
      %319 = vector.extract_strided_slice %312 {offsets = [0, 0], sizes = [8, 32], strides = [1, 1]} : vector<16x32xf32> to vector<8x32xf32>
      %320 = arith.mulf %319, %318 : vector<8x32xf32>
      %cst_99 = arith.constant dense<0.000000e+00> : vector<32xf32>
      %321 = vector.multi_reduction <add>, %320, %cst_99 [0] : vector<8x32xf32> to vector<32xf32>
      %322 = vector.shape_cast %321 : vector<32xf32> to vector<1x32xf32>
      %c1 = arith.constant 1 : index
      %323 = memref.load %arg1[%c1] : memref<2xi32, #tpu.memory_space<smem>>
      %324 = tpu.iota {dimensions = array<i32: 0>} : vector<8x32xi32>
      %325 = vector.broadcast %323 : i32 to vector<8x32xi32>
      %326 = arith.cmpi eq, %324, %325 : vector<8x32xi32>
      %327 = arith.extui %326 : vector<8x32xi1> to vector<8x32xi32>
      %328 = arith.sitofp %327 : vector<8x32xi32> to vector<8x32xf32>
      %329 = vector.extract_strided_slice %312 {offsets = [8, 0], sizes = [8, 32], strides = [1, 1]} : vector<16x32xf32> to vector<8x32xf32>
      %330 = arith.mulf %329, %328 : vector<8x32xf32>
      %cst_100 = arith.constant dense<0.000000e+00> : vector<32xf32>
      %331 = vector.multi_reduction <add>, %330, %cst_100 [0] : vector<8x32xf32> to vector<32xf32>
      %332 = vector.shape_cast %331 : vector<32xf32> to vector<1x32xf32>
      %333 = tpu.concatenate %322, %332 in 0 : vector<1x32xf32>, vector<1x32xf32> -> vector<2x32xf32>
      %c18 = arith.constant 18 : index
      %c0_101 = arith.constant 0 : index
      %334 = vector.load %arg5[%c18, %c0_101] : memref<52x128xf32, #tpu.memory_space<vmem>>, vector<1x32xf32>
      %c19 = arith.constant 19 : index
      %c0_102 = arith.constant 0 : index
      %335 = vector.load %arg5[%c19, %c0_102] : memref<52x128xf32, #tpu.memory_space<vmem>>, vector<1x32xf32>
      %c1_103 = arith.constant 1 : index
      %c0_104 = arith.constant 0 : index
      %c0_105 = arith.constant 0 : index
      %336 = vector.load %arg9[%c1_103, %c0_104, %c0_105] : memref<2x32x16xbf16, #tpu.memory_space<vmem>>, vector<1x32x16xbf16>
      %337 = vector.shape_cast %336 : vector<1x32x16xbf16> to vector<32x16xbf16>
      %cst_106 = arith.constant dense<0.000000e+00> : vector<2xf32>
      %338 = vector.multi_reduction <add>, %333, %cst_106 [1] : vector<2x32xf32> to vector<2xf32>
      %339 = vector.shape_cast %338 : vector<2xf32> to vector<2x1xf32>
      %cst_107 = arith.constant 3.200000e+01 : f32
      %340 = vector.broadcast %cst_107 : f32 to vector<2x1xf32>
      %341 = arith.divf %339, %340 : vector<2x1xf32>
      %342 = vector.broadcast %341 : vector<2x1xf32> to vector<2x32xf32>
      %343 = arith.subf %333, %342 : vector<2x32xf32>
      %344 = arith.mulf %343, %343 : vector<2x32xf32>
      %cst_108 = arith.constant dense<0.000000e+00> : vector<2xf32>
      %345 = vector.multi_reduction <add>, %344, %cst_108 [1] : vector<2x32xf32> to vector<2xf32>
      %346 = vector.shape_cast %345 : vector<2xf32> to vector<2x1xf32>
      %cst_109 = arith.constant 3.200000e+01 : f32
      %347 = vector.broadcast %cst_109 : f32 to vector<2x1xf32>
      %348 = arith.divf %346, %347 : vector<2x1xf32>
      %cst_110 = arith.constant 9.99999974E-6 : f32
      %349 = vector.broadcast %cst_110 : f32 to vector<2x1xf32>
      %350 = arith.addf %348, %349 : vector<2x1xf32>
      %351 = math.rsqrt %350 : vector<2x1xf32>
      %352 = vector.broadcast %351 : vector<2x1xf32> to vector<2x32xf32>
      %353 = arith.mulf %343, %352 : vector<2x32xf32>
      %354 = vector.broadcast %334 : vector<1x32xf32> to vector<2x32xf32>
      %355 = arith.mulf %353, %354 : vector<2x32xf32>
      %356 = vector.broadcast %335 : vector<1x32xf32> to vector<2x32xf32>
      %357 = arith.addf %355, %356 : vector<2x32xf32>
      %358 = arith.truncf %357 : vector<2x32xf32> to vector<2x32xbf16>
      %cst_111 = arith.constant dense<0.000000e+00> : vector<2x16xf32>
      %359 = tpu.matmul %358, %337, %cst_111 {dimension_numbers = #tpu.dot_dimension_numbers<[1], [0], [0], [1], [0, 0, 1, 1], [], []>} : vector<2x32xbf16>, vector<32x16xbf16>, vector<2x16xf32> -> vector<2x16xf32>
      %360 = arith.mulf %359, %359 : vector<2x16xf32>
      %cst_112 = arith.constant dense<0.000000e+00> : vector<2xf32>
      %361 = vector.multi_reduction <add>, %360, %cst_112 [1] : vector<2x16xf32> to vector<2xf32>
      %362 = vector.shape_cast %361 : vector<2xf32> to vector<2x1xf32>
      %cst_113 = arith.constant 9.99999996E-13 : f32
      %363 = vector.broadcast %cst_113 : f32 to vector<2x1xf32>
      %364 = arith.maximumf %362, %363 : vector<2x1xf32>
      %365 = math.rsqrt %364 : vector<2x1xf32>
      %366 = vector.broadcast %365 : vector<2x1xf32> to vector<2x16xf32>
      %367 = arith.mulf %359, %366 : vector<2x16xf32>
      %368 = vector.shape_cast %367 : vector<2x16xf32> to vector<1x2x16xf32>
      %c0_114 = arith.constant 0 : index
      %c0_115 = arith.constant 0 : index
      %c0_116 = arith.constant 0 : index
      %369 = vector.load %arg10[%c0_114, %c0_115, %c0_116] : memref<1x2x16xf32, #tpu.memory_space<vmem>>, vector<1x2x16xf32>
      tpu.vector_store %arg10[%c0_114, %c0_115, %c0_116], %368 {strides = array<i32>} : memref<1x2x16xf32, #tpu.memory_space<vmem>>, vector<1x2x16xf32>,
    } else {
    }
    return
  }
  func.func @transform_0(%arg0: i32, %arg1: memref<2xi32, #tpu.memory_space<smem>>) -> (i32, i32, i32) {
    %c0_i32 = arith.constant 0 : i32
    %c0_i32_0 = arith.constant 0 : i32
    %c0_i32_1 = arith.constant 0 : i32
    %c0_i32_2 = arith.constant 0 : i32
    return %c0_i32, %c0_i32_0, %c0_i32_1 : i32, i32, i32
  }
  func.func @transform_1(%arg0: i32, %arg1: memref<2xi32, #tpu.memory_space<smem>>) -> (i32, i32, i32) {
    %c0_i32 = arith.constant 0 : i32
    %c0_i32_0 = arith.constant 0 : i32
    %c0_i32_1 = arith.constant 0 : i32
    %c0_i32_2 = arith.constant 0 : i32
    return %c0_i32, %c0_i32_0, %c0_i32_1 : i32, i32, i32
  }
  func.func @transform_2(%arg0: i32, %arg1: memref<2xi32, #tpu.memory_space<smem>>) -> (i32, i32, i32) {
    %c0_i32 = arith.constant 0 : i32
    %c0_i32_0 = arith.constant 0 : i32
    %c0_i32_1 = arith.constant 0 : i32
    %c0_i32_2 = arith.constant 0 : i32
    return %c0_i32, %c0_i32_0, %c0_i32_1 : i32, i32, i32
  }
  func.func @transform_3(%arg0: i32, %arg1: memref<2xi32, #tpu.memory_space<smem>>) -> (i32, i32) {
    %c0_i32 = arith.constant 0 : i32
    %c0_i32_0 = arith.constant 0 : i32
    %c0_i32_1 = arith.constant 0 : i32
    return %c0_i32, %c0_i32_0 : i32, i32
  }
  func.func @transform_4(%arg0: i32, %arg1: memref<2xi32, #tpu.memory_space<smem>>) -> (i32, i32) {
    %c0_i32 = arith.constant 0 : i32
    %c0_i32_0 = arith.constant 0 : i32
    %c0_i32_1 = arith.constant 0 : i32
    return %c0_i32, %c0_i32_0 : i32, i32
  }
  func.func @transform_5(%arg0: i32, %arg1: memref<2xi32, #tpu.memory_space<smem>>) -> (i32, i32, i32) {
    %c0_i32 = arith.constant 0 : i32
    %c0_i32_0 = arith.constant 0 : i32
    %c0_i32_1 = arith.constant 0 : i32
    %c0_i32_2 = arith.constant 0 : i32
    return %c0_i32, %c0_i32_0, %c0_i32_1 : i32, i32, i32
  }
  func.func @transform_6(%arg0: i32, %arg1: memref<2xi32, #tpu.memory_space<smem>>) -> (i32, i32, i32) {
    %c0_i32 = arith.constant 0 : i32
    %c0_i32_0 = arith.constant 0 : i32
    %c0_i32_1 = arith.constant 0 : i32
    %c0_i32_2 = arith.constant 0 : i32
    return %c0_i32, %c0_i32_0, %c0_i32_1 : i32, i32, i32
  }
  func.func @transform_7(%arg0: i32, %arg1: memref<2xi32, #tpu.memory_space<smem>>) -> (i32, i32, i32) {
    %c0_i32 = arith.constant 0 : i32
    %c0_i32_0 = arith.constant 0 : i32
    %c0_i32_1 = arith.constant 0 : i32
    %c0_i32_2 = arith.constant 0 : i32
    return %c0_i32, %c0_i32_0, %c0_i32_1 : i32, i32, i32
  }
  func.func @transform_8(%arg0: i32, %arg1: memref<2xi32, #tpu.memory_space<smem>>) -> (i32, i32, i32) {
    %c0_i32 = arith.constant 0 : i32
    %c0_i32_0 = arith.constant 0 : i32
    %c0_i32_1 = arith.constant 0 : i32
    return %arg0, %c0_i32, %c0_i32_0 : i32, i32, i32
  }
}

</mosaic_0001>

<llo_original>
// kernel: clip_wrapper_forward.1
$region0: #{clip_wrapper_forward.1}
  #allocation0 [shape = 'u32[]', space=smem, size = 0x4, offset = 0x4, fixed_abs, tag = 'smem constant byte address 0x4 - core index']
  #allocation1 [shape = 'u32[144,128]{1,0:T(1,128)}', space=vmem, size = 0x12000, scoped, tag = 'internal scratch']
  #allocation2 [shape = 's32[1]{0}', space=sflag, size = 0x4, scoped, tag = 'scoped memory for clip_wrapper_forward.1']
  #allocation3 [shape = 'u8[512]{0}', space=smem, size = 0x200, scoped, tag = 'prefetched SMEM operand 0']
  %s0 = inlined_call_operand.vmem [shape: s32[2], index: 0, kind: input, shape index: {}]
  %s1 = inlined_call_operand.vmem [shape: f32[2,4,192], index: 1, kind: input, shape index: {}]
  %s2 = inlined_call_operand.vmem [shape: f32[2,2,32], index: 2, kind: input, shape index: {}]
  %s3 = inlined_call_operand.vmem [shape: f32[2,8,32], index: 3, kind: input, shape index: {}]
  %s4 = inlined_call_operand.vmem [shape: f32[52,128], index: 4, kind: input, shape index: {}]
  %s5 = inlined_call_operand.vmem [shape: bf16[192,32], index: 5, kind: input, shape index: {}]
  %s6 = inlined_call_operand.vmem [shape: bf16[4,32,288], index: 6, kind: input, shape index: {}]
  %s7 = inlined_call_operand.vmem [shape: bf16[4,128,32], index: 7, kind: input, shape index: {}]
  %s8 = inlined_call_operand.vmem [shape: bf16[2,32,16], index: 8, kind: input, shape index: {}]
  %s9 = inlined_call_operand.vmem [shape: f32[2,2,16], index: 9, kind: output, shape index: {}]
  %s10 = sld [smem:[#allocation0]]
  $region73: #{clip_wrapper_forward.1} parent=0
    _
  %s12 = ssub.s32 1, %s10
  %s13 = scalar_select 0, %s12, %s10
  %s14 = sshll.u32 %s0, 4
  %s15 = int_to_ptr.vmem [resolvable:$true] %s14
  %17 = dma.vmem_to_smem %s15, 16, [#allocation3], [#allocation2]
  %18 = dma.done [#allocation2], 16
  %19 = sfence
  loop: start=0, step=1, limit=4
  $region2: #{clip_wrapper_forward.1} parent=0 // loop_pre_header
    _
  $region3: #{clip_wrapper_forward.1} parent=0 // loop_header
    %s21 = sphi 0, %s25
    %p22 = scmp.ge.s32.totalorder %s21, 4
    %s29 = sphi 0, %s29
    %s31 = sphi 0, %s29
    %s32 = sphi 0, %s31
    %s46 = sphi 0, %s32
    %s50 = sphi 0, %s50
    %s52 = sphi 0, %s50
    %s53 = sphi 0, %s52
    %s67 = sphi 0, %s53
    %s71 = sphi 0, %s71
    %s73 = sphi 0, %s71
    %s74 = sphi 0, %s73
    %s88 = sphi 0, %s74
    %s92 = sphi 0, %s92
    %s94 = sphi 0, %s92
    %s95 = sphi 0, %s94
    %s109 = sphi 0, %s95
    %s113 = sphi 0, %s113
    %s115 = sphi 0, %s113
    %s116 = sphi 0, %s115
    %s130 = sphi 0, %s116
    %s134 = sphi 0, %s134
    %s136 = sphi 0, %s134
    %s137 = sphi 0, %s136
    %s151 = sphi 0, %s137
    %s155 = sphi 0, %s155
    %s157 = sphi 0, %s155
    %s158 = sphi 0, %s157
    %s172 = sphi 0, %s158
    %s176 = sphi 0, %s176
    %s178 = sphi 0, %s176
    %s179 = sphi 0, %s178
    %s193 = sphi 0, %s179
    %s199 = sphi 0, %s201
    %s202 = sphi 0, %s199
    %s203 = sphi 0, %s202
    %s219 = sphi 0, %s203
  $region4: #{clip_wrapper_forward.1} parent=0 // loop_header_branch
    %24 = sbr.rel (%p22) target = $region8
  $region5: #{clip_wrapper_forward.1} parent=0 // loop_body
    %s26 = ssub.s32 %s21, 1
    %s27 = ssub.s32 %s21, 2
    %s28 = sadd.s32 %s21, 1
    %s30 = sadd.s32 %s29, 1
    %p33 = scmp.eq.s32.totalorder %s21, 1
    %p34 = scmp.ne.s32.totalorder %s29, %s31
    %p35 = scmp.eq.s32.totalorder %s21, 0
    %p36 = por %p34, %p35
    %p37 = scmp.ne.s32.totalorder %s29, %s31
    %p38 = scmp.eq.s32.totalorder %s26, 1
    %p39 = por %p37, %p38
    %p40 = scmp.ne.s32.totalorder %s31, %s32
    %p41 = scmp.eq.s32.totalorder %s26, 0
    %p42 = por %p40, %p41
    %p43 = scmp.ne.s32.totalorder %s31, %s32
    %p44 = scmp.eq.s32.totalorder %s27, 1
    %p45 = por %p43, %p44
    %p47 = scmp.ne.s32.totalorder %s32, %s46
    %p48 = scmp.eq.s32.totalorder %s27, 0
    %p49 = por %p47, %p48
    %s51 = sadd.s32 %s50, 1
    %p54 = scmp.eq.s32.totalorder %s21, 1
    %p55 = scmp.ne.s32.totalorder %s50, %s52
    %p56 = scmp.eq.s32.totalorder %s21, 0
    %p57 = por %p55, %p56
    %p58 = scmp.ne.s32.totalorder %s50, %s52
    %p59 = scmp.eq.s32.totalorder %s26, 1
    %p60 = por %p58, %p59
    %p61 = scmp.ne.s32.totalorder %s52, %s53
    %p62 = scmp.eq.s32.totalorder %s26, 0
    %p63 = por %p61, %p62
    %p64 = scmp.ne.s32.totalorder %s52, %s53
    %p65 = scmp.eq.s32.totalorder %s27, 1
    %p66 = por %p64, %p65
    %p68 = scmp.ne.s32.totalorder %s53, %s67
    %p69 = scmp.eq.s32.totalorder %s27, 0
    %p70 = por %p68, %p69
    %s72 = sadd.s32 %s71, 1
    %p75 = scmp.eq.s32.totalorder %s21, 1
    %p76 = scmp.ne.s32.totalorder %s71, %s73
    %p77 = scmp.eq.s32.totalorder %s21, 0
    %p78 = por %p76, %p77
    %p79 = scmp.ne.s32.totalorder %s71, %s73
    %p80 = scmp.eq.s32.totalorder %s26, 1
    %p81 = por %p79, %p80
    %p82 = scmp.ne.s32.totalorder %s73, %s74
    %p83 = scmp.eq.s32.totalorder %s26, 0
    %p84 = por %p82, %p83
    %p85 = scmp.ne.s32.totalorder %s73, %s74
    %p86 = scmp.eq.s32.totalorder %s27, 1
    %p87 = por %p85, %p86
    %p89 = scmp.ne.s32.totalorder %s74, %s88
    %p90 = scmp.eq.s32.totalorder %s27, 0
    %p91 = por %p89, %p90
    %s93 = sadd.s32 %s92, 1
    %p96 = scmp.eq.s32.totalorder %s21, 1
    %p97 = scmp.ne.s32.totalorder %s92, %s94
    %p98 = scmp.eq.s32.totalorder %s21, 0
    %p99 = por %p97, %p98
    %p100 = scmp.ne.s32.totalorder %s92, %s94
    %p101 = scmp.eq.s32.totalorder %s26, 1
    %p102 = por %p100, %p101
    %p103 = scmp.ne.s32.totalorder %s94, %s95
    %p104 = scmp.eq.s32.totalorder %s26, 0
    %p105 = por %p103, %p104
    %p106 = scmp.ne.s32.totalorder %s94, %s95
    %p107 = scmp.eq.s32.totalorder %s27, 1
    %p108 = por %p106, %p107
    %p110 = scmp.ne.s32.totalorder %s95, %s109
    %p111 = scmp.eq.s32.totalorder %s27, 0
    %p112 = por %p110, %p111
    %s114 = sadd.s32 %s113, 1
    %p117 = scmp.eq.s32.totalorder %s21, 1
    %p118 = scmp.ne.s32.totalorder %s113, %s115
    %p119 = scmp.eq.s32.totalorder %s21, 0
    %p120 = por %p118, %p119
    %p121 = scmp.ne.s32.totalorder %s113, %s115
    %p122 = scmp.eq.s32.totalorder %s26, 1
    %p123 = por %p121, %p122
    %p124 = scmp.ne.s32.totalorder %s115, %s116
    %p125 = scmp.eq.s32.totalorder %s26, 0
    %p126 = por %p124, %p125
    %p127 = scmp.ne.s32.totalorder %s115, %s116
    %p128 = scmp.eq.s32.totalorder %s27, 1
    %p129 = por %p127, %p128
    %p131 = scmp.ne.s32.totalorder %s116, %s130
    %p132 = scmp.eq.s32.totalorder %s27, 0
    %p133 = por %p131, %p132
    %s135 = sadd.s32 %s134, 1
    %p138 = scmp.eq.s32.totalorder %s21, 1
    %p139 = scmp.ne.s32.totalorder %s134, %s136
    %p140 = scmp.eq.s32.totalorder %s21, 0
    %p141 = por %p139, %p140
    %p142 = scmp.ne.s32.totalorder %s134, %s136
    %p143 = scmp.eq.s32.totalorder %s26, 1
    %p144 = por %p142, %p143
    %p145 = scmp.ne.s32.totalorder %s136, %s137
    %p146 = scmp.eq.s32.totalorder %s26, 0
    %p147 = por %p145, %p146
    %p148 = scmp.ne.s32.totalorder %s136, %s137
    %p149 = scmp.eq.s32.totalorder %s27, 1
    %p150 = por %p148, %p149
    %p152 = scmp.ne.s32.totalorder %s137, %s151
    %p153 = scmp.eq.s32.totalorder %s27, 0
    %p154 = por %p152, %p153
    %s156 = sadd.s32 %s155, 1
    %p159 = scmp.eq.s32.totalorder %s21, 1
    %p160 = scmp.ne.s32.totalorder %s155, %s157
    %p161 = scmp.eq.s32.totalorder %s21, 0
    %p162 = por %p160, %p161
    %p163 = scmp.ne.s32.totalorder %s155, %s157
    %p164 = scmp.eq.s32.totalorder %s26, 1
    %p165 = por %p163, %p164
    %p166 = scmp.ne.s32.totalorder %s157, %s158
    %p167 = scmp.eq.s32.totalorder %s26, 0
    %p168 = por %p166, %p167
    %p169 = scmp.ne.s32.totalorder %s157, %s158
    %p170 = scmp.eq.s32.totalorder %s27, 1
    %p171 = por %p169, %p170
    %p173 = scmp.ne.s32.totalorder %s158, %s172
    %p174 = scmp.eq.s32.totalorder %s27, 0
    %p175 = por %p173, %p174
    %s177 = sadd.s32 %s176, 1
    %p180 = scmp.eq.s32.totalorder %s21, 1
    %p181 = scmp.ne.s32.totalorder %s176, %s178
    %p182 = scmp.eq.s32.totalorder %s21, 0
    %p183 = por %p181, %p182
    %p184 = scmp.ne.s32.totalorder %s176, %s178
    %p185 = scmp.eq.s32.totalorder %s26, 1
    %p186 = por %p184, %p185
    %p187 = scmp.ne.s32.totalorder %s178, %s179
    %p188 = scmp.eq.s32.totalorder %s26, 0
    %p189 = por %p187, %p188
    %p190 = scmp.ne.s32.totalorder %s178, %s179
    %p191 = scmp.eq.s32.totalorder %s27, 1
    %p192 = por %p190, %p191
    %p194 = scmp.ne.s32.totalorder %s179, %s193
    %p195 = scmp.eq.s32.totalorder %s27, 0
    %p196 = por %p194, %p195
    %s197 = ssub.s32 %s21, %s28
    %p198 = scmp.eq.s32.totalorder %s197, 0
    %s200 = sadd.s32 %s199, 1
    %s201 = scalar_select %p198, %s199, %s200
    %p204 = pneg %p198
    %p205 = scmp.eq.s32.totalorder %s21, 1
    %p206 = por %p204, %p205
    %p207 = scmp.ne.s32.totalorder %s199, %s202
    %p208 = scmp.eq.s32.totalorder %s21, 0
    %p209 = por %p207, %p208
    %p210 = scmp.ne.s32.totalorder %s199, %s202
    %p211 = scmp.eq.s32.totalorder %s26, 1
    %p212 = por %p210, %p211
    %p213 = scmp.ne.s32.totalorder %s202, %s203
    %p214 = scmp.eq.s32.totalorder %s26, 0
    %p215 = por %p213, %p214
    %p216 = scmp.ne.s32.totalorder %s202, %s203
    %p217 = scmp.eq.s32.totalorder %s27, 1
    %p218 = por %p216, %p217
    %p220 = scmp.ne.s32.totalorder %s203, %s219
    %p221 = scmp.eq.s32.totalorder %s27, 0
    %p222 = por %p220, %p221
    %p223 = scmp.le.s32.totalorder 1, %s21
    %p224 = scmp.lt.s32.totalorder %s21, 3
    %p225 = pnand %p223, %p224
    %p226 = pneg %p225
    // Predicated region
    $region9: #{clip_wrapper_forward.1} parent=5 // pred_check
      _
    $region10: #{clip_wrapper_forward.1} parent=5 // pred_check_branch
      %228 = sbr.rel (%p225) target = $region12
    $region11: #{clip_wrapper_forward.1} parent=5 // pred_region
      %s229 = ssub.s32 %s21, 1
      // Predicated region
      $region13: #{clip_wrapper_forward.1} parent=11 // pred_check
        %p230 = pneg %p42
      $region14: #{clip_wrapper_forward.1} parent=11 // pred_check_branch
        %232 = sbr.rel (%p230) target = $region16
      $region15: #{clip_wrapper_forward.1} parent=11 // pred_region
        _
      $region16: #{clip_wrapper_forward.1} parent=11 // pred_fallthru
        _
      // Predicated region
      $region17: #{clip_wrapper_forward.1} parent=11 // pred_check
        %p233 = pneg %p63
      $region18: #{clip_wrapper_forward.1} parent=11 // pred_check_branch
        %235 = sbr.rel (%p233) target = $region20
      $region19: #{clip_wrapper_forward.1} parent=11 // pred_region
        _
      $region20: #{clip_wrapper_forward.1} parent=11 // pred_fallthru
        _
      // Predicated region
      $region21: #{clip_wrapper_forward.1} parent=11 // pred_check
        %p236 = pneg %p84
      $region22: #{clip_wrapper_forward.1} parent=11 // pred_check_branch
        %238 = sbr.rel (%p236) target = $region24
      $region23: #{clip_wrapper_forward.1} parent=11 // pred_region
        _
      $region24: #{clip_wrapper_forward.1} parent=11 // pred_fallthru
        _
      // Predicated region
      $region25: #{clip_wrapper_forward.1} parent=11 // pred_check
        %p239 = pneg %p105
      $region26: #{clip_wrapper_forward.1} parent=11 // pred_check_branch
        %241 = sbr.rel (%p239) target = $region28
      $region27: #{clip_wrapper_forward.1} parent=11 // pred_region
        _
      $region28: #{clip_wrapper_forward.1} parent=11 // pred_fallthru
        _
      // Predicated region
      $region29: #{clip_wrapper_forward.1} parent=11 // pred_check
        %p242 = pneg %p126
      $region30: #{clip_wrapper_forward.1} parent=11 // pred_check_branch
        %244 = sbr.rel (%p242) target = $region32
      $region31: #{clip_wrapper_forward.1} parent=11 // pred_region
        _
      $region32: #{clip_wrapper_forward.1} parent=11 // pred_fallthru
        _
      // Predicated region
      $region33: #{clip_wrapper_forward.1} parent=11 // pred_check
        %p245 = pneg %p147
      $region34: #{clip_wrapper_forward.1} parent=11 // pred_check_branch
        %247 = sbr.rel (%p245) target = $region36
      $region35: #{clip_wrapper_forward.1} parent=11 // pred_region
        _
      $region36: #{clip_wrapper_forward.1} parent=11 // pred_fallthru
        _
      // Predicated region
      $region37: #{clip_wrapper_forward.1} parent=11 // pred_check
        %p248 = pneg %p168
      $region38: #{clip_wrapper_forward.1} parent=11 // pred_check_branch
        %250 = sbr.rel (%p248) target = $region40
      $region39: #{clip_wrapper_forward.1} parent=11 // pred_region
        _
      $region40: #{clip_wrapper_forward.1} parent=11 // pred_fallthru
        _
      // Predicated region
      $region41: #{clip_wrapper_forward.1} parent=11 // pred_check
        %p251 = pneg %p189
      $region42: #{clip_wrapper_forward.1} parent=11 // pred_check_branch
        %253 = sbr.rel (%p251) target = $region44
      $region43: #{clip_wrapper_forward.1} parent=11 // pred_region
        _
      $region44: #{clip_wrapper_forward.1} parent=11 // pred_fallthru
        _
    $region12: #{clip_wrapper_forward.1} parent=5 // pred_fallthru
      _
    %p254 = scmp.lt.s32.totalorder %s21, 2
    // Predicated region
    $region45: #{clip_wrapper_forward.1} parent=5 // pred_check
      %p255 = pneg %p254
    $region46: #{clip_wrapper_forward.1} parent=5 // pred_check_branch
      %257 = sbr.rel (%p255) target = $region48
    $region47: #{clip_wrapper_forward.1} parent=5 // pred_region
      _
    $region48: #{clip_wrapper_forward.1} parent=5 // pred_fallthru
      _
    %p258 = scmp.le.s32.totalorder 1, %s21
    %p259 = scmp.lt.s32.totalorder %s21, 3
    %p260 = pnand %p258, %p259
    %p261 = pneg %p260
    // Predicated region
    $region49: #{clip_wrapper_forward.1} parent=5 // pred_check
      _
    $region50: #{clip_wrapper_forward.1} parent=5 // pred_check_branch
      %263 = sbr.rel (%p260) target = $region52
    $region51: #{clip_wrapper_forward.1} parent=5 // pred_region
      %s264 = ssub.s32 %s21, 1
      %p265 = pneg %p42
      %p266 = pneg %p39
      %p267 = pneg %p63
      %p268 = pneg %p60
      %p269 = pneg %p84
      %p270 = pneg %p81
      %p271 = pneg %p105
      %p272 = pneg %p102
      %p273 = pneg %p126
      %p274 = pneg %p123
      %p275 = pneg %p147
      %p276 = pneg %p144
      %p277 = pneg %p168
      %p278 = pneg %p165
      %p279 = pneg %p189
      %p280 = pneg %p186
      %p281 = pneg %p215
      %p282 = pneg %p212
      %p283 = scmp.lt.s32.totalorder %s26, 1
      %s284 = scalar_select %p283, %s26, 1
      %s285 = smul.addr %s284, 2
      %s286 = scalar_lea.vmem %s9, %s285
      %p287 = scmp.lt.s32.totalorder %s26, 1
      %s288 = scalar_select %p287, %s26, 1
      %s289 = smul.addr %s288, 2
      %s290 = scalar_lea.vmem %s9, %s289
      %p292 = scmp.eq.s32.totalorder %s26, 0
      // Predicated region
      $region53: #{clip_wrapper_forward.1} parent=51 // pred_check
        %p293 = pneg %p292
      $region54: #{clip_wrapper_forward.1} parent=51 // pred_check_branch
        %295 = sbr.rel (%p293) target = $region56
      $region55: #{clip_wrapper_forward.1} parent=51 // pred_region
        %v296 = vld [vmem:[%s1] sm:$0xff]
        %v297 = vld [vmem:[%s1 + $0x8] sm:$0xff]
        %v300 = vcombine.low %v296, %v297
        %v301 = vcombine.high %v296, %v297
        %v304 = vpack.c.bf16 %v300, %v300
        %v305 = vpack.c.bf16 %v301, %v301
        %v306 = vld [vmem:[%s5] sm:$0xf]
        %v307 = vld [vmem:[%s5 + $0x4] sm:$0xf]
        %v308 = vld [vmem:[%s5 + $0x8] sm:$0xf]
        %v309 = vld [vmem:[%s5 + $0xc] sm:$0xf]
        %v310 = vld [vmem:[%s5 + $0x10] sm:$0xf]
        %v311 = vld [vmem:[%s5 + $0x14] sm:$0xf]
        %v312 = vld [vmem:[%s5 + $0x18] sm:$0xf]
        %v313 = vld [vmem:[%s5 + $0x1c] sm:$0xf]
        %v314 = vld [vmem:[%s5 + $0x20] sm:$0xf]
        %v315 = vld [vmem:[%s5 + $0x24] sm:$0xf]
        %v316 = vld [vmem:[%s5 + $0x28] sm:$0xf]
        %v317 = vld [vmem:[%s5 + $0x2c] sm:$0xf]
        %v318 = vld [vmem:[%s5 + $0x30] sm:$0xf]
        %v319 = vld [vmem:[%s5 + $0x34] sm:$0xf]
        %v320 = vld [vmem:[%s5 + $0x38] sm:$0xf]
        %v321 = vld [vmem:[%s5 + $0x3c] sm:$0xf]
        %v322 = vld [vmem:[%s5 + $0x40] sm:$0xf]
        %v323 = vld [vmem:[%s5 + $0x44] sm:$0xf]
        %v324 = vld [vmem:[%s5 + $0x48] sm:$0xf]
        %v325 = vld [vmem:[%s5 + $0x4c] sm:$0xf]
        %v326 = vld [vmem:[%s5 + $0x50] sm:$0xf]
        %v327 = vld [vmem:[%s5 + $0x54] sm:$0xf]
        %v328 = vld [vmem:[%s5 + $0x58] sm:$0xf]
        %v329 = vld [vmem:[%s5 + $0x5c] sm:$0xf]
        %v354 = vunpack.c.l.b16 %v306
        %v355 = vunpack.c.l.b16 %v307
        %v356 = vunpack.c.l.b16 %v308
        %v357 = vunpack.c.l.b16 %v309
        %v358 = vunpack.c.l.b16 %v310
        %v359 = vunpack.c.l.b16 %v311
        %v360 = vunpack.c.l.b16 %v312
        %v361 = vunpack.c.l.b16 %v313
        %v362 = vunpack.c.l.b16 %v314
        %v363 = vunpack.c.l.b16 %v315
        %v364 = vunpack.c.l.b16 %v316
        %v365 = vunpack.c.l.b16 %v317
        %v366 = vunpack.c.l.b16 %v318
        %v367 = vunpack.c.l.b16 %v319
        %v368 = vunpack.c.l.b16 %v320
        %v369 = vunpack.c.l.b16 %v321
        %v370 = vunpack.c.l.b16 %v322
        %v371 = vunpack.c.l.b16 %v323
        %v372 = vunpack.c.l.b16 %v324
        %v373 = vunpack.c.l.b16 %v325
        %v374 = vunpack.c.l.b16 %v326
        %v375 = vunpack.c.l.b16 %v327
        %v376 = vunpack.c.l.b16 %v328
        %v377 = vunpack.c.l.b16 %v329
        %v378 = vpack.c.b16 %v355, %v354
        %v379 = vpack.c.b16 %v357, %v356
        %v380 = vpack.c.b16 %v359, %v358
        %v381 = vpack.c.b16 %v361, %v360
        %v382 = vpack.c.b16 %v363, %v362
        %v383 = vpack.c.b16 %v365, %v364
        %v384 = vpack.c.b16 %v367, %v366
        %v385 = vpack.c.b16 %v369, %v368
        %v386 = vpack.c.b16 %v371, %v370
        %v387 = vpack.c.b16 %v373, %v372
        %v388 = vpack.c.b16 %v375, %v374
        %v389 = vpack.c.b16 %v377, %v376
        %vm402 = vcmask 523264
        %v404 = vsel %vm402, %v305, 0
        %406 = vmatprep.subr.bf16.mxu0 0
        %407 = vmatpush1.bf16.msra.mxu0 %v378
        %408 = vmatprep.subr.bf16.mxu0 0
        %409 = vmatpush1.bf16.msra.mxu0 %v379
        %410 = vmatprep.subr.bf16.mxu0 0
        %411 = vmatpush1.bf16.msra.mxu0 %v380
        %412 = vmatprep.subr.bf16.mxu0 0
        %413 = vmatpush1.bf16.msra.mxu0 %v381
        %414 = vmatprep.subr.bf16.mxu0 0
        %415 = vmatpush1.bf16.msra.mxu0 %v382
        %416 = vmatprep.subr.bf16.mxu0 0
        %417 = vmatpush1.bf16.msra.mxu0 %v383
        %418 = vmatprep.subr.bf16.mxu0 0
        %419 = vmatpush1.bf16.msra.mxu0 %v384
        %420 = vmatprep.subr.bf16.mxu0 0
        %421 = vmatpush1.bf16.msra.mxu0 %v385
        %422 = vmatprep.subr.bf16.mxu0 0
        %423 = vmatpush1.bf16.msra.mxu0 %v386
        %424 = vmatprep.subr.bf16.mxu0 0
        %425 = vmatpush1.bf16.msra.mxu0 %v387
        %426 = vmatprep.subr.bf16.mxu0 0
        %427 = vmatpush1.bf16.msra.mxu0 %v388
        %428 = vmatprep.subr.bf16.mxu0 0
        %429 = vmatpush1.bf16.msra.mxu0 %v389
        %430 = vmatprep.subr.bf16.mxu0 0
        %431 = vmatpush1.bf16.msra.mxu0 0
        %432 = vmatprep.subr.bf16.mxu0 0
        %433 = vmatpush1.bf16.msra.mxu0 0
        %434 = vmatprep.subr.bf16.mxu0 0
        %435 = vmatpush1.bf16.msra.mxu0 0
        %436 = vmatprep.subr.bf16.mxu0 0
        %437 = vmatpush1.bf16.msra.mxu0 0
        %438 = vmatprep.mubr.bf16.mxu0 %v404
        %439 = vmatmul.mubr.bf16.gmra.mrb[0].mxu0 %v304
        %v440 = vpop.f32.mrb[0].mxu0
        %v441 = vadd.f32 0.0, %v440
        %v442 = vpop.f32.mrb[0].mxu0
        %v443 = vpop.f32.mrb[0].mxu0
        %v444 = vpop.f32.mrb[0].mxu0
        %445 = vdwg.mxu0
        %v447 = vcombine.high %v441, %v441
        %v449 = vld [vmem:[%s4 + $0x2] sm:$0xf]
        %v450 = vadd.f32 %v441, %v449
        %v451 = vadd.f32 %v447, %v449
        %v452 = vld [vmem:[%s4] sm:$0x1]
        %v453 = vld [vmem:[%s4 + $0x1] sm:$0x1]
        %v454 = vadd.f32 %v452, %v453
        %v455 = vld [vmem:[%s2] sm:$0x3]
        %v456 = vld [vmem:[%s2 + $0x2] sm:$0x3]
        %v458 = vrot.slane %v454, 6
        %v462 = vrot.slane %v450, 5
        %v463 = vrot.slane %v451, 5
        %vm466 = vcmask 1041408
        %v467 = vsel %vm466, %v455, %v458
        %v468 = vsel %vm466, %v456, %v458
        %vm469 = vcmask 1042432
        %v470 = vsel %vm469, %v467, %v462
        %v471 = vsel %vm469, %v468, %v463
        %vm472 = vcmask 1046528
        %v473 = vsel %vm472, %v470, 0.0
        %v474 = vsel %vm472, %v471, 0.0
        %v475 = vld [vmem:[%s4 + $0xe] sm:$0x1]
        %v476 = vld [vmem:[%s4 + $0xf] sm:$0x1]
        %vm477 = vcmask 261120
        %v478 = vsel %vm477, %v473, 0.0
        %479 = vadd.xlane.f32.xlu0 %v478
        %v480 = vpop.xlane.xlu0 %479
        %v481 = vsel %vm477, %v474, 0.0
        %482 = vadd.xlane.f32.xlu0 %v481
        %v483 = vpop.xlane.xlu0 %482
        %v484 = vrcp.pop 32.0
        %v485 = vmul.f32 %v480, %v484
        %v486 = vmul.f32 %v483, %v484
        %v487 = vsub.f32 %v473, %v485
        %v488 = vsub.f32 %v474, %v486
        %v489 = vmul.f32 %v487, %v487
        %v490 = vmul.f32 %v488, %v488
        %v491 = vsel %vm477, %v489, 0.0
        %492 = vadd.xlane.f32.xlu0 %v491
        %v493 = vpop.xlane.xlu0 %492
        %v494 = vsel %vm477, %v490, 0.0
        %495 = vadd.xlane.f32.xlu0 %v494
        %v496 = vpop.xlane.xlu0 %495
        %v497 = vmul.f32 %v493, %v484
        %v498 = vmul.f32 %v496, %v484
        %v499 = vadd.f32 %v497, 1e-05
        %v500 = vadd.f32 %v498, 1e-05
        %v501 = vrsqrt.pop %v499
        %v502 = vrsqrt.pop %v500
        %v503 = vmul.f32 %v487, %v501
        %v504 = vmul.f32 %v488, %v502
        %v505 = vlaneseq
        %v506 = vshrl.u32 %v505, 7
        %v507 = vsub.s32 0, %v506
        %v508 = vrot.slane %v475, %v507
        %v509 = vmul.f32 %v503, %v508
        %v510 = vmul.f32 %v504, %v508
        %v511 = vlaneseq
        %v512 = vshrl.u32 %v511, 7
        %v513 = vsub.s32 0, %v512
        %v514 = vrot.slane %v476, %v513
        %v515 = vadd.f32 %v509, %v514
        %v516 = vadd.f32 %v510, %v514
        %v517 = vlaneseq
        %v518 = vand.u32 %v517, 127
        %vm519 = vcmp.lt.s32.totalorder %v518, 7
        %v520 = vsel %vm519, 0.0, -1e+30
        %v521 = vld [vmem:[%s4 + $0x14] sm:$0x1]
        %v522 = vld [vmem:[%s4 + $0x15] sm:$0x1]
        %v523 = vld [vmem:[%s4 + $0x16] sm:$0x1]
        %v524 = vld [vmem:[%s4 + $0x17] sm:$0x1]
        %v525 = vld [vmem:[%s4 + $0x18] sm:$0x1]
        %v526 = vld [vmem:[%s4 + $0x19] sm:$0x1]
        %v527 = vld [vmem:[%s4 + $0x1a] sm:$0x1]
        %v528 = vld [vmem:[%s4 + $0x1b] sm:$0x1]
        %v529 = vld [vmem:[%s6] sm:$0xf]
        %v530 = vld [vmem:[%s6 + $0xc] sm:$0xf]
        %v531 = vld [vmem:[%s6 + $0x18] sm:$0xf]
        %v532 = vld [vmem:[%s6 + $0x24] sm:$0xf]
        %v533 = vld [vmem:[%s6 + $0x4] sm:$0xf]
        %v534 = vld [vmem:[%s6 + $0x10] sm:$0xf]
        %v535 = vld [vmem:[%s6 + $0x1c] sm:$0xf]
        %v536 = vld [vmem:[%s6 + $0x28] sm:$0xf]
        %v537 = vld [vmem:[%s6 + $0x8] sm:$0xf]
        %v538 = vld [vmem:[%s6 + $0x14] sm:$0xf]
        %v539 = vld [vmem:[%s6 + $0x20] sm:$0xf]
        %v540 = vld [vmem:[%s6 + $0x2c] sm:$0xf]
        %v541 = vld [vmem:[%s7] sm:$0xf]
        %v542 = vld [vmem:[%s7 + $0x4] sm:$0xf]
        %v543 = vld [vmem:[%s7 + $0x8] sm:$0xf]
        %v544 = vld [vmem:[%s7 + $0xc] sm:$0xf]
        %v545 = vld [vmem:[%s7 + $0x10] sm:$0xf]
        %v546 = vld [vmem:[%s7 + $0x14] sm:$0xf]
        %v547 = vld [vmem:[%s7 + $0x18] sm:$0xf]
        %v548 = vld [vmem:[%s7 + $0x1c] sm:$0xf]
        %v549 = vld [vmem:[%s7 + $0x20] sm:$0xf]
        %v550 = vld [vmem:[%s7 + $0x24] sm:$0xf]
        %v551 = vld [vmem:[%s7 + $0x28] sm:$0xf]
        %v552 = vld [vmem:[%s7 + $0x2c] sm:$0xf]
        %v553 = vld [vmem:[%s7 + $0x30] sm:$0xf]
        %v554 = vld [vmem:[%s7 + $0x34] sm:$0xf]
        %v555 = vld [vmem:[%s7 + $0x38] sm:$0xf]
        %v556 = vld [vmem:[%s7 + $0x3c] sm:$0xf]
        %v557 = vsel %vm477, %v515, 0.0
        %558 = vadd.xlane.f32.xlu0 %v557
        %v559 = vpop.xlane.xlu0 %558
        %v560 = vsel %vm477, %v516, 0.0
        %561 = vadd.xlane.f32.xlu0 %v560
        %v562 = vpop.xlane.xlu0 %561
        %v563 = vmul.f32 %v559, %v484
        %v564 = vmul.f32 %v562, %v484
        %v565 = vsub.f32 %v515, %v563
        %v566 = vsub.f32 %v516, %v564
        %v567 = vmul.f32 %v565, %v565
        %v568 = vmul.f32 %v566, %v566
        %v569 = vsel %vm477, %v567, 0.0
        %570 = vadd.xlane.f32.xlu0 %v569
        %v571 = vpop.xlane.xlu0 %570
        %v572 = vsel %vm477, %v568, 0.0
        %573 = vadd.xlane.f32.xlu0 %v572
        %v574 = vpop.xlane.xlu0 %573
        %v575 = vmul.f32 %v571, %v484
        %v576 = vmul.f32 %v574, %v484
        %v577 = vadd.f32 %v575, 1e-05
        %v578 = vadd.f32 %v576, 1e-05
        %v579 = vrsqrt.pop %v577
        %v580 = vrsqrt.pop %v578
        %v581 = vmul.f32 %v565, %v579
        %v582 = vmul.f32 %v566, %v580
        %v583 = vlaneseq
        %v584 = vshrl.u32 %v583, 7
        %v585 = vsub.s32 0, %v584
        %v586 = vrot.slane %v521, %v585
        %v587 = vmul.f32 %v581, %v586
        %v588 = vmul.f32 %v582, %v586
        %v589 = vlaneseq
        %v590 = vshrl.u32 %v589, 7
        %v591 = vsub.s32 0, %v590
        %v592 = vrot.slane %v522, %v591
        %v593 = vadd.f32 %v587, %v592
        %v594 = vadd.f32 %v588, %v592
        %v595 = vpack.c.bf16 %v594, %v593
        %v596 = vlaneseq
        %v597 = vshrl.u32 %v596, 7
        %v598 = vsub.s32 0, %v597
        %v599 = vrot.slane %v523, %v598
        %v604 = vunpack.c.l.b16 %v529
        %v605 = vunpack.c.l.b16 %v530
        %v606 = vunpack.c.l.b16 %v531
        %v607 = vunpack.c.l.b16 %v532
        %v608 = vpack.c.b16 %v605, %v604
        %v609 = vpack.c.b16 %v607, %v606
        %v613 = vsel %vm477, %v595, 0
        %615 = vmatprep.subr.bf16.mxu0 0
        %616 = vmatpush1.bf16.msra.mxu0 %v608
        %617 = vmatprep.subr.bf16.mxu0 0
        %618 = vmatpush1.bf16.msra.mxu0 %v609
        %619 = vmatprep.subr.bf16.mxu0 0
        %620 = vmatpush1.bf16.msra.mxu0 0
        %621 = vmatprep.subr.bf16.mxu0 0
        %622 = vmatpush1.bf16.msra.mxu0 0
        %623 = vmatprep.subr.bf16.mxu0 0
        %624 = vmatpush1.bf16.msra.mxu0 0
        %625 = vmatprep.subr.bf16.mxu0 0
        %626 = vmatpush1.bf16.msra.mxu0 0
        %627 = vmatprep.subr.bf16.mxu0 0
        %628 = vmatpush1.bf16.msra.mxu0 0
        %629 = vmatprep.subr.bf16.mxu0 0
        %630 = vmatpush1.bf16.msra.mxu0 0
        %631 = vmatprep.subr.bf16.mxu0 0
        %632 = vmatpush1.bf16.msra.mxu0 0
        %633 = vmatprep.subr.bf16.mxu0 0
        %634 = vmatpush1.bf16.msra.mxu0 0
        %635 = vmatprep.subr.bf16.mxu0 0
        %636 = vmatpush1.bf16.msra.mxu0 0
        %637 = vmatprep.subr.bf16.mxu0 0
        %638 = vmatpush1.bf16.msra.mxu0 0
        %639 = vmatprep.subr.bf16.mxu0 0
        %640 = vmatpush1.bf16.msra.mxu0 0
        %641 = vmatprep.subr.bf16.mxu0 0
        %642 = vmatpush1.bf16.msra.mxu0 0
        %643 = vmatprep.subr.bf16.mxu0 0
        %644 = vmatpush1.bf16.msra.mxu0 0
        %645 = vmatprep.subr.bf16.mxu0 0
        %646 = vmatpush1.bf16.msra.mxu0 0
        %647 = vmatprep.mubr.bf16.mxu0 0
        %648 = vmatmul.mubr.bf16.gmra.mrb[0].mxu0 %v613
        %v649 = vpop.f32.mrb[0].mxu0
        %v650 = vadd.f32 %v599, %v649
        %v651 = vpop.f32.mrb[0].mxu0
        %v652 = vpop.f32.mrb[0].mxu0
        %v653 = vadd.f32 %v599, %v652
        %v654 = vpop.f32.mrb[0].mxu0
        %655 = vdwg.mxu0
        %v656 = vpack.c.bf16 %v650, %v650
        %v657 = vpack.c.bf16 %v653, %v653
        %659 = vrot.lane.b32.xlu0 %v656, 96
        %v660 = vpop.permute.xlu0 %659
        %vm661 = vcmask 130048
        %v663 = vsel %vm661, %v656, 0
        %v666 = vsel %vm661, %v660, 0
        %668 = vmatprep.subr.bf16.mxu0 0
        %669 = vmatpush1.bf16.xpose.msra.mxu0 %v666
        %670 = vmatprep.subr.bf16.mxu0 0
        %671 = vmatpush1.bf16.xpose.msra.mxu0 0
        %672 = vmatprep.subr.bf16.mxu0 0
        %673 = vmatpush1.bf16.xpose.msra.mxu0 0
        %674 = vmatprep.subr.bf16.mxu0 0
        %675 = vmatpush1.bf16.xpose.msra.mxu0 0
        %676 = vmatprep.subr.bf16.mxu0 0
        %677 = vmatpush1.bf16.xpose.msra.mxu0 0
        %678 = vmatprep.subr.bf16.mxu0 0
        %679 = vmatpush1.bf16.xpose.msra.mxu0 0
        %680 = vmatprep.subr.bf16.mxu0 0
        %681 = vmatpush1.bf16.xpose.msra.mxu0 0
        %682 = vmatprep.subr.bf16.mxu0 0
        %683 = vmatpush1.bf16.xpose.msra.mxu0 0
        %684 = vmatprep.subr.bf16.mxu0 0
        %685 = vmatpush1.bf16.xpose.msra.mxu0 0
        %686 = vmatprep.subr.bf16.mxu0 0
        %687 = vmatpush1.bf16.xpose.msra.mxu0 0
        %688 = vmatprep.subr.bf16.mxu0 0
        %689 = vmatpush1.bf16.xpose.msra.mxu0 0
        %690 = vmatprep.subr.bf16.mxu0 0
        %691 = vmatpush1.bf16.xpose.msra.mxu0 0
        %692 = vmatprep.subr.bf16.mxu0 0
        %693 = vmatpush1.bf16.xpose.msra.mxu0 0
        %694 = vmatprep.subr.bf16.mxu0 0
        %695 = vmatpush1.bf16.xpose.msra.mxu0 0
        %696 = vmatprep.subr.bf16.mxu0 0
        %697 = vmatpush1.bf16.xpose.msra.mxu0 0
        %698 = vmatprep.subr.bf16.mxu0 0
        %699 = vmatpush1.bf16.xpose.msra.mxu0 0
        %700 = vmatprep.mubr.bf16.mxu0 0
        %701 = vmatmul.mubr.bf16.gmra.mrb[0].mxu0 %v663
        %v702 = vpop.f32.mrb[0].mxu0
        %v703 = vadd.f32 %v520, %v702
        %v704 = vpop.f32.mrb[0].mxu0
        %v705 = vpop.f32.mrb[0].mxu0
        %v706 = vpop.f32.mrb[0].mxu0
        %707 = vdwg.mxu0
        %709 = vrot.lane.b32.xlu0 %v657, 96
        %v710 = vpop.permute.xlu0 %709
        %v712 = vsel %vm661, %v657, 0
        %v715 = vsel %vm661, %v710, 0
        %717 = vmatprep.subr.bf16.mxu0 0
        %718 = vmatpush1.bf16.xpose.msra.mxu0 %v715
        %719 = vmatprep.subr.bf16.mxu0 0
        %720 = vmatpush1.bf16.xpose.msra.mxu0 0
        %721 = vmatprep.subr.bf16.mxu0 0
        %722 = vmatpush1.bf16.xpose.msra.mxu0 0
        %723 = vmatprep.subr.bf16.mxu0 0
        %724 = vmatpush1.bf16.xpose.msra.mxu0 0
        %725 = vmatprep.subr.bf16.mxu0 0
        %726 = vmatpush1.bf16.xpose.msra.mxu0 0
        %727 = vmatprep.subr.bf16.mxu0 0
        %728 = vmatpush1.bf16.xpose.msra.mxu0 0
        %729 = vmatprep.subr.bf16.mxu0 0
        %730 = vmatpush1.bf16.xpose.msra.mxu0 0
        %731 = vmatprep.subr.bf16.mxu0 0
        %732 = vmatpush1.bf16.xpose.msra.mxu0 0
        %733 = vmatprep.subr.bf16.mxu0 0
        %734 = vmatpush1.bf16.xpose.msra.mxu0 0
        %735 = vmatprep.subr.bf16.mxu0 0
        %736 = vmatpush1.bf16.xpose.msra.mxu0 0
        %737 = vmatprep.subr.bf16.mxu0 0
        %738 = vmatpush1.bf16.xpose.msra.mxu0 0
        %739 = vmatprep.subr.bf16.mxu0 0
        %740 = vmatpush1.bf16.xpose.msra.mxu0 0
        %741 = vmatprep.subr.bf16.mxu0 0
        %742 = vmatpush1.bf16.xpose.msra.mxu0 0
        %743 = vmatprep.subr.bf16.mxu0 0
        %744 = vmatpush1.bf16.xpose.msra.mxu0 0
        %745 = vmatprep.subr.bf16.mxu0 0
        %746 = vmatpush1.bf16.xpose.msra.mxu0 0
        %747 = vmatprep.subr.bf16.mxu0 0
        %748 = vmatpush1.bf16.xpose.msra.mxu0 0
        %749 = vmatprep.mubr.bf16.mxu0 0
        %750 = vmatmul.mubr.bf16.gmra.mrb[0].mxu0 %v712
        %v751 = vpop.f32.mrb[0].mxu0
        %v752 = vadd.f32 %v520, %v751
        %v753 = vpop.f32.mrb[0].mxu0
        %v754 = vpop.f32.mrb[0].mxu0
        %v755 = vpop.f32.mrb[0].mxu0
        %756 = vdwg.mxu0
        %vm757 = vcmask 64512
        %v758 = vsel %vm757, %v703, -inf
        %759 = vmax.xlane.f32.xlu0 %v758
        %v760 = vpop.xlane.xlu0 %759
        %v761 = vsel %vm757, %v752, -inf
        %762 = vmax.xlane.f32.xlu0 %v761
        %v763 = vpop.xlane.xlu0 %762
        %v764 = vsub.f32 %v703, %v760
        %v765 = vsub.f32 %v752, %v763
        %v766 = vmul.f32 %v764, 1.442695
        %v767 = vpow.pop %v766
        %v768 = vmul.f32 %v765, 1.442695
        %v769 = vpow.pop %v768
        %v770 = vsel %vm757, %v767, 0.0
        %771 = vadd.xlane.f32.xlu0 %v770
        %v772 = vpop.xlane.xlu0 %771
        %v773 = vsel %vm757, %v769, 0.0
        %774 = vadd.xlane.f32.xlu0 %v773
        %v775 = vpop.xlane.xlu0 %774
        %v776 = vrcp.pop %v772
        %v777 = vrcp.pop %v775
        %v778 = vmul.f32 %v767, %v776
        %v779 = vmul.f32 %v769, %v777
        %v780 = vpack.c.bf16 %v778, %v778
        %v781 = vpack.c.bf16 %v779, %v779
        %782 = vrot.lane.b32.xlu0 %v656, 64
        %v783 = vpop.permute.xlu0 %782
        %v785 = vsel %vm757, %v780, 0
        %vm787 = vcmask 1043456
        %v789 = vsel %vm787, %v783, 0
        %791 = vmatprep.subr.bf16.mxu0 0
        %792 = vmatpush1.bf16.msra.mxu0 %v789
        %793 = vmatprep.subr.bf16.mxu0 0
        %794 = vmatpush1.bf16.msra.mxu0 0
        %795 = vmatprep.subr.bf16.mxu0 0
        %796 = vmatpush1.bf16.msra.mxu0 0
        %797 = vmatprep.subr.bf16.mxu0 0
        %798 = vmatpush1.bf16.msra.mxu0 0
        %799 = vmatprep.subr.bf16.mxu0 0
        %800 = vmatpush1.bf16.msra.mxu0 0
        %801 = vmatprep.subr.bf16.mxu0 0
        %802 = vmatpush1.bf16.msra.mxu0 0
        %803 = vmatprep.subr.bf16.mxu0 0
        %804 = vmatpush1.bf16.msra.mxu0 0
        %805 = vmatprep.subr.bf16.mxu0 0
        %806 = vmatpush1.bf16.msra.mxu0 0
        %807 = vmatprep.subr.bf16.mxu0 0
        %808 = vmatpush1.bf16.msra.mxu0 0
        %809 = vmatprep.subr.bf16.mxu0 0
        %810 = vmatpush1.bf16.msra.mxu0 0
        %811 = vmatprep.subr.bf16.mxu0 0
        %812 = vmatpush1.bf16.msra.mxu0 0
        %813 = vmatprep.subr.bf16.mxu0 0
        %814 = vmatpush1.bf16.msra.mxu0 0
        %815 = vmatprep.subr.bf16.mxu0 0
        %816 = vmatpush1.bf16.msra.mxu0 0
        %817 = vmatprep.subr.bf16.mxu0 0
        %818 = vmatpush1.bf16.msra.mxu0 0
        %819 = vmatprep.subr.bf16.mxu0 0
        %820 = vmatpush1.bf16.msra.mxu0 0
        %821 = vmatprep.subr.bf16.mxu0 0
        %822 = vmatpush1.bf16.msra.mxu0 0
        %823 = vmatprep.mubr.bf16.mxu0 0
        %824 = vmatmul.mubr.bf16.gmra.mrb[0].mxu0 %v785
        %v825 = vpop.f32.mrb[0].mxu0
        %v826 = vadd.f32 0.0, %v825
        %v827 = vpop.f32.mrb[0].mxu0
        %v828 = vpop.f32.mrb[0].mxu0
        %v829 = vpop.f32.mrb[0].mxu0
        %830 = vdwg.mxu0
        %831 = vrot.lane.b32.xlu0 %v657, 64
        %v832 = vpop.permute.xlu0 %831
        %v834 = vsel %vm757, %v781, 0
        %v837 = vsel %vm787, %v832, 0
        %839 = vmatprep.subr.bf16.mxu0 0
        %840 = vmatpush1.bf16.msra.mxu0 %v837
        %841 = vmatprep.subr.bf16.mxu0 0
        %842 = vmatpush1.bf16.msra.mxu0 0
        %843 = vmatprep.subr.bf16.mxu0 0
        %844 = vmatpush1.bf16.msra.mxu0 0
        %845 = vmatprep.subr.bf16.mxu0 0
        %846 = vmatpush1.bf16.msra.mxu0 0
        %847 = vmatprep.subr.bf16.mxu0 0
        %848 = vmatpush1.bf16.msra.mxu0 0
        %849 = vmatprep.subr.bf16.mxu0 0
        %850 = vmatpush1.bf16.msra.mxu0 0
        %851 = vmatprep.subr.bf16.mxu0 0
        %852 = vmatpush1.bf16.msra.mxu0 0
        %853 = vmatprep.subr.bf16.mxu0 0
        %854 = vmatpush1.bf16.msra.mxu0 0
        %855 = vmatprep.subr.bf16.mxu0 0
        %856 = vmatpush1.bf16.msra.mxu0 0
        %857 = vmatprep.subr.bf16.mxu0 0
        %858 = vmatpush1.bf16.msra.mxu0 0
        %859 = vmatprep.subr.bf16.mxu0 0
        %860 = vmatpush1.bf16.msra.mxu0 0
        %861 = vmatprep.subr.bf16.mxu0 0
        %862 = vmatpush1.bf16.msra.mxu0 0
        %863 = vmatprep.subr.bf16.mxu0 0
        %864 = vmatpush1.bf16.msra.mxu0 0
        %865 = vmatprep.subr.bf16.mxu0 0
        %866 = vmatpush1.bf16.msra.mxu0 0
        %867 = vmatprep.subr.bf16.mxu0 0
        %868 = vmatpush1.bf16.msra.mxu0 0
        %869 = vmatprep.subr.bf16.mxu0 0
        %870 = vmatpush1.bf16.msra.mxu0 0
        %871 = vmatprep.mubr.bf16.mxu0 0
        %872 = vmatmul.mubr.bf16.gmra.mrb[0].mxu0 %v834
        %v873 = vpop.f32.mrb[0].mxu0
        %v874 = vadd.f32 0.0, %v873
        %v875 = vpop.f32.mrb[0].mxu0
        %v876 = vpop.f32.mrb[0].mxu0
        %v877 = vpop.f32.mrb[0].mxu0
        %878 = vdwg.mxu0
        %v879 = vpack.c.bf16 %v874, %v826
        %880 = vrot.lane.b32.xlu0 %v656, 112
        %v881 = vpop.permute.xlu0 %880
        %882 = vrot.lane.b32.xlu0 %v656, 80
        %v883 = vpop.permute.xlu0 %882
        %v885 = vsel %vm661, %v881, 0
        %v888 = vsel %vm661, %v883, 0
        %890 = vmatprep.subr.bf16.mxu0 0
        %891 = vmatpush1.bf16.xpose.msra.mxu0 %v888
        %892 = vmatprep.subr.bf16.mxu0 0
        %893 = vmatpush1.bf16.xpose.msra.mxu0 0
        %894 = vmatprep.subr.bf16.mxu0 0
        %895 = vmatpush1.bf16.xpose.msra.mxu0 0
        %896 = vmatprep.subr.bf16.mxu0 0
        %897 = vmatpush1.bf16.xpose.msra.mxu0 0
        %898 = vmatprep.subr.bf16.mxu0 0
        %899 = vmatpush1.bf16.xpose.msra.mxu0 0
        %900 = vmatprep.subr.bf16.mxu0 0
        %901 = vmatpush1.bf16.xpose.msra.mxu0 0
        %902 = vmatprep.subr.bf16.mxu0 0
        %903 = vmatpush1.bf16.xpose.msra.mxu0 0
        %904 = vmatprep.subr.bf16.mxu0 0
        %905 = vmatpush1.bf16.xpose.msra.mxu0 0
        %906 = vmatprep.subr.bf16.mxu0 0
        %907 = vmatpush1.bf16.xpose.msra.mxu0 0
        %908 = vmatprep.subr.bf16.mxu0 0
        %909 = vmatpush1.bf16.xpose.msra.mxu0 0
        %910 = vmatprep.subr.bf16.mxu0 0
        %911 = vmatpush1.bf16.xpose.msra.mxu0 0
        %912 = vmatprep.subr.bf16.mxu0 0
        %913 = vmatpush1.bf16.xpose.msra.mxu0 0
        %914 = vmatprep.subr.bf16.mxu0 0
        %915 = vmatpush1.bf16.xpose.msra.mxu0 0
        %916 = vmatprep.subr.bf16.mxu0 0
        %917 = vmatpush1.bf16.xpose.msra.mxu0 0
        %918 = vmatprep.subr.bf16.mxu0 0
        %919 = vmatpush1.bf16.xpose.msra.mxu0 0
        %920 = vmatprep.subr.bf16.mxu0 0
        %921 = vmatpush1.bf16.xpose.msra.mxu0 0
        %922 = vmatprep.mubr.bf16.mxu0 0
        %923 = vmatmul.mubr.bf16.gmra.mrb[0].mxu0 %v885
        %v924 = vpop.f32.mrb[0].mxu0
        %v925 = vadd.f32 %v520, %v924
        %v926 = vpop.f32.mrb[0].mxu0
        %v927 = vpop.f32.mrb[0].mxu0
        %v928 = vpop.f32.mrb[0].mxu0
        %929 = vdwg.mxu0
        %930 = vrot.lane.b32.xlu0 %v657, 112
        %v931 = vpop.permute.xlu0 %930
        %932 = vrot.lane.b32.xlu0 %v657, 80
        %v933 = vpop.permute.xlu0 %932
        %v935 = vsel %vm661, %v931, 0
        %v938 = vsel %vm661, %v933, 0
        %940 = vmatprep.subr.bf16.mxu0 0
        %941 = vmatpush1.bf16.xpose.msra.mxu0 %v938
        %942 = vmatprep.subr.bf16.mxu0 0
        %943 = vmatpush1.bf16.xpose.msra.mxu0 0
        %944 = vmatprep.subr.bf16.mxu0 0
        %945 = vmatpush1.bf16.xpose.msra.mxu0 0
        %946 = vmatprep.subr.bf16.mxu0 0
        %947 = vmatpush1.bf16.xpose.msra.mxu0 0
        %948 = vmatprep.subr.bf16.mxu0 0
        %949 = vmatpush1.bf16.xpose.msra.mxu0 0
        %950 = vmatprep.subr.bf16.mxu0 0
        %951 = vmatpush1.bf16.xpose.msra.mxu0 0
        %952 = vmatprep.subr.bf16.mxu0 0
        %953 = vmatpush1.bf16.xpose.msra.mxu0 0
        %954 = vmatprep.subr.bf16.mxu0 0
        %955 = vmatpush1.bf16.xpose.msra.mxu0 0
        %956 = vmatprep.subr.bf16.mxu0 0
        %957 = vmatpush1.bf16.xpose.msra.mxu0 0
        %958 = vmatprep.subr.bf16.mxu0 0
        %959 = vmatpush1.bf16.xpose.msra.mxu0 0
        %960 = vmatprep.subr.bf16.mxu0 0
        %961 = vmatpush1.bf16.xpose.msra.mxu0 0
        %962 = vmatprep.subr.bf16.mxu0 0
        %963 = vmatpush1.bf16.xpose.msra.mxu0 0
        %964 = vmatprep.subr.bf16.mxu0 0
        %965 = vmatpush1.bf16.xpose.msra.mxu0 0
        %966 = vmatprep.subr.bf16.mxu0 0
        %967 = vmatpush1.bf16.xpose.msra.mxu0 0
        %968 = vmatprep.subr.bf16.mxu0 0
        %969 = vmatpush1.bf16.xpose.msra.mxu0 0
        %970 = vmatprep.subr.bf16.mxu0 0
        %971 = vmatpush1.bf16.xpose.msra.mxu0 0
        %972 = vmatprep.mubr.bf16.mxu0 0
        %973 = vmatmul.mubr.bf16.gmra.mrb[0].mxu0 %v935
        %v974 = vpop.f32.mrb[0].mxu0
        %v975 = vadd.f32 %v520, %v974
        %v976 = vpop.f32.mrb[0].mxu0
        %v977 = vpop.f32.mrb[0].mxu0
        %v978 = vpop.f32.mrb[0].mxu0
        %979 = vdwg.mxu0
        %v980 = vsel %vm757, %v925, -inf
        %981 = vmax.xlane.f32.xlu0 %v980
        %v982 = vpop.xlane.xlu0 %981
        %v983 = vsel %vm757, %v975, -inf
        %984 = vmax.xlane.f32.xlu0 %v983
        %v985 = vpop.xlane.xlu0 %984
        %v986 = vsub.f32 %v925, %v982
        %v987 = vsub.f32 %v975, %v985
        %v988 = vmul.f32 %v986, 1.442695
        %v989 = vpow.pop %v988
        %v990 = vmul.f32 %v987, 1.442695
        %v991 = vpow.pop %v990
        %v992 = vsel %vm757, %v989, 0.0
        %993 = vadd.xlane.f32.xlu0 %v992
        %v994 = vpop.xlane.xlu0 %993
        %v995 = vsel %vm757, %v991, 0.0
        %996 = vadd.xlane.f32.xlu0 %v995
        %v997 = vpop.xlane.xlu0 %996
        %v998 = vrcp.pop %v994
        %v999 = vrcp.pop %v997
        %v1000 = vmul.f32 %v989, %v998
        %v1001 = vmul.f32 %v991, %v999
        %v1002 = vpack.c.bf16 %v1000, %v1000
        %v1003 = vpack.c.bf16 %v1001, %v1001
        %1004 = vrot.lane.b32.xlu0 %v656, 48
        %v1005 = vpop.permute.xlu0 %1004
        %v1007 = vsel %vm757, %v1002, 0
        %v1010 = vsel %vm787, %v1005, 0
        %1012 = vmatprep.subr.bf16.mxu0 0
        %1013 = vmatpush1.bf16.msra.mxu0 %v1010
        %1014 = vmatprep.subr.bf16.mxu0 0
        %1015 = vmatpush1.bf16.msra.mxu0 0
        %1016 = vmatprep.subr.bf16.mxu0 0
        %1017 = vmatpush1.bf16.msra.mxu0 0
        %1018 = vmatprep.subr.bf16.mxu0 0
        %1019 = vmatpush1.bf16.msra.mxu0 0
        %1020 = vmatprep.subr.bf16.mxu0 0
        %1021 = vmatpush1.bf16.msra.mxu0 0
        %1022 = vmatprep.subr.bf16.mxu0 0
        %1023 = vmatpush1.bf16.msra.mxu0 0
        %1024 = vmatprep.subr.bf16.mxu0 0
        %1025 = vmatpush1.bf16.msra.mxu0 0
        %1026 = vmatprep.subr.bf16.mxu0 0
        %1027 = vmatpush1.bf16.msra.mxu0 0
        %1028 = vmatprep.subr.bf16.mxu0 0
        %1029 = vmatpush1.bf16.msra.mxu0 0
        %1030 = vmatprep.subr.bf16.mxu0 0
        %1031 = vmatpush1.bf16.msra.mxu0 0
        %1032 = vmatprep.subr.bf16.mxu0 0
        %1033 = vmatpush1.bf16.msra.mxu0 0
        %1034 = vmatprep.subr.bf16.mxu0 0
        %1035 = vmatpush1.bf16.msra.mxu0 0
        %1036 = vmatprep.subr.bf16.mxu0 0
        %1037 = vmatpush1.bf16.msra.mxu0 0
        %1038 = vmatprep.subr.bf16.mxu0 0
        %1039 = vmatpush1.bf16.msra.mxu0 0
        %1040 = vmatprep.subr.bf16.mxu0 0
        %1041 = vmatpush1.bf16.msra.mxu0 0
        %1042 = vmatprep.subr.bf16.mxu0 0
        %1043 = vmatpush1.bf16.msra.mxu0 0
        %1044 = vmatprep.mubr.bf16.mxu0 0
        %1045 = vmatmul.mubr.bf16.gmra.mrb[0].mxu0 %v1007
        %v1046 = vpop.f32.mrb[0].mxu0
        %v1047 = vadd.f32 0.0, %v1046
        %v1048 = vpop.f32.mrb[0].mxu0
        %v1049 = vpop.f32.mrb[0].mxu0
        %v1050 = vpop.f32.mrb[0].mxu0
        %1051 = vdwg.mxu0
        %1052 = vrot.lane.b32.xlu0 %v657, 48
        %v1053 = vpop.permute.xlu0 %1052
        %v1055 = vsel %vm757, %v1003, 0
        %v1058 = vsel %vm787, %v1053, 0
        %1060 = vmatprep.subr.bf16.mxu0 0
        %1061 = vmatpush1.bf16.msra.mxu0 %v1058
        %1062 = vmatprep.subr.bf16.mxu0 0
        %1063 = vmatpush1.bf16.msra.mxu0 0
        %1064 = vmatprep.subr.bf16.mxu0 0
        %1065 = vmatpush1.bf16.msra.mxu0 0
        %1066 = vmatprep.subr.bf16.mxu0 0
        %1067 = vmatpush1.bf16.msra.mxu0 0
        %1068 = vmatprep.subr.bf16.mxu0 0
        %1069 = vmatpush1.bf16.msra.mxu0 0
        %1070 = vmatprep.subr.bf16.mxu0 0
        %1071 = vmatpush1.bf16.msra.mxu0 0
        %1072 = vmatprep.subr.bf16.mxu0 0
        %1073 = vmatpush1.bf16.msra.mxu0 0
        %1074 = vmatprep.subr.bf16.mxu0 0
        %1075 = vmatpush1.bf16.msra.mxu0 0
        %1076 = vmatprep.subr.bf16.mxu0 0
        %1077 = vmatpush1.bf16.msra.mxu0 0
        %1078 = vmatprep.subr.bf16.mxu0 0
        %1079 = vmatpush1.bf16.msra.mxu0 0
        %1080 = vmatprep.subr.bf16.mxu0 0
        %1081 = vmatpush1.bf16.msra.mxu0 0
        %1082 = vmatprep.subr.bf16.mxu0 0
        %1083 = vmatpush1.bf16.msra.mxu0 0
        %1084 = vmatprep.subr.bf16.mxu0 0
        %1085 = vmatpush1.bf16.msra.mxu0 0
        %1086 = vmatprep.subr.bf16.mxu0 0
        %1087 = vmatpush1.bf16.msra.mxu0 0
        %1088 = vmatprep.subr.bf16.mxu0 0
        %1089 = vmatpush1.bf16.msra.mxu0 0
        %1090 = vmatprep.subr.bf16.mxu0 0
        %1091 = vmatpush1.bf16.msra.mxu0 0
        %1092 = vmatprep.mubr.bf16.mxu0 0
        %1093 = vmatmul.mubr.bf16.gmra.mrb[0].mxu0 %v1055
        %v1094 = vpop.f32.mrb[0].mxu0
        %v1095 = vadd.f32 0.0, %v1094
        %v1096 = vpop.f32.mrb[0].mxu0
        %v1097 = vpop.f32.mrb[0].mxu0
        %v1098 = vpop.f32.mrb[0].mxu0
        %1099 = vdwg.mxu0
        %v1100 = vpack.c.bf16 %v1095, %v1047
        %v1103 = vunpack.c.l.b16 %v539
        %v1104 = vunpack.c.l.b16 %v540
        %v1105 = vpack.c.b16 %v1104, %v1103
        %v1108 = vsel %vm661, %v1100, 0
        %1110 = vmatprep.subr.bf16.mxu0 0
        %1111 = vmatpush1.bf16.msra.mxu0 %v1105
        %1112 = vmatprep.subr.bf16.mxu0 0
        %1113 = vmatpush1.bf16.msra.mxu0 0
        %1114 = vmatprep.subr.bf16.mxu0 0
        %1115 = vmatpush1.bf16.msra.mxu0 0
        %1116 = vmatprep.subr.bf16.mxu0 0
        %1117 = vmatpush1.bf16.msra.mxu0 0
        %1118 = vmatprep.subr.bf16.mxu0 0
        %1119 = vmatpush1.bf16.msra.mxu0 0
        %1120 = vmatprep.subr.bf16.mxu0 0
        %1121 = vmatpush1.bf16.msra.mxu0 0
        %1122 = vmatprep.subr.bf16.mxu0 0
        %1123 = vmatpush1.bf16.msra.mxu0 0
        %1124 = vmatprep.subr.bf16.mxu0 0
        %1125 = vmatpush1.bf16.msra.mxu0 0
        %1126 = vmatprep.subr.bf16.mxu0 0
        %1127 = vmatpush1.bf16.msra.mxu0 0
        %1128 = vmatprep.subr.bf16.mxu0 0
        %1129 = vmatpush1.bf16.msra.mxu0 0
        %1130 = vmatprep.subr.bf16.mxu0 0
        %1131 = vmatpush1.bf16.msra.mxu0 0
        %1132 = vmatprep.subr.bf16.mxu0 0
        %1133 = vmatpush1.bf16.msra.mxu0 0
        %1134 = vmatprep.subr.bf16.mxu0 0
        %1135 = vmatpush1.bf16.msra.mxu0 0
        %1136 = vmatprep.subr.bf16.mxu0 0
        %1137 = vmatpush1.bf16.msra.mxu0 0
        %1138 = vmatprep.subr.bf16.mxu0 0
        %1139 = vmatpush1.bf16.msra.mxu0 0
        %1140 = vmatprep.subr.bf16.mxu0 0
        %1141 = vmatpush1.bf16.msra.mxu0 0
        %1142 = vmatprep.mubr.bf16.mxu0 0
        %1143 = vmatmul.mubr.bf16.gmra.mrb[0].mxu0 %v1108
        %v1144 = vpop.f32.mrb[0].mxu0
        %v1145 = vadd.f32 0.0, %v1144
        %v1146 = vpop.f32.mrb[0].mxu0
        %v1147 = vpop.f32.mrb[0].mxu0
        %v1148 = vadd.f32 0.0, %v1147
        %v1149 = vpop.f32.mrb[0].mxu0
        %1150 = vdwg.mxu0
        %v1153 = vunpack.c.l.b16 %v537
        %v1154 = vunpack.c.l.b16 %v538
        %v1155 = vpack.c.b16 %v1154, %v1153
        %v1158 = vsel %vm661, %v879, 0
        %1160 = vmatprep.subr.bf16.mxu0 0
        %1161 = vmatpush1.bf16.msra.mxu0 %v1155
        %1162 = vmatprep.subr.bf16.mxu0 0
        %1163 = vmatpush1.bf16.msra.mxu0 0
        %1164 = vmatprep.subr.bf16.mxu0 0
        %1165 = vmatpush1.bf16.msra.mxu0 0
        %1166 = vmatprep.subr.bf16.mxu0 0
        %1167 = vmatpush1.bf16.msra.mxu0 0
        %1168 = vmatprep.subr.bf16.mxu0 0
        %1169 = vmatpush1.bf16.msra.mxu0 0
        %1170 = vmatprep.subr.bf16.mxu0 0
        %1171 = vmatpush1.bf16.msra.mxu0 0
        %1172 = vmatprep.subr.bf16.mxu0 0
        %1173 = vmatpush1.bf16.msra.mxu0 0
        %1174 = vmatprep.subr.bf16.mxu0 0
        %1175 = vmatpush1.bf16.msra.mxu0 0
        %1176 = vmatprep.subr.bf16.mxu0 0
        %1177 = vmatpush1.bf16.msra.mxu0 0
        %1178 = vmatprep.subr.bf16.mxu0 0
        %1179 = vmatpush1.bf16.msra.mxu0 0
        %1180 = vmatprep.subr.bf16.mxu0 0
        %1181 = vmatpush1.bf16.msra.mxu0 0
        %1182 = vmatprep.subr.bf16.mxu0 0
        %1183 = vmatpush1.bf16.msra.mxu0 0
        %1184 = vmatprep.subr.bf16.mxu0 0
        %1185 = vmatpush1.bf16.msra.mxu0 0
        %1186 = vmatprep.subr.bf16.mxu0 0
        %1187 = vmatpush1.bf16.msra.mxu0 0
        %1188 = vmatprep.subr.bf16.mxu0 0
        %1189 = vmatpush1.bf16.msra.mxu0 0
        %1190 = vmatprep.subr.bf16.mxu0 0
        %1191 = vmatpush1.bf16.msra.mxu0 0
        %1192 = vmatprep.mubr.bf16.mxu0 0
        %1193 = vmatmul.mubr.bf16.gmra.mrb[0].mxu0 %v1158
        %v1194 = vpop.f32.mrb[0].mxu0
        %v1195 = vadd.f32 %v1145, %v1194
        %v1196 = vpop.f32.mrb[0].mxu0
        %v1197 = vpop.f32.mrb[0].mxu0
        %v1198 = vadd.f32 %v1148, %v1197
        %v1199 = vpop.f32.mrb[0].mxu0
        %1200 = vdwg.mxu0
        %v1201 = vadd.f32 %v515, %v1195
        %v1202 = vadd.f32 %v516, %v1198
        %v1203 = vlaneseq
        %v1204 = vshrl.u32 %v1203, 7
        %v1205 = vsub.s32 0, %v1204
        %v1206 = vrot.slane %v524, %v1205
        %v1207 = vadd.f32 %v1201, %v1206
        %v1208 = vadd.f32 %v1202, %v1206
        %v1209 = vsel %vm477, %v1207, 0.0
        %1210 = vadd.xlane.f32.xlu0 %v1209
        %v1211 = vpop.xlane.xlu0 %1210
        %v1212 = vsel %vm477, %v1208, 0.0
        %1213 = vadd.xlane.f32.xlu0 %v1212
        %v1214 = vpop.xlane.xlu0 %1213
        %v1215 = vmul.f32 %v1211, %v484
        %v1216 = vmul.f32 %v1214, %v484
        %v1217 = vsub.f32 %v1207, %v1215
        %v1218 = vsub.f32 %v1208, %v1216
        %v1219 = vmul.f32 %v1217, %v1217
        %v1220 = vmul.f32 %v1218, %v1218
        %v1221 = vsel %vm477, %v1219, 0.0
        %1222 = vadd.xlane.f32.xlu0 %v1221
        %v1223 = vpop.xlane.xlu0 %1222
        %v1224 = vsel %vm477, %v1220, 0.0
        %1225 = vadd.xlane.f32.xlu0 %v1224
        %v1226 = vpop.xlane.xlu0 %1225
        %v1227 = vmul.f32 %v1223, %v484
        %v1228 = vmul.f32 %v1226, %v484
        %v1229 = vadd.f32 %v1227, 1e-05
        %v1230 = vadd.f32 %v1228, 1e-05
        %v1231 = vrsqrt.pop %v1229
        %v1232 = vrsqrt.pop %v1230
        %v1233 = vmul.f32 %v1217, %v1231
        %v1234 = vmul.f32 %v1218, %v1232
        %v1235 = vlaneseq
        %v1236 = vshrl.u32 %v1235, 7
        %v1237 = vsub.s32 0, %v1236
        %v1238 = vrot.slane %v525, %v1237
        %v1239 = vmul.f32 %v1233, %v1238
        %v1240 = vmul.f32 %v1234, %v1238
        %v1241 = vlaneseq
        %v1242 = vshrl.u32 %v1241, 7
        %v1243 = vsub.s32 0, %v1242
        %v1244 = vrot.slane %v526, %v1243
        %v1245 = vadd.f32 %v1239, %v1244
        %v1246 = vadd.f32 %v1240, %v1244
        %v1247 = vpack.c.bf16 %v1246, %v1245
        %v1248 = vlaneseq
        %v1249 = vshrl.u32 %v1248, 7
        %v1250 = vsub.s32 0, %v1249
        %v1251 = vrot.slane %v527, %v1250
        %v1256 = vunpack.c.l.b16 %v533
        %v1257 = vunpack.c.l.b16 %v534
        %v1258 = vunpack.c.l.b16 %v535
        %v1259 = vunpack.c.l.b16 %v536
        %v1260 = vpack.c.b16 %v1257, %v1256
        %v1261 = vpack.c.b16 %v1259, %v1258
        %v1265 = vsel %vm477, %v1247, 0
        %1267 = vmatprep.subr.bf16.mxu0 0
        %1268 = vmatpush1.bf16.msra.mxu0 %v1260
        %1269 = vmatprep.subr.bf16.mxu0 0
        %1270 = vmatpush1.bf16.msra.mxu0 %v1261
        %1271 = vmatprep.subr.bf16.mxu0 0
        %1272 = vmatpush1.bf16.msra.mxu0 0
        %1273 = vmatprep.subr.bf16.mxu0 0
        %1274 = vmatpush1.bf16.msra.mxu0 0
        %1275 = vmatprep.subr.bf16.mxu0 0
        %1276 = vmatpush1.bf16.msra.mxu0 0
        %1277 = vmatprep.subr.bf16.mxu0 0
        %1278 = vmatpush1.bf16.msra.mxu0 0
        %1279 = vmatprep.subr.bf16.mxu0 0
        %1280 = vmatpush1.bf16.msra.mxu0 0
        %1281 = vmatprep.subr.bf16.mxu0 0
        %1282 = vmatpush1.bf16.msra.mxu0 0
        %1283 = vmatprep.subr.bf16.mxu0 0
        %1284 = vmatpush1.bf16.msra.mxu0 0
        %1285 = vmatprep.subr.bf16.mxu0 0
        %1286 = vmatpush1.bf16.msra.mxu0 0
        %1287 = vmatprep.subr.bf16.mxu0 0
        %1288 = vmatpush1.bf16.msra.mxu0 0
        %1289 = vmatprep.subr.bf16.mxu0 0
        %1290 = vmatpush1.bf16.msra.mxu0 0
        %1291 = vmatprep.subr.bf16.mxu0 0
        %1292 = vmatpush1.bf16.msra.mxu0 0
        %1293 = vmatprep.subr.bf16.mxu0 0
        %1294 = vmatpush1.bf16.msra.mxu0 0
        %1295 = vmatprep.subr.bf16.mxu0 0
        %1296 = vmatpush1.bf16.msra.mxu0 0
        %1297 = vmatprep.subr.bf16.mxu0 0
        %1298 = vmatpush1.bf16.msra.mxu0 0
        %1299 = vmatprep.mubr.bf16.mxu0 0
        %1300 = vmatmul.mubr.bf16.gmra.mrb[0].mxu0 %v1265
        %v1301 = vpop.f32.mrb[0].mxu0
        %v1302 = vadd.f32 %v1251, %v1301
        %v1303 = vpop.f32.mrb[0].mxu0
        %v1304 = vpop.f32.mrb[0].mxu0
        %v1305 = vadd.f32 %v1251, %v1304
        %v1306 = vpop.f32.mrb[0].mxu0
        %1307 = vdwg.mxu0
        %v1308 = vmul.f32 %v1302, %v1302
        %v1309 = vmul.f32 %v1305, %v1305
        %v1310 = vmul.f32 %v1302, %v1308
        %v1311 = vmul.f32 %v1305, %v1309
        %v1312 = vmul.f32 %v1310, 0.044715
        %v1313 = vmul.f32 %v1311, 0.044715
        %v1314 = vadd.f32 %v1302, %v1312
        %v1315 = vadd.f32 %v1305, %v1313
        %v1316 = vmul.f32 %v1314, 0.7978846
        %v1317 = vmul.f32 %v1315, 0.7978846
        %v1318 = vtanh.pop %v1316
        %v1319 = vtanh.pop %v1317
        %v1320 = vadd.f32 %v1318, 1.0
        %v1321 = vadd.f32 %v1319, 1.0
        %v1322 = vmul.f32 %v1320, 0.5
        %v1323 = vmul.f32 %v1321, 0.5
        %v1324 = vmul.f32 %v1302, %v1322
        %v1325 = vmul.f32 %v1305, %v1323
        %v1326 = vpack.c.bf16 %v1325, %v1324
        %v1327 = vlaneseq
        %v1328 = vshrl.u32 %v1327, 7
        %v1329 = vsub.s32 0, %v1328
        %v1330 = vrot.slane %v528, %v1329
        %v1347 = vunpack.c.l.b16 %v541
        %v1348 = vunpack.c.l.b16 %v542
        %v1349 = vunpack.c.l.b16 %v543
        %v1350 = vunpack.c.l.b16 %v544
        %v1351 = vunpack.c.l.b16 %v545
        %v1352 = vunpack.c.l.b16 %v546
        %v1353 = vunpack.c.l.b16 %v547
        %v1354 = vunpack.c.l.b16 %v548
        %v1355 = vunpack.c.l.b16 %v549
        %v1356 = vunpack.c.l.b16 %v550
        %v1357 = vunpack.c.l.b16 %v551
        %v1358 = vunpack.c.l.b16 %v552
        %v1359 = vunpack.c.l.b16 %v553
        %v1360 = vunpack.c.l.b16 %v554
        %v1361 = vunpack.c.l.b16 %v555
        %v1362 = vunpack.c.l.b16 %v556
        %v1363 = vpack.c.b16 %v1348, %v1347
        %v1364 = vpack.c.b16 %v1350, %v1349
        %v1365 = vpack.c.b16 %v1352, %v1351
        %v1366 = vpack.c.b16 %v1354, %v1353
        %v1367 = vpack.c.b16 %v1356, %v1355
        %v1368 = vpack.c.b16 %v1358, %v1357
        %v1369 = vpack.c.b16 %v1360, %v1359
        %v1370 = vpack.c.b16 %v1362, %v1361
        %1379 = vmatprep.subr.bf16.mxu0 0
        %1380 = vmatpush1.bf16.msra.mxu0 %v1363
        %1381 = vmatprep.subr.bf16.mxu0 0
        %1382 = vmatpush1.bf16.msra.mxu0 %v1364
        %1383 = vmatprep.subr.bf16.mxu0 0
        %1384 = vmatpush1.bf16.msra.mxu0 %v1365
        %1385 = vmatprep.subr.bf16.mxu0 0
        %1386 = vmatpush1.bf16.msra.mxu0 %v1366
        %1387 = vmatprep.subr.bf16.mxu0 0
        %1388 = vmatpush1.bf16.msra.mxu0 %v1367
        %1389 = vmatprep.subr.bf16.mxu0 0
        %1390 = vmatpush1.bf16.msra.mxu0 %v1368
        %1391 = vmatprep.subr.bf16.mxu0 0
        %1392 = vmatpush1.bf16.msra.mxu0 %v1369
        %1393 = vmatprep.subr.bf16.mxu0 0
        %1394 = vmatpush1.bf16.msra.mxu0 %v1370
        %1395 = vmatprep.subr.bf16.mxu0 0
        %1396 = vmatpush1.bf16.msra.mxu0 0
        %1397 = vmatprep.subr.bf16.mxu0 0
        %1398 = vmatpush1.bf16.msra.mxu0 0
        %1399 = vmatprep.subr.bf16.mxu0 0
        %1400 = vmatpush1.bf16.msra.mxu0 0
        %1401 = vmatprep.subr.bf16.mxu0 0
        %1402 = vmatpush1.bf16.msra.mxu0 0
        %1403 = vmatprep.subr.bf16.mxu0 0
        %1404 = vmatpush1.bf16.msra.mxu0 0
        %1405 = vmatprep.subr.bf16.mxu0 0
        %1406 = vmatpush1.bf16.msra.mxu0 0
        %1407 = vmatprep.subr.bf16.mxu0 0
        %1408 = vmatpush1.bf16.msra.mxu0 0
        %1409 = vmatprep.subr.bf16.mxu0 0
        %1410 = vmatpush1.bf16.msra.mxu0 0
        %1411 = vmatprep.mubr.bf16.mxu0 0
        %1412 = vmatmul.mubr.bf16.gmra.mrb[0].mxu0 %v1326
        %v1413 = vpop.f32.mrb[0].mxu0
        %v1414 = vadd.f32 %v1330, %v1413
        %v1415 = vpop.f32.mrb[0].mxu0
        %v1416 = vpop.f32.mrb[0].mxu0
        %v1417 = vadd.f32 %v1330, %v1416
        %v1418 = vpop.f32.mrb[0].mxu0
        %1419 = vdwg.mxu0
        %v1420 = vadd.f32 %v1207, %v1414
        %v1421 = vadd.f32 %v1208, %v1417
        %v1422 = vld [vmem:[%s4 + $0x1c] sm:$0x1]
        %v1423 = vld [vmem:[%s4 + $0x1d] sm:$0x1]
        %v1424 = vld [vmem:[%s4 + $0x1e] sm:$0x1]
        %v1425 = vld [vmem:[%s4 + $0x1f] sm:$0x1]
        %v1426 = vld [vmem:[%s4 + $0x20] sm:$0x1]
        %v1427 = vld [vmem:[%s4 + $0x21] sm:$0x1]
        %v1428 = vld [vmem:[%s4 + $0x22] sm:$0x1]
        %v1429 = vld [vmem:[%s4 + $0x23] sm:$0x1]
        %s1430 = scalar_lea.vmem %s6, 48
        %v1431 = vld [vmem:[%s1430] sm:$0xf]
        %v1432 = vld [vmem:[%s1430 + $0xc] sm:$0xf]
        %v1433 = vld [vmem:[%s1430 + $0x18] sm:$0xf]
        %v1434 = vld [vmem:[%s1430 + $0x24] sm:$0xf]
        %v1435 = vld [vmem:[%s1430 + $0x4] sm:$0xf]
        %v1436 = vld [vmem:[%s1430 + $0x10] sm:$0xf]
        %v1437 = vld [vmem:[%s1430 + $0x1c] sm:$0xf]
        %v1438 = vld [vmem:[%s1430 + $0x28] sm:$0xf]
        %v1439 = vld [vmem:[%s1430 + $0x8] sm:$0xf]
        %v1440 = vld [vmem:[%s1430 + $0x14] sm:$0xf]
        %v1441 = vld [vmem:[%s1430 + $0x20] sm:$0xf]
        %v1442 = vld [vmem:[%s1430 + $0x2c] sm:$0xf]
        %s1443 = scalar_lea.vmem %s7, 64
        %v1444 = vld [vmem:[%s1443] sm:$0xf]
        %v1445 = vld [vmem:[%s1443 + $0x4] sm:$0xf]
        %v1446 = vld [vmem:[%s1443 + $0x8] sm:$0xf]
        %v1447 = vld [vmem:[%s1443 + $0xc] sm:$0xf]
        %v1448 = vld [vmem:[%s1443 + $0x10] sm:$0xf]
        %v1449 = vld [vmem:[%s1443 + $0x14] sm:$0xf]
        %v1450 = vld [vmem:[%s1443 + $0x18] sm:$0xf]
        %v1451 = vld [vmem:[%s1443 + $0x1c] sm:$0xf]
        %v1452 = vld [vmem:[%s1443 + $0x20] sm:$0xf]
        %v1453 = vld [vmem:[%s1443 + $0x24] sm:$0xf]
        %v1454 = vld [vmem:[%s1443 + $0x28] sm:$0xf]
        %v1455 = vld [vmem:[%s1443 + $0x2c] sm:$0xf]
        %v1456 = vld [vmem:[%s1443 + $0x30] sm:$0xf]
        %v1457 = vld [vmem:[%s1443 + $0x34] sm:$0xf]
        %v1458 = vld [vmem:[%s1443 + $0x38] sm:$0xf]
        %v1459 = vld [vmem:[%s1443 + $0x3c] sm:$0xf]
        %v1460 = vsel %vm477, %v1420, 0.0
        %1461 = vadd.xlane.f32.xlu0 %v1460
        %v1462 = vpop.xlane.xlu0 %1461
        %v1463 = vsel %vm477, %v1421, 0.0
        %1464 = vadd.xlane.f32.xlu0 %v1463
        %v1465 = vpop.xlane.xlu0 %1464
        %v1466 = vmul.f32 %v1462, %v484
        %v1467 = vmul.f32 %v1465, %v484
        %v1468 = vsub.f32 %v1420, %v1466
        %v1469 = vsub.f32 %v1421, %v1467
        %v1470 = vmul.f32 %v1468, %v1468
        %v1471 = vmul.f32 %v1469, %v1469
        %v1472 = vsel %vm477, %v1470, 0.0
        %1473 = vadd.xlane.f32.xlu0 %v1472
        %v1474 = vpop.xlane.xlu0 %1473
        %v1475 = vsel %vm477, %v1471, 0.0
        %1476 = vadd.xlane.f32.xlu0 %v1475
        %v1477 = vpop.xlane.xlu0 %1476
        %v1478 = vmul.f32 %v1474, %v484
        %v1479 = vmul.f32 %v1477, %v484
        %v1480 = vadd.f32 %v1478, 1e-05
        %v1481 = vadd.f32 %v1479, 1e-05
        %v1482 = vrsqrt.pop %v1480
        %v1483 = vrsqrt.pop %v1481
        %v1484 = vmul.f32 %v1468, %v1482
        %v1485 = vmul.f32 %v1469, %v1483
        %v1486 = vlaneseq
        %v1487 = vshrl.u32 %v1486, 7
        %v1488 = vsub.s32 0, %v1487
        %v1489 = vrot.slane %v1422, %v1488
        %v1490 = vmul.f32 %v1484, %v1489
        %v1491 = vmul.f32 %v1485, %v1489
        %v1492 = vlaneseq
        %v1493 = vshrl.u32 %v1492, 7
        %v1494 = vsub.s32 0, %v1493
        %v1495 = vrot.slane %v1423, %v1494
        %v1496 = vadd.f32 %v1490, %v1495
        %v1497 = vadd.f32 %v1491, %v1495
        %v1498 = vpack.c.bf16 %v1497, %v1496
        %v1499 = vlaneseq
        %v1500 = vshrl.u32 %v1499, 7
        %v1501 = vsub.s32 0, %v1500
        %v1502 = vrot.slane %v1424, %v1501
        %v1507 = vunpack.c.l.b16 %v1431
        %v1508 = vunpack.c.l.b16 %v1432
        %v1509 = vunpack.c.l.b16 %v1433
        %v1510 = vunpack.c.l.b16 %v1434
        %v1511 = vpack.c.b16 %v1508, %v1507
        %v1512 = vpack.c.b16 %v1510, %v1509
        %v1516 = vsel %vm477, %v1498, 0
        %1518 = vmatprep.subr.bf16.mxu0 0
        %1519 = vmatpush1.bf16.msra.mxu0 %v1511
        %1520 = vmatprep.subr.bf16.mxu0 0
        %1521 = vmatpush1.bf16.msra.mxu0 %v1512
        %1522 = vmatprep.subr.bf16.mxu0 0
        %1523 = vmatpush1.bf16.msra.mxu0 0
        %1524 = vmatprep.subr.bf16.mxu0 0
        %1525 = vmatpush1.bf16.msra.mxu0 0
        %1526 = vmatprep.subr.bf16.mxu0 0
        %1527 = vmatpush1.bf16.msra.mxu0 0
        %1528 = vmatprep.subr.bf16.mxu0 0
        %1529 = vmatpush1.bf16.msra.mxu0 0
        %1530 = vmatprep.subr.bf16.mxu0 0
        %1531 = vmatpush1.bf16.msra.mxu0 0
        %1532 = vmatprep.subr.bf16.mxu0 0
        %1533 = vmatpush1.bf16.msra.mxu0 0
        %1534 = vmatprep.subr.bf16.mxu0 0
        %1535 = vmatpush1.bf16.msra.mxu0 0
        %1536 = vmatprep.subr.bf16.mxu0 0
        %1537 = vmatpush1.bf16.msra.mxu0 0
        %1538 = vmatprep.subr.bf16.mxu0 0
        %1539 = vmatpush1.bf16.msra.mxu0 0
        %1540 = vmatprep.subr.bf16.mxu0 0
        %1541 = vmatpush1.bf16.msra.mxu0 0
        %1542 = vmatprep.subr.bf16.mxu0 0
        %1543 = vmatpush1.bf16.msra.mxu0 0
        %1544 = vmatprep.subr.bf16.mxu0 0
        %1545 = vmatpush1.bf16.msra.mxu0 0
        %1546 = vmatprep.subr.bf16.mxu0 0
        %1547 = vmatpush1.bf16.msra.mxu0 0
        %1548 = vmatprep.subr.bf16.mxu0 0
        %1549 = vmatpush1.bf16.msra.mxu0 0
        %1550 = vmatprep.mubr.bf16.mxu0 0
        %1551 = vmatmul.mubr.bf16.gmra.mrb[0].mxu0 %v1516
        %v1552 = vpop.f32.mrb[0].mxu0
        %v1553 = vadd.f32 %v1502, %v1552
        %v1554 = vpop.f32.mrb[0].mxu0
        %v1555 = vpop.f32.mrb[0].mxu0
        %v1556 = vadd.f32 %v1502, %v1555
        %v1557 = vpop.f32.mrb[0].mxu0
        %1558 = vdwg.mxu0
        %v1559 = vpack.c.bf16 %v1553, %v1553
        %v1560 = vpack.c.bf16 %v1556, %v1556
        %1562 = vrot.lane.b32.xlu0 %v1559, 96
        %v1563 = vpop.permute.xlu0 %1562
        %v1565 = vsel %vm661, %v1559, 0
        %v1568 = vsel %vm661, %v1563, 0
        %1570 = vmatprep.subr.bf16.mxu0 0
        %1571 = vmatpush1.bf16.xpose.msra.mxu0 %v1568
        %1572 = vmatprep.subr.bf16.mxu0 0
        %1573 = vmatpush1.bf16.xpose.msra.mxu0 0
        %1574 = vmatprep.subr.bf16.mxu0 0
        %1575 = vmatpush1.bf16.xpose.msra.mxu0 0
        %1576 = vmatprep.subr.bf16.mxu0 0
        %1577 = vmatpush1.bf16.xpose.msra.mxu0 0
        %1578 = vmatprep.subr.bf16.mxu0 0
        %1579 = vmatpush1.bf16.xpose.msra.mxu0 0
        %1580 = vmatprep.subr.bf16.mxu0 0
        %1581 = vmatpush1.bf16.xpose.msra.mxu0 0
        %1582 = vmatprep.subr.bf16.mxu0 0
        %1583 = vmatpush1.bf16.xpose.msra.mxu0 0
        %1584 = vmatprep.subr.bf16.mxu0 0
        %1585 = vmatpush1.bf16.xpose.msra.mxu0 0
        %1586 = vmatprep.subr.bf16.mxu0 0
        %1587 = vmatpush1.bf16.xpose.msra.mxu0 0
        %1588 = vmatprep.subr.bf16.mxu0 0
        %1589 = vmatpush1.bf16.xpose.msra.mxu0 0
        %1590 = vmatprep.subr.bf16.mxu0 0
        %1591 = vmatpush1.bf16.xpose.msra.mxu0 0
        %1592 = vmatprep.subr.bf16.mxu0 0
        %1593 = vmatpush1.bf16.xpose.msra.mxu0 0
        %1594 = vmatprep.subr.bf16.mxu0 0
        %1595 = vmatpush1.bf16.xpose.msra.mxu0 0
        %1596 = vmatprep.subr.bf16.mxu0 0
        %1597 = vmatpush1.bf16.xpose.msra.mxu0 0
        %1598 = vmatprep.subr.bf16.mxu0 0
        %1599 = vmatpush1.bf16.xpose.msra.mxu0 0
        %1600 = vmatprep.subr.bf16.mxu0 0
        %1601 = vmatpush1.bf16.xpose.msra.mxu0 0
        %1602 = vmatprep.mubr.bf16.mxu0 0
        %1603 = vmatmul.mubr.bf16.gmra.mrb[0].mxu0 %v1565
        %v1604 = vpop.f32.mrb[0].mxu0
        %v1605 = vadd.f32 %v520, %v1604
        %v1606 = vpop.f32.mrb[0].mxu0
        %v1607 = vpop.f32.mrb[0].mxu0
        %v1608 = vpop.f32.mrb[0].mxu0
        %1609 = vdwg.mxu0
        %1611 = vrot.lane.b32.xlu0 %v1560, 96
        %v1612 = vpop.permute.xlu0 %1611
        %v1614 = vsel %vm661, %v1560, 0
        %v1617 = vsel %vm661, %v1612, 0
        %1619 = vmatprep.subr.bf16.mxu0 0
        %1620 = vmatpush1.bf16.xpose.msra.mxu0 %v1617
        %1621 = vmatprep.subr.bf16.mxu0 0
        %1622 = vmatpush1.bf16.xpose.msra.mxu0 0
        %1623 = vmatprep.subr.bf16.mxu0 0
        %1624 = vmatpush1.bf16.xpose.msra.mxu0 0
        %1625 = vmatprep.subr.bf16.mxu0 0
        %1626 = vmatpush1.bf16.xpose.msra.mxu0 0
        %1627 = vmatprep.subr.bf16.mxu0 0
        %1628 = vmatpush1.bf16.xpose.msra.mxu0 0
        %1629 = vmatprep.subr.bf16.mxu0 0
        %1630 = vmatpush1.bf16.xpose.msra.mxu0 0
        %1631 = vmatprep.subr.bf16.mxu0 0
        %1632 = vmatpush1.bf16.xpose.msra.mxu0 0
        %1633 = vmatprep.subr.bf16.mxu0 0
        %1634 = vmatpush1.bf16.xpose.msra.mxu0 0
        %1635 = vmatprep.subr.bf16.mxu0 0
        %1636 = vmatpush1.bf16.xpose.msra.mxu0 0
        %1637 = vmatprep.subr.bf16.mxu0 0
        %1638 = vmatpush1.bf16.xpose.msra.mxu0 0
        %1639 = vmatprep.subr.bf16.mxu0 0
        %1640 = vmatpush1.bf16.xpose.msra.mxu0 0
        %1641 = vmatprep.subr.bf16.mxu0 0
        %1642 = vmatpush1.bf16.xpose.msra.mxu0 0
        %1643 = vmatprep.subr.bf16.mxu0 0
        %1644 = vmatpush1.bf16.xpose.msra.mxu0 0
        %1645 = vmatprep.subr.bf16.mxu0 0
        %1646 = vmatpush1.bf16.xpose.msra.mxu0 0
        %1647 = vmatprep.subr.bf16.mxu0 0
        %1648 = vmatpush1.bf16.xpose.msra.mxu0 0
        %1649 = vmatprep.subr.bf16.mxu0 0
        %1650 = vmatpush1.bf16.xpose.msra.mxu0 0
        %1651 = vmatprep.mubr.bf16.mxu0 0
        %1652 = vmatmul.mubr.bf16.gmra.mrb[0].mxu0 %v1614
        %v1653 = vpop.f32.mrb[0].mxu0
        %v1654 = vadd.f32 %v520, %v1653
        %v1655 = vpop.f32.mrb[0].mxu0
        %v1656 = vpop.f32.mrb[0].mxu0
        %v1657 = vpop.f32.mrb[0].mxu0
        %1658 = vdwg.mxu0
        %v1659 = vsel %vm757, %v1605, -inf
        %1660 = vmax.xlane.f32.xlu0 %v1659
        %v1661 = vpop.xlane.xlu0 %1660
        %v1662 = vsel %vm757, %v1654, -inf
        %1663 = vmax.xlane.f32.xlu0 %v1662
        %v1664 = vpop.xlane.xlu0 %1663
        %v1665 = vsub.f32 %v1605, %v1661
        %v1666 = vsub.f32 %v1654, %v1664
        %v1667 = vmul.f32 %v1665, 1.442695
        %v1668 = vpow.pop %v1667
        %v1669 = vmul.f32 %v1666, 1.442695
        %v1670 = vpow.pop %v1669
        %v1671 = vsel %vm757, %v1668, 0.0
        %1672 = vadd.xlane.f32.xlu0 %v1671
        %v1673 = vpop.xlane.xlu0 %1672
        %v1674 = vsel %vm757, %v1670, 0.0
        %1675 = vadd.xlane.f32.xlu0 %v1674
        %v1676 = vpop.xlane.xlu0 %1675
        %v1677 = vrcp.pop %v1673
        %v1678 = vrcp.pop %v1676
        %v1679 = vmul.f32 %v1668, %v1677
        %v1680 = vmul.f32 %v1670, %v1678
        %v1681 = vpack.c.bf16 %v1679, %v1679
        %v1682 = vpack.c.bf16 %v1680, %v1680
        %1683 = vrot.lane.b32.xlu0 %v1559, 64
        %v1684 = vpop.permute.xlu0 %1683
        %v1686 = vsel %vm757, %v1681, 0
        %v1689 = vsel %vm787, %v1684, 0
        %1691 = vmatprep.subr.bf16.mxu0 0
        %1692 = vmatpush1.bf16.msra.mxu0 %v1689
        %1693 = vmatprep.subr.bf16.mxu0 0
        %1694 = vmatpush1.bf16.msra.mxu0 0
        %1695 = vmatprep.subr.bf16.mxu0 0
        %1696 = vmatpush1.bf16.msra.mxu0 0
        %1697 = vmatprep.subr.bf16.mxu0 0
        %1698 = vmatpush1.bf16.msra.mxu0 0
        %1699 = vmatprep.subr.bf16.mxu0 0
        %1700 = vmatpush1.bf16.msra.mxu0 0
        %1701 = vmatprep.subr.bf16.mxu0 0
        %1702 = vmatpush1.bf16.msra.mxu0 0
        %1703 = vmatprep.subr.bf16.mxu0 0
        %1704 = vmatpush1.bf16.msra.mxu0 0
        %1705 = vmatprep.subr.bf16.mxu0 0
        %1706 = vmatpush1.bf16.msra.mxu0 0
        %1707 = vmatprep.subr.bf16.mxu0 0
        %1708 = vmatpush1.bf16.msra.mxu0 0
        %1709 = vmatprep.subr.bf16.mxu0 0
        %1710 = vmatpush1.bf16.msra.mxu0 0
        %1711 = vmatprep.subr.bf16.mxu0 0
        %1712 = vmatpush1.bf16.msra.mxu0 0
        %1713 = vmatprep.subr.bf16.mxu0 0
        %1714 = vmatpush1.bf16.msra.mxu0 0
        %1715 = vmatprep.subr.bf16.mxu0 0
        %1716 = vmatpush1.bf16.msra.mxu0 0
        %1717 = vmatprep.subr.bf16.mxu0 0
        %1718 = vmatpush1.bf16.msra.mxu0 0
        %1719 = vmatprep.subr.bf16.mxu0 0
        %1720 = vmatpush1.bf16.msra.mxu0 0
        %1721 = vmatprep.subr.bf16.mxu0 0
        %1722 = vmatpush1.bf16.msra.mxu0 0
        %1723 = vmatprep.mubr.bf16.mxu0 0
        %1724 = vmatmul.mubr.bf16.gmra.mrb[0].mxu0 %v1686
        %v1725 = vpop.f32.mrb[0].mxu0
        %v1726 = vadd.f32 0.0, %v1725
        %v1727 = vpop.f32.mrb[0].mxu0
        %v1728 = vpop.f32.mrb[0].mxu0
        %v1729 = vpop.f32.mrb[0].mxu0
        %1730 = vdwg.mxu0
        %1731 = vrot.lane.b32.xlu0 %v1560, 64
        %v1732 = vpop.permute.xlu0 %1731
        %v1734 = vsel %vm757, %v1682, 0
        %v1737 = vsel %vm787, %v1732, 0
        %1739 = vmatprep.subr.bf16.mxu0 0
        %1740 = vmatpush1.bf16.msra.mxu0 %v1737
        %1741 = vmatprep.subr.bf16.mxu0 0
        %1742 = vmatpush1.bf16.msra.mxu0 0
        %1743 = vmatprep.subr.bf16.mxu0 0
        %1744 = vmatpush1.bf16.msra.mxu0 0
        %1745 = vmatprep.subr.bf16.mxu0 0
        %1746 = vmatpush1.bf16.msra.mxu0 0
        %1747 = vmatprep.subr.bf16.mxu0 0
        %1748 = vmatpush1.bf16.msra.mxu0 0
        %1749 = vmatprep.subr.bf16.mxu0 0
        %1750 = vmatpush1.bf16.msra.mxu0 0
        %1751 = vmatprep.subr.bf16.mxu0 0
        %1752 = vmatpush1.bf16.msra.mxu0 0
        %1753 = vmatprep.subr.bf16.mxu0 0
        %1754 = vmatpush1.bf16.msra.mxu0 0
        %1755 = vmatprep.subr.bf16.mxu0 0
        %1756 = vmatpush1.bf16.msra.mxu0 0
        %1757 = vmatprep.subr.bf16.mxu0 0
        %1758 = vmatpush1.bf16.msra.mxu0 0
        %1759 = vmatprep.subr.bf16.mxu0 0
        %1760 = vmatpush1.bf16.msra.mxu0 0
        %1761 = vmatprep.subr.bf16.mxu0 0
        %1762 = vmatpush1.bf16.msra.mxu0 0
        %1763 = vmatprep.subr.bf16.mxu0 0
        %1764 = vmatpush1.bf16.msra.mxu0 0
        %1765 = vmatprep.subr.bf16.mxu0 0
        %1766 = vmatpush1.bf16.msra.mxu0 0
        %1767 = vmatprep.subr.bf16.mxu0 0
        %1768 = vmatpush1.bf16.msra.mxu0 0
        %1769 = vmatprep.subr.bf16.mxu0 0
        %1770 = vmatpush1.bf16.msra.mxu0 0
        %1771 = vmatprep.mubr.bf16.mxu0 0
        %1772 = vmatmul.mubr.bf16.gmra.mrb[0].mxu0 %v1734
        %v1773 = vpop.f32.mrb[0].mxu0
        %v1774 = vadd.f32 0.0, %v1773
        %v1775 = vpop.f32.mrb[0].mxu0
        %v1776 = vpop.f32.mrb[0].mxu0
        %v1777 = vpop.f32.mrb[0].mxu0
        %1778 = vdwg.mxu0
        %v1779 = vpack.c.bf16 %v1774, %v1726
        %1780 = vrot.lane.b32.xlu0 %v1559, 112
        %v1781 = vpop.permute.xlu0 %1780
        %1782 = vrot.lane.b32.xlu0 %v1559, 80
        %v1783 = vpop.permute.xlu0 %1782
        %v1785 = vsel %vm661, %v1781, 0
        %v1788 = vsel %vm661, %v1783, 0
        %1790 = vmatprep.subr.bf16.mxu0 0
        %1791 = vmatpush1.bf16.xpose.msra.mxu0 %v1788
        %1792 = vmatprep.subr.bf16.mxu0 0
        %1793 = vmatpush1.bf16.xpose.msra.mxu0 0
        %1794 = vmatprep.subr.bf16.mxu0 0
        %1795 = vmatpush1.bf16.xpose.msra.mxu0 0
        %1796 = vmatprep.subr.bf16.mxu0 0
        %1797 = vmatpush1.bf16.xpose.msra.mxu0 0
        %1798 = vmatprep.subr.bf16.mxu0 0
        %1799 = vmatpush1.bf16.xpose.msra.mxu0 0
        %1800 = vmatprep.subr.bf16.mxu0 0
        %1801 = vmatpush1.bf16.xpose.msra.mxu0 0
        %1802 = vmatprep.subr.bf16.mxu0 0
        %1803 = vmatpush1.bf16.xpose.msra.mxu0 0
        %1804 = vmatprep.subr.bf16.mxu0 0
        %1805 = vmatpush1.bf16.xpose.msra.mxu0 0
        %1806 = vmatprep.subr.bf16.mxu0 0
        %1807 = vmatpush1.bf16.xpose.msra.mxu0 0
        %1808 = vmatprep.subr.bf16.mxu0 0
        %1809 = vmatpush1.bf16.xpose.msra.mxu0 0
        %1810 = vmatprep.subr.bf16.mxu0 0
        %1811 = vmatpush1.bf16.xpose.msra.mxu0 0
        %1812 = vmatprep.subr.bf16.mxu0 0
        %1813 = vmatpush1.bf16.xpose.msra.mxu0 0
        %1814 = vmatprep.subr.bf16.mxu0 0
        %1815 = vmatpush1.bf16.xpose.msra.mxu0 0
        %1816 = vmatprep.subr.bf16.mxu0 0
        %1817 = vmatpush1.bf16.xpose.msra.mxu0 0
        %1818 = vmatprep.subr.bf16.mxu0 0
        %1819 = vmatpush1.bf16.xpose.msra.mxu0 0
        %1820 = vmatprep.subr.bf16.mxu0 0
        %1821 = vmatpush1.bf16.xpose.msra.mxu0 0
        %1822 = vmatprep.mubr.bf16.mxu0 0
        %1823 = vmatmul.mubr.bf16.gmra.mrb[0].mxu0 %v1785
        %v1824 = vpop.f32.mrb[0].mxu0
        %v1825 = vadd.f32 %v520, %v1824
        %v1826 = vpop.f32.mrb[0].mxu0
        %v1827 = vpop.f32.mrb[0].mxu0
        %v1828 = vpop.f32.mrb[0].mxu0
        %1829 = vdwg.mxu0
        %1830 = vrot.lane.b32.xlu0 %v1560, 112
        %v1831 = vpop.permute.xlu0 %1830
        %1832 = vrot.lane.b32.xlu0 %v1560, 80
        %v1833 = vpop.permute.xlu0 %1832
        %v1835 = vsel %vm661, %v1831, 0
        %v1838 = vsel %vm661, %v1833, 0
        %1840 = vmatprep.subr.bf16.mxu0 0
        %1841 = vmatpush1.bf16.xpose.msra.mxu0 %v1838
        %1842 = vmatprep.subr.bf16.mxu0 0
        %1843 = vmatpush1.bf16.xpose.msra.mxu0 0
        %1844 = vmatprep.subr.bf16.mxu0 0
        %1845 = vmatpush1.bf16.xpose.msra.mxu0 0
        %1846 = vmatprep.subr.bf16.mxu0 0
        %1847 = vmatpush1.bf16.xpose.msra.mxu0 0
        %1848 = vmatprep.subr.bf16.mxu0 0
        %1849 = vmatpush1.bf16.xpose.msra.mxu0 0
        %1850 = vmatprep.subr.bf16.mxu0 0
        %1851 = vmatpush1.bf16.xpose.msra.mxu0 0
        %1852 = vmatprep.subr.bf16.mxu0 0
        %1853 = vmatpush1.bf16.xpose.msra.mxu0 0
        %1854 = vmatprep.subr.bf16.mxu0 0
        %1855 = vmatpush1.bf16.xpose.msra.mxu0 0
        %1856 = vmatprep.subr.bf16.mxu0 0
        %1857 = vmatpush1.bf16.xpose.msra.mxu0 0
        %1858 = vmatprep.subr.bf16.mxu0 0
        %1859 = vmatpush1.bf16.xpose.msra.mxu0 0
        %1860 = vmatprep.subr.bf16.mxu0 0
        %1861 = vmatpush1.bf16.xpose.msra.mxu0 0
        %1862 = vmatprep.subr.bf16.mxu0 0
        %1863 = vmatpush1.bf16.xpose.msra.mxu0 0
        %1864 = vmatprep.subr.bf16.mxu0 0
        %1865 = vmatpush1.bf16.xpose.msra.mxu0 0
        %1866 = vmatprep.subr.bf16.mxu0 0
        %1867 = vmatpush1.bf16.xpose.msra.mxu0 0
        %1868 = vmatprep.subr.bf16.mxu0 0
        %1869 = vmatpush1.bf16.xpose.msra.mxu0 0
        %1870 = vmatprep.subr.bf16.mxu0 0
        %1871 = vmatpush1.bf16.xpose.msra.mxu0 0
        %1872 = vmatprep.mubr.bf16.mxu0 0
        %1873 = vmatmul.mubr.bf16.gmra.mrb[0].mxu0 %v1835
        %v1874 = vpop.f32.mrb[0].mxu0
        %v1875 = vadd.f32 %v520, %v1874
        %v1876 = vpop.f32.mrb[0].mxu0
        %v1877 = vpop.f32.mrb[0].mxu0
        %v1878 = vpop.f32.mrb[0].mxu0
        %1879 = vdwg.mxu0
        %v1880 = vsel %vm757, %v1825, -inf
        %1881 = vmax.xlane.f32.xlu0 %v1880
        %v1882 = vpop.xlane.xlu0 %1881
        %v1883 = vsel %vm757, %v1875, -inf
        %1884 = vmax.xlane.f32.xlu0 %v1883
        %v1885 = vpop.xlane.xlu0 %1884
        %v1886 = vsub.f32 %v1825, %v1882
        %v1887 = vsub.f32 %v1875, %v1885
        %v1888 = vmul.f32 %v1886, 1.442695
        %v1889 = vpow.pop %v1888
        %v1890 = vmul.f32 %v1887, 1.442695
        %v1891 = vpow.pop %v1890
        %v1892 = vsel %vm757, %v1889, 0.0
        %1893 = vadd.xlane.f32.xlu0 %v1892
        %v1894 = vpop.xlane.xlu0 %1893
        %v1895 = vsel %vm757, %v1891, 0.0
        %1896 = vadd.xlane.f32.xlu0 %v1895
        %v1897 = vpop.xlane.xlu0 %1896
        %v1898 = vrcp.pop %v1894
        %v1899 = vrcp.pop %v1897
        %v1900 = vmul.f32 %v1889, %v1898
        %v1901 = vmul.f32 %v1891, %v1899
        %v1902 = vpack.c.bf16 %v1900, %v1900
        %v1903 = vpack.c.bf16 %v1901, %v1901
        %1904 = vrot.lane.b32.xlu0 %v1559, 48
        %v1905 = vpop.permute.xlu0 %1904
        %v1907 = vsel %vm757, %v1902, 0
        %v1910 = vsel %vm787, %v1905, 0
        %1912 = vmatprep.subr.bf16.mxu0 0
        %1913 = vmatpush1.bf16.msra.mxu0 %v1910
        %1914 = vmatprep.subr.bf16.mxu0 0
        %1915 = vmatpush1.bf16.msra.mxu0 0
        %1916 = vmatprep.subr.bf16.mxu0 0
        %1917 = vmatpush1.bf16.msra.mxu0 0
        %1918 = vmatprep.subr.bf16.mxu0 0
        %1919 = vmatpush1.bf16.msra.mxu0 0
        %1920 = vmatprep.subr.bf16.mxu0 0
        %1921 = vmatpush1.bf16.msra.mxu0 0
        %1922 = vmatprep.subr.bf16.mxu0 0
        %1923 = vmatpush1.bf16.msra.mxu0 0
        %1924 = vmatprep.subr.bf16.mxu0 0
        %1925 = vmatpush1.bf16.msra.mxu0 0
        %1926 = vmatprep.subr.bf16.mxu0 0
        %1927 = vmatpush1.bf16.msra.mxu0 0
        %1928 = vmatprep.subr.bf16.mxu0 0
        %1929 = vmatpush1.bf16.msra.mxu0 0
        %1930 = vmatprep.subr.bf16.mxu0 0
        %1931 = vmatpush1.bf16.msra.mxu0 0
        %1932 = vmatprep.subr.bf16.mxu0 0
        %1933 = vmatpush1.bf16.msra.mxu0 0
        %1934 = vmatprep.subr.bf16.mxu0 0
        %1935 = vmatpush1.bf16.msra.mxu0 0
        %1936 = vmatprep.subr.bf16.mxu0 0
        %1937 = vmatpush1.bf16.msra.mxu0 0
        %1938 = vmatprep.subr.bf16.mxu0 0
        %1939 = vmatpush1.bf16.msra.mxu0 0
        %1940 = vmatprep.subr.bf16.mxu0 0
        %1941 = vmatpush1.bf16.msra.mxu0 0
        %1942 = vmatprep.subr.bf16.mxu0 0
        %1943 = vmatpush1.bf16.msra.mxu0 0
        %1944 = vmatprep.mubr.bf16.mxu0 0
        %1945 = vmatmul.mubr.bf16.gmra.mrb[0].mxu0 %v1907
        %v1946 = vpop.f32.mrb[0].mxu0
        %v1947 = vadd.f32 0.0, %v1946
        %v1948 = vpop.f32.mrb[0].mxu0
        %v1949 = vpop.f32.mrb[0].mxu0
        %v1950 = vpop.f32.mrb[0].mxu0
        %1951 = vdwg.mxu0
        %1952 = vrot.lane.b32.xlu0 %v1560, 48
        %v1953 = vpop.permute.xlu0 %1952
        %v1955 = vsel %vm757, %v1903, 0
        %v1958 = vsel %vm787, %v1953, 0
        %1960 = vmatprep.subr.bf16.mxu0 0
        %1961 = vmatpush1.bf16.msra.mxu0 %v1958
        %1962 = vmatprep.subr.bf16.mxu0 0
        %1963 = vmatpush1.bf16.msra.mxu0 0
        %1964 = vmatprep.subr.bf16.mxu0 0
        %1965 = vmatpush1.bf16.msra.mxu0 0
        %1966 = vmatprep.subr.bf16.mxu0 0
        %1967 = vmatpush1.bf16.msra.mxu0 0
        %1968 = vmatprep.subr.bf16.mxu0 0
        %1969 = vmatpush1.bf16.msra.mxu0 0
        %1970 = vmatprep.subr.bf16.mxu0 0
        %1971 = vmatpush1.bf16.msra.mxu0 0
        %1972 = vmatprep.subr.bf16.mxu0 0
        %1973 = vmatpush1.bf16.msra.mxu0 0
        %1974 = vmatprep.subr.bf16.mxu0 0
        %1975 = vmatpush1.bf16.msra.mxu0 0
        %1976 = vmatprep.subr.bf16.mxu0 0
        %1977 = vmatpush1.bf16.msra.mxu0 0
        %1978 = vmatprep.subr.bf16.mxu0 0
        %1979 = vmatpush1.bf16.msra.mxu0 0
        %1980 = vmatprep.subr.bf16.mxu0 0
        %1981 = vmatpush1.bf16.msra.mxu0 0
        %1982 = vmatprep.subr.bf16.mxu0 0
        %1983 = vmatpush1.bf16.msra.mxu0 0
        %1984 = vmatprep.subr.bf16.mxu0 0
        %1985 = vmatpush1.bf16.msra.mxu0 0
        %1986 = vmatprep.subr.bf16.mxu0 0
        %1987 = vmatpush1.bf16.msra.mxu0 0
        %1988 = vmatprep.subr.bf16.mxu0 0
        %1989 = vmatpush1.bf16.msra.mxu0 0
        %1990 = vmatprep.subr.bf16.mxu0 0
        %1991 = vmatpush1.bf16.msra.mxu0 0
        %1992 = vmatprep.mubr.bf16.mxu0 0
        %1993 = vmatmul.mubr.bf16.gmra.mrb[0].mxu0 %v1955
        %v1994 = vpop.f32.mrb[0].mxu0
        %v1995 = vadd.f32 0.0, %v1994
        %v1996 = vpop.f32.mrb[0].mxu0
        %v1997 = vpop.f32.mrb[0].mxu0
        %v1998 = vpop.f32.mrb[0].mxu0
        %1999 = vdwg.mxu0
        %v2000 = vpack.c.bf16 %v1995, %v1947
        %v2003 = vunpack.c.l.b16 %v1441
        %v2004 = vunpack.c.l.b16 %v1442
        %v2005 = vpack.c.b16 %v2004, %v2003
        %v2008 = vsel %vm661, %v2000, 0
        %2010 = vmatprep.subr.bf16.mxu0 0
        %2011 = vmatpush1.bf16.msra.mxu0 %v2005
        %2012 = vmatprep.subr.bf16.mxu0 0
        %2013 = vmatpush1.bf16.msra.mxu0 0
        %2014 = vmatprep.subr.bf16.mxu0 0
        %2015 = vmatpush1.bf16.msra.mxu0 0
        %2016 = vmatprep.subr.bf16.mxu0 0
        %2017 = vmatpush1.bf16.msra.mxu0 0
        %2018 = vmatprep.subr.bf16.mxu0 0
        %2019 = vmatpush1.bf16.msra.mxu0 0
        %2020 = vmatprep.subr.bf16.mxu0 0
        %2021 = vmatpush1.bf16.msra.mxu0 0
        %2022 = vmatprep.subr.bf16.mxu0 0
        %2023 = vmatpush1.bf16.msra.mxu0 0
        %2024 = vmatprep.subr.bf16.mxu0 0
        %2025 = vmatpush1.bf16.msra.mxu0 0
        %2026 = vmatprep.subr.bf16.mxu0 0
        %2027 = vmatpush1.bf16.msra.mxu0 0
        %2028 = vmatprep.subr.bf16.mxu0 0
        %2029 = vmatpush1.bf16.msra.mxu0 0
        %2030 = vmatprep.subr.bf16.mxu0 0
        %2031 = vmatpush1.bf16.msra.mxu0 0
        %2032 = vmatprep.subr.bf16.mxu0 0
        %2033 = vmatpush1.bf16.msra.mxu0 0
        %2034 = vmatprep.subr.bf16.mxu0 0
        %2035 = vmatpush1.bf16.msra.mxu0 0
        %2036 = vmatprep.subr.bf16.mxu0 0
        %2037 = vmatpush1.bf16.msra.mxu0 0
        %2038 = vmatprep.subr.bf16.mxu0 0
        %2039 = vmatpush1.bf16.msra.mxu0 0
        %2040 = vmatprep.subr.bf16.mxu0 0
        %2041 = vmatpush1.bf16.msra.mxu0 0
        %2042 = vmatprep.mubr.bf16.mxu0 0
        %2043 = vmatmul.mubr.bf16.gmra.mrb[0].mxu0 %v2008
        %v2044 = vpop.f32.mrb[0].mxu0
        %v2045 = vadd.f32 0.0, %v2044
        %v2046 = vpop.f32.mrb[0].mxu0
        %v2047 = vpop.f32.mrb[0].mxu0
        %v2048 = vadd.f32 0.0, %v2047
        %v2049 = vpop.f32.mrb[0].mxu0
        %2050 = vdwg.mxu0
        %v2053 = vunpack.c.l.b16 %v1439
        %v2054 = vunpack.c.l.b16 %v1440
        %v2055 = vpack.c.b16 %v2054, %v2053
        %v2058 = vsel %vm661, %v1779, 0
        %2060 = vmatprep.subr.bf16.mxu0 0
        %2061 = vmatpush1.bf16.msra.mxu0 %v2055
        %2062 = vmatprep.subr.bf16.mxu0 0
        %2063 = vmatpush1.bf16.msra.mxu0 0
        %2064 = vmatprep.subr.bf16.mxu0 0
        %2065 = vmatpush1.bf16.msra.mxu0 0
        %2066 = vmatprep.subr.bf16.mxu0 0
        %2067 = vmatpush1.bf16.msra.mxu0 0
        %2068 = vmatprep.subr.bf16.mxu0 0
        %2069 = vmatpush1.bf16.msra.mxu0 0
        %2070 = vmatprep.subr.bf16.mxu0 0
        %2071 = vmatpush1.bf16.msra.mxu0 0
        %2072 = vmatprep.subr.bf16.mxu0 0
        %2073 = vmatpush1.bf16.msra.mxu0 0
        %2074 = vmatprep.subr.bf16.mxu0 0
        %2075 = vmatpush1.bf16.msra.mxu0 0
        %2076 = vmatprep.subr.bf16.mxu0 0
        %2077 = vmatpush1.bf16.msra.mxu0 0
        %2078 = vmatprep.subr.bf16.mxu0 0
        %2079 = vmatpush1.bf16.msra.mxu0 0
        %2080 = vmatprep.subr.bf16.mxu0 0
        %2081 = vmatpush1.bf16.msra.mxu0 0
        %2082 = vmatprep.subr.bf16.mxu0 0
        %2083 = vmatpush1.bf16.msra.mxu0 0
        %2084 = vmatprep.subr.bf16.mxu0 0
        %2085 = vmatpush1.bf16.msra.mxu0 0
        %2086 = vmatprep.subr.bf16.mxu0 0
        %2087 = vmatpush1.bf16.msra.mxu0 0
        %2088 = vmatprep.subr.bf16.mxu0 0
        %2089 = vmatpush1.bf16.msra.mxu0 0
        %2090 = vmatprep.subr.bf16.mxu0 0
        %2091 = vmatpush1.bf16.msra.mxu0 0
        %2092 = vmatprep.mubr.bf16.mxu0 0
        %2093 = vmatmul.mubr.bf16.gmra.mrb[0].mxu0 %v2058
        %v2094 = vpop.f32.mrb[0].mxu0
        %v2095 = vadd.f32 %v2045, %v2094
        %v2096 = vpop.f32.mrb[0].mxu0
        %v2097 = vpop.f32.mrb[0].mxu0
        %v2098 = vadd.f32 %v2048, %v2097
        %v2099 = vpop.f32.mrb[0].mxu0
        %2100 = vdwg.mxu0
        %v2101 = vadd.f32 %v1420, %v2095
        %v2102 = vadd.f32 %v1421, %v2098
        %v2103 = vlaneseq
        %v2104 = vshrl.u32 %v2103, 7
        %v2105 = vsub.s32 0, %v2104
        %v2106 = vrot.slane %v1425, %v2105
        %v2107 = vadd.f32 %v2101, %v2106
        %v2108 = vadd.f32 %v2102, %v2106
        %v2109 = vsel %vm477, %v2107, 0.0
        %2110 = vadd.xlane.f32.xlu0 %v2109
        %v2111 = vpop.xlane.xlu0 %2110
        %v2112 = vsel %vm477, %v2108, 0.0
        %2113 = vadd.xlane.f32.xlu0 %v2112
        %v2114 = vpop.xlane.xlu0 %2113
        %v2115 = vmul.f32 %v2111, %v484
        %v2116 = vmul.f32 %v2114, %v484
        %v2117 = vsub.f32 %v2107, %v2115
        %v2118 = vsub.f32 %v2108, %v2116
        %v2119 = vmul.f32 %v2117, %v2117
        %v2120 = vmul.f32 %v2118, %v2118
        %v2121 = vsel %vm477, %v2119, 0.0
        %2122 = vadd.xlane.f32.xlu0 %v2121
        %v2123 = vpop.xlane.xlu0 %2122
        %v2124 = vsel %vm477, %v2120, 0.0
        %2125 = vadd.xlane.f32.xlu0 %v2124
        %v2126 = vpop.xlane.xlu0 %2125
        %v2127 = vmul.f32 %v2123, %v484
        %v2128 = vmul.f32 %v2126, %v484
        %v2129 = vadd.f32 %v2127, 1e-05
        %v2130 = vadd.f32 %v2128, 1e-05
        %v2131 = vrsqrt.pop %v2129
        %v2132 = vrsqrt.pop %v2130
        %v2133 = vmul.f32 %v2117, %v2131
        %v2134 = vmul.f32 %v2118, %v2132
        %v2135 = vlaneseq
        %v2136 = vshrl.u32 %v2135, 7
        %v2137 = vsub.s32 0, %v2136
        %v2138 = vrot.slane %v1426, %v2137
        %v2139 = vmul.f32 %v2133, %v2138
        %v2140 = vmul.f32 %v2134, %v2138
        %v2141 = vlaneseq
        %v2142 = vshrl.u32 %v2141, 7
        %v2143 = vsub.s32 0, %v2142
        %v2144 = vrot.slane %v1427, %v2143
        %v2145 = vadd.f32 %v2139, %v2144
        %v2146 = vadd.f32 %v2140, %v2144
        %v2147 = vpack.c.bf16 %v2146, %v2145
        %v2148 = vlaneseq
        %v2149 = vshrl.u32 %v2148, 7
        %v2150 = vsub.s32 0, %v2149
        %v2151 = vrot.slane %v1428, %v2150
        %v2156 = vunpack.c.l.b16 %v1435
        %v2157 = vunpack.c.l.b16 %v1436
        %v2158 = vunpack.c.l.b16 %v1437
        %v2159 = vunpack.c.l.b16 %v1438
        %v2160 = vpack.c.b16 %v2157, %v2156
        %v2161 = vpack.c.b16 %v2159, %v2158
        %v2165 = vsel %vm477, %v2147, 0
        %2167 = vmatprep.subr.bf16.mxu0 0
        %2168 = vmatpush1.bf16.msra.mxu0 %v2160
        %2169 = vmatprep.subr.bf16.mxu0 0
        %2170 = vmatpush1.bf16.msra.mxu0 %v2161
        %2171 = vmatprep.subr.bf16.mxu0 0
        %2172 = vmatpush1.bf16.msra.mxu0 0
        %2173 = vmatprep.subr.bf16.mxu0 0
        %2174 = vmatpush1.bf16.msra.mxu0 0
        %2175 = vmatprep.subr.bf16.mxu0 0
        %2176 = vmatpush1.bf16.msra.mxu0 0
        %2177 = vmatprep.subr.bf16.mxu0 0
        %2178 = vmatpush1.bf16.msra.mxu0 0
        %2179 = vmatprep.subr.bf16.mxu0 0
        %2180 = vmatpush1.bf16.msra.mxu0 0
        %2181 = vmatprep.subr.bf16.mxu0 0
        %2182 = vmatpush1.bf16.msra.mxu0 0
        %2183 = vmatprep.subr.bf16.mxu0 0
        %2184 = vmatpush1.bf16.msra.mxu0 0
        %2185 = vmatprep.subr.bf16.mxu0 0
        %2186 = vmatpush1.bf16.msra.mxu0 0
        %2187 = vmatprep.subr.bf16.mxu0 0
        %2188 = vmatpush1.bf16.msra.mxu0 0
        %2189 = vmatprep.subr.bf16.mxu0 0
        %2190 = vmatpush1.bf16.msra.mxu0 0
        %2191 = vmatprep.subr.bf16.mxu0 0
        %2192 = vmatpush1.bf16.msra.mxu0 0
        %2193 = vmatprep.subr.bf16.mxu0 0
        %2194 = vmatpush1.bf16.msra.mxu0 0
        %2195 = vmatprep.subr.bf16.mxu0 0
        %2196 = vmatpush1.bf16.msra.mxu0 0
        %2197 = vmatprep.subr.bf16.mxu0 0
        %2198 = vmatpush1.bf16.msra.mxu0 0
        %2199 = vmatprep.mubr.bf16.mxu0 0
        %2200 = vmatmul.mubr.bf16.gmra.mrb[0].mxu0 %v2165
        %v2201 = vpop.f32.mrb[0].mxu0
        %v2202 = vadd.f32 %v2151, %v2201
        %v2203 = vpop.f32.mrb[0].mxu0
        %v2204 = vpop.f32.mrb[0].mxu0
        %v2205 = vadd.f32 %v2151, %v2204
        %v2206 = vpop.f32.mrb[0].mxu0
        %2207 = vdwg.mxu0
        %v2208 = vmul.f32 %v2202, %v2202
        %v2209 = vmul.f32 %v2205, %v2205
        %v2210 = vmul.f32 %v2202, %v2208
        %v2211 = vmul.f32 %v2205, %v2209
        %v2212 = vmul.f32 %v2210, 0.044715
        %v2213 = vmul.f32 %v2211, 0.044715
        %v2214 = vadd.f32 %v2202, %v2212
        %v2215 = vadd.f32 %v2205, %v2213
        %v2216 = vmul.f32 %v2214, 0.7978846
        %v2217 = vmul.f32 %v2215, 0.7978846
        %v2218 = vtanh.pop %v2216
        %v2219 = vtanh.pop %v2217
        %v2220 = vadd.f32 %v2218, 1.0
        %v2221 = vadd.f32 %v2219, 1.0
        %v2222 = vmul.f32 %v2220, 0.5
        %v2223 = vmul.f32 %v2221, 0.5
        %v2224 = vmul.f32 %v2202, %v2222
        %v2225 = vmul.f32 %v2205, %v2223
        %v2226 = vpack.c.bf16 %v2225, %v2224
        %v2227 = vlaneseq
        %v2228 = vshrl.u32 %v2227, 7
        %v2229 = vsub.s32 0, %v2228
        %v2230 = vrot.slane %v1429, %v2229
        %v2247 = vunpack.c.l.b16 %v1444
        %v2248 = vunpack.c.l.b16 %v1445
        %v2249 = vunpack.c.l.b16 %v1446
        %v2250 = vunpack.c.l.b16 %v1447
        %v2251 = vunpack.c.l.b16 %v1448
        %v2252 = vunpack.c.l.b16 %v1449
        %v2253 = vunpack.c.l.b16 %v1450
        %v2254 = vunpack.c.l.b16 %v1451
        %v2255 = vunpack.c.l.b16 %v1452
        %v2256 = vunpack.c.l.b16 %v1453
        %v2257 = vunpack.c.l.b16 %v1454
        %v2258 = vunpack.c.l.b16 %v1455
        %v2259 = vunpack.c.l.b16 %v1456
        %v2260 = vunpack.c.l.b16 %v1457
        %v2261 = vunpack.c.l.b16 %v1458
        %v2262 = vunpack.c.l.b16 %v1459
        %v2263 = vpack.c.b16 %v2248, %v2247
        %v2264 = vpack.c.b16 %v2250, %v2249
        %v2265 = vpack.c.b16 %v2252, %v2251
        %v2266 = vpack.c.b16 %v2254, %v2253
        %v2267 = vpack.c.b16 %v2256, %v2255
        %v2268 = vpack.c.b16 %v2258, %v2257
        %v2269 = vpack.c.b16 %v2260, %v2259
        %v2270 = vpack.c.b16 %v2262, %v2261
        %2279 = vmatprep.subr.bf16.mxu0 0
        %2280 = vmatpush1.bf16.msra.mxu0 %v2263
        %2281 = vmatprep.subr.bf16.mxu0 0
        %2282 = vmatpush1.bf16.msra.mxu0 %v2264
        %2283 = vmatprep.subr.bf16.mxu0 0
        %2284 = vmatpush1.bf16.msra.mxu0 %v2265
        %2285 = vmatprep.subr.bf16.mxu0 0
        %2286 = vmatpush1.bf16.msra.mxu0 %v2266
        %2287 = vmatprep.subr.bf16.mxu0 0
        %2288 = vmatpush1.bf16.msra.mxu0 %v2267
        %2289 = vmatprep.subr.bf16.mxu0 0
        %2290 = vmatpush1.bf16.msra.mxu0 %v2268
        %2291 = vmatprep.subr.bf16.mxu0 0
        %2292 = vmatpush1.bf16.msra.mxu0 %v2269
        %2293 = vmatprep.subr.bf16.mxu0 0
        %2294 = vmatpush1.bf16.msra.mxu0 %v2270
        %2295 = vmatprep.subr.bf16.mxu0 0
        %2296 = vmatpush1.bf16.msra.mxu0 0
        %2297 = vmatprep.subr.bf16.mxu0 0
        %2298 = vmatpush1.bf16.msra.mxu0 0
        %2299 = vmatprep.subr.bf16.mxu0 0
        %2300 = vmatpush1.bf16.msra.mxu0 0
        %2301 = vmatprep.subr.bf16.mxu0 0
        %2302 = vmatpush1.bf16.msra.mxu0 0
        %2303 = vmatprep.subr.bf16.mxu0 0
        %2304 = vmatpush1.bf16.msra.mxu0 0
        %2305 = vmatprep.subr.bf16.mxu0 0
        %2306 = vmatpush1.bf16.msra.mxu0 0
        %2307 = vmatprep.subr.bf16.mxu0 0
        %2308 = vmatpush1.bf16.msra.mxu0 0
        %2309 = vmatprep.subr.bf16.mxu0 0
        %2310 = vmatpush1.bf16.msra.mxu0 0
        %2311 = vmatprep.mubr.bf16.mxu0 0
        %2312 = vmatmul.mubr.bf16.gmra.mrb[0].mxu0 %v2226
        %v2313 = vpop.f32.mrb[0].mxu0
        %v2314 = vadd.f32 %v2230, %v2313
        %v2315 = vpop.f32.mrb[0].mxu0
        %v2316 = vpop.f32.mrb[0].mxu0
        %v2317 = vadd.f32 %v2230, %v2316
        %v2318 = vpop.f32.mrb[0].mxu0
        %2319 = vdwg.mxu0
        %v2320 = vadd.f32 %v2107, %v2314
        %v2321 = vadd.f32 %v2108, %v2317
        %v2322 = vld [vmem:[%s4 + $0x10] sm:$0x1]
        %v2323 = vld [vmem:[%s4 + $0x11] sm:$0x1]
        %v2324 = vld [vmem:[%s8] sm:$0xf]
        %v2325 = vld [vmem:[%s8 + $0x4] sm:$0xf]
        %v2326 = vld [vmem:[%s8 + $0x8] sm:$0xf]
        %v2327 = vld [vmem:[%s8 + $0xc] sm:$0xf]
        %v2330 = vrot.slane %v2321, 7
        %vm2331 = vcmask 1041409
        %v2332 = vsel %vm2331, %v2330, %v2320
        %vm2334 = vcmask 254976
        %v2335 = vsel %vm2334, %v2332, 0.0
        %2336 = vadd.xlane.f32.xlu0 %v2335
        %v2337 = vpop.xlane.xlu0 %2336
        %v2338 = vmul.f32 %v2337, %v484
        %v2340 = vrot.slane %v2338, 1
        %v2343 = vsub.f32 %v2320, %v2338
        %v2344 = vsub.f32 %v2321, %v2340
        %v2345 = vmul.f32 %v2343, %v2343
        %v2346 = vmul.f32 %v2344, %v2344
        %v2349 = vrot.slane %v2346, 7
        %v2350 = vsel %vm2331, %v2349, %v2345
        %v2352 = vsel %vm2334, %v2350, 0.0
        %2353 = vadd.xlane.f32.xlu0 %v2352
        %v2354 = vpop.xlane.xlu0 %2353
        %v2355 = vmul.f32 %v2354, %v484
        %v2356 = vadd.f32 %v2355, 1e-05
        %v2357 = vrsqrt.pop %v2356
        %v2359 = vrot.slane %v2357, 1
        %v2362 = vmul.f32 %v2343, %v2357
        %v2363 = vmul.f32 %v2344, %v2359
        %v2364 = vlaneseq
        %v2365 = vshrl.u32 %v2364, 7
        %v2366 = vsub.s32 0, %v2365
        %v2367 = vrot.slane %v2322, %v2366
        %v2368 = vmul.f32 %v2362, %v2367
        %v2369 = vmul.f32 %v2363, %v2367
        %v2370 = vlaneseq
        %v2371 = vshrl.u32 %v2370, 7
        %v2372 = vsub.s32 0, %v2371
        %v2373 = vrot.slane %v2323, %v2372
        %v2374 = vadd.f32 %v2368, %v2373
        %v2375 = vadd.f32 %v2369, %v2373
        %v2376 = vpack.c.bf16 %v2374, %v2374
        %v2377 = vpack.c.bf16 %v2375, %v2375
        %v2380 = vunpack.c.l.b16 %v2376
        %v2381 = vunpack.c.l.b16 %v2377
        %v2382 = vrot.slane %v2381, 7
        %v2383 = vsel %vm2331, %v2382, %v2380
        %v2384 = vpack.c.b16 %v2383, %v2383
        %v2389 = vunpack.c.l.b16 %v2324
        %v2390 = vunpack.c.l.b16 %v2325
        %v2391 = vunpack.c.l.b16 %v2326
        %v2392 = vunpack.c.l.b16 %v2327
        %v2393 = vpack.c.b16 %v2390, %v2389
        %v2394 = vpack.c.b16 %v2392, %v2391
        %v2398 = vsel %vm477, %v2384, 0
        %2400 = vmatprep.subr.bf16.mxu0 0
        %2401 = vmatpush1.bf16.msra.mxu0 %v2393
        %2402 = vmatprep.subr.bf16.mxu0 0
        %2403 = vmatpush1.bf16.msra.mxu0 %v2394
        %2404 = vmatprep.subr.bf16.mxu0 0
        %2405 = vmatpush1.bf16.msra.mxu0 0
        %2406 = vmatprep.subr.bf16.mxu0 0
        %2407 = vmatpush1.bf16.msra.mxu0 0
        %2408 = vmatprep.subr.bf16.mxu0 0
        %2409 = vmatpush1.bf16.msra.mxu0 0
        %2410 = vmatprep.subr.bf16.mxu0 0
        %2411 = vmatpush1.bf16.msra.mxu0 0
        %2412 = vmatprep.subr.bf16.mxu0 0
        %2413 = vmatpush1.bf16.msra.mxu0 0
        %2414 = vmatprep.subr.bf16.mxu0 0
        %2415 = vmatpush1.bf16.msra.mxu0 0
        %2416 = vmatprep.subr.bf16.mxu0 0
        %2417 = vmatpush1.bf16.msra.mxu0 0
        %2418 = vmatprep.subr.bf16.mxu0 0
        %2419 = vmatpush1.bf16.msra.mxu0 0
        %2420 = vmatprep.subr.bf16.mxu0 0
        %2421 = vmatpush1.bf16.msra.mxu0 0
        %2422 = vmatprep.subr.bf16.mxu0 0
        %2423 = vmatpush1.bf16.msra.mxu0 0
        %2424 = vmatprep.subr.bf16.mxu0 0
        %2425 = vmatpush1.bf16.msra.mxu0 0
        %2426 = vmatprep.subr.bf16.mxu0 0
        %2427 = vmatpush1.bf16.msra.mxu0 0
        %2428 = vmatprep.subr.bf16.mxu0 0
        %2429 = vmatpush1.bf16.msra.mxu0 0
        %2430 = vmatprep.subr.bf16.mxu0 0
        %2431 = vmatpush1.bf16.msra.mxu0 0
        %2432 = vmatprep.mubr.bf16.mxu0 0
        %2433 = vmatmul.mubr.bf16.gmra.mrb[0].mxu0 %v2398
        %v2434 = vpop.f32.mrb[0].mxu0
        %v2435 = vadd.f32 0.0, %v2434
        %v2436 = vpop.f32.mrb[0].mxu0
        %v2437 = vpop.f32.mrb[0].mxu0
        %v2438 = vpop.f32.mrb[0].mxu0
        %2439 = vdwg.mxu0
        %v2440 = vmul.f32 %v2435, %v2435
        %vm2441 = vcmask 123904
        %v2442 = vsel %vm2441, %v2440, 0.0
        %2443 = vadd.xlane.f32.xlu0 %v2442
        %v2444 = vpop.xlane.xlu0 %2443
        %v2445 = vmax.f32 %v2444, 1e-12
        %v2446 = vrsqrt.pop %v2445
        %v2447 = vmul.f32 %v2435, %v2446
        %2448 = vst.msk [vmem:[%s290] sm:$0x3] %vm2441, %v2447
      $region56: #{clip_wrapper_forward.1} parent=51 // pred_fallthru
        _
      %p2449 = scmp.eq.s32.totalorder %s26, 1
      // Predicated region
      $region57: #{clip_wrapper_forward.1} parent=51 // pred_check
        %p2450 = pneg %p2449
      $region58: #{clip_wrapper_forward.1} parent=51 // pred_check_branch
        %2452 = sbr.rel (%p2450) target = $region60
      $region59: #{clip_wrapper_forward.1} parent=51 // pred_region
        %v2453 = vld [vmem:[%s3] sm:$0xff]
        %v2454 = vld [vmem:[%s3 + $0x8] sm:$0xff]
        %v2455 = vld [vmem:[%s4 + $0x6] sm:$0xff]
        %v2456 = vadd.f32 %v2453, %v2455
        %v2457 = vadd.f32 %v2454, %v2455
        %v2458 = vlaneseq
        %v2459 = vshrl.u32 %v2458, 7
        %v2460 = vlaneseq
        %v2461 = vand.u32 %v2460, 127
        %vm2462 = vcmp.lt.s32.totalorder %v2461, 8
        %vm2463 = vcmp.le.s32.totalorder %v2461, %v2459
        %vm2464 = vmand %vm2462, %vm2463
        %v2465 = vsel %vm2464, 0.0, -1e+30
        %v2466 = vld [vmem:[%s4 + $0x24] sm:$0x1]
        %v2467 = vld [vmem:[%s4 + $0x25] sm:$0x1]
        %v2468 = vld [vmem:[%s4 + $0x26] sm:$0x1]
        %v2469 = vld [vmem:[%s4 + $0x27] sm:$0x1]
        %v2470 = vld [vmem:[%s4 + $0x28] sm:$0x1]
        %v2471 = vld [vmem:[%s4 + $0x29] sm:$0x1]
        %v2472 = vld [vmem:[%s4 + $0x2a] sm:$0x1]
        %v2473 = vld [vmem:[%s4 + $0x2b] sm:$0x1]
        %s2474 = scalar_lea.vmem %s6, 96
        %v2475 = vld [vmem:[%s2474] sm:$0xf]
        %v2476 = vld [vmem:[%s2474 + $0xc] sm:$0xf]
        %v2477 = vld [vmem:[%s2474 + $0x18] sm:$0xf]
        %v2478 = vld [vmem:[%s2474 + $0x24] sm:$0xf]
        %v2479 = vld [vmem:[%s2474 + $0x4] sm:$0xf]
        %v2480 = vld [vmem:[%s2474 + $0x10] sm:$0xf]
        %v2481 = vld [vmem:[%s2474 + $0x1c] sm:$0xf]
        %v2482 = vld [vmem:[%s2474 + $0x28] sm:$0xf]
        %v2483 = vld [vmem:[%s2474 + $0x8] sm:$0xf]
        %v2484 = vld [vmem:[%s2474 + $0x14] sm:$0xf]
        %v2485 = vld [vmem:[%s2474 + $0x20] sm:$0xf]
        %v2486 = vld [vmem:[%s2474 + $0x2c] sm:$0xf]
        %s2487 = scalar_lea.vmem %s7, 128
        %v2488 = vld [vmem:[%s2487] sm:$0xf]
        %v2489 = vld [vmem:[%s2487 + $0x4] sm:$0xf]
        %v2490 = vld [vmem:[%s2487 + $0x8] sm:$0xf]
        %v2491 = vld [vmem:[%s2487 + $0xc] sm:$0xf]
        %v2492 = vld [vmem:[%s2487 + $0x10] sm:$0xf]
        %v2493 = vld [vmem:[%s2487 + $0x14] sm:$0xf]
        %v2494 = vld [vmem:[%s2487 + $0x18] sm:$0xf]
        %v2495 = vld [vmem:[%s2487 + $0x1c] sm:$0xf]
        %v2496 = vld [vmem:[%s2487 + $0x20] sm:$0xf]
        %v2497 = vld [vmem:[%s2487 + $0x24] sm:$0xf]
        %v2498 = vld [vmem:[%s2487 + $0x28] sm:$0xf]
        %v2499 = vld [vmem:[%s2487 + $0x2c] sm:$0xf]
        %v2500 = vld [vmem:[%s2487 + $0x30] sm:$0xf]
        %v2501 = vld [vmem:[%s2487 + $0x34] sm:$0xf]
        %v2502 = vld [vmem:[%s2487 + $0x38] sm:$0xf]
        %v2503 = vld [vmem:[%s2487 + $0x3c] sm:$0xf]
        %vm2504 = vcmask 261120
        %v2505 = vsel %vm2504, %v2456, 0.0
        %2506 = vadd.xlane.f32.xlu0 %v2505
        %v2507 = vpop.xlane.xlu0 %2506
        %v2508 = vsel %vm2504, %v2457, 0.0
        %2509 = vadd.xlane.f32.xlu0 %v2508
        %v2510 = vpop.xlane.xlu0 %2509
        %v2511 = vrcp.pop 32.0
        %v2512 = vmul.f32 %v2507, %v2511
        %v2513 = vmul.f32 %v2510, %v2511
        %v2514 = vsub.f32 %v2456, %v2512
        %v2515 = vsub.f32 %v2457, %v2513
        %v2516 = vmul.f32 %v2514, %v2514
        %v2517 = vmul.f32 %v2515, %v2515
        %v2518 = vsel %vm2504, %v2516, 0.0
        %2519 = vadd.xlane.f32.xlu0 %v2518
        %v2520 = vpop.xlane.xlu0 %2519
        %v2521 = vsel %vm2504, %v2517, 0.0
        %2522 = vadd.xlane.f32.xlu0 %v2521
        %v2523 = vpop.xlane.xlu0 %2522
        %v2524 = vmul.f32 %v2520, %v2511
        %v2525 = vmul.f32 %v2523, %v2511
        %v2526 = vadd.f32 %v2524, 1e-05
        %v2527 = vadd.f32 %v2525, 1e-05
        %v2528 = vrsqrt.pop %v2526
        %v2529 = vrsqrt.pop %v2527
        %v2530 = vmul.f32 %v2514, %v2528
        %v2531 = vmul.f32 %v2515, %v2529
        %v2532 = vlaneseq
        %v2533 = vshrl.u32 %v2532, 7
        %v2534 = vsub.s32 0, %v2533
        %v2535 = vrot.slane %v2466, %v2534
        %v2536 = vmul.f32 %v2530, %v2535
        %v2537 = vmul.f32 %v2531, %v2535
        %v2538 = vlaneseq
        %v2539 = vshrl.u32 %v2538, 7
        %v2540 = vsub.s32 0, %v2539
        %v2541 = vrot.slane %v2467, %v2540
        %v2542 = vadd.f32 %v2536, %v2541
        %v2543 = vadd.f32 %v2537, %v2541
        %v2544 = vpack.c.bf16 %v2543, %v2542
        %v2545 = vlaneseq
        %v2546 = vshrl.u32 %v2545, 7
        %v2547 = vsub.s32 0, %v2546
        %v2548 = vrot.slane %v2468, %v2547
        %v2553 = vunpack.c.l.b16 %v2475
        %v2554 = vunpack.c.l.b16 %v2476
        %v2555 = vunpack.c.l.b16 %v2477
        %v2556 = vunpack.c.l.b16 %v2478
        %v2557 = vpack.c.b16 %v2554, %v2553
        %v2558 = vpack.c.b16 %v2556, %v2555
        %v2562 = vsel %vm2504, %v2544, 0
        %2564 = vmatprep.subr.bf16.mxu0 0
        %2565 = vmatpush1.bf16.msra.mxu0 %v2557
        %2566 = vmatprep.subr.bf16.mxu0 0
        %2567 = vmatpush1.bf16.msra.mxu0 %v2558
        %2568 = vmatprep.subr.bf16.mxu0 0
        %2569 = vmatpush1.bf16.msra.mxu0 0
        %2570 = vmatprep.subr.bf16.mxu0 0
        %2571 = vmatpush1.bf16.msra.mxu0 0
        %2572 = vmatprep.subr.bf16.mxu0 0
        %2573 = vmatpush1.bf16.msra.mxu0 0
        %2574 = vmatprep.subr.bf16.mxu0 0
        %2575 = vmatpush1.bf16.msra.mxu0 0
        %2576 = vmatprep.subr.bf16.mxu0 0
        %2577 = vmatpush1.bf16.msra.mxu0 0
        %2578 = vmatprep.subr.bf16.mxu0 0
        %2579 = vmatpush1.bf16.msra.mxu0 0
        %2580 = vmatprep.subr.bf16.mxu0 0
        %2581 = vmatpush1.bf16.msra.mxu0 0
        %2582 = vmatprep.subr.bf16.mxu0 0
        %2583 = vmatpush1.bf16.msra.mxu0 0
        %2584 = vmatprep.subr.bf16.mxu0 0
        %2585 = vmatpush1.bf16.msra.mxu0 0
        %2586 = vmatprep.subr.bf16.mxu0 0
        %2587 = vmatpush1.bf16.msra.mxu0 0
        %2588 = vmatprep.subr.bf16.mxu0 0
        %2589 = vmatpush1.bf16.msra.mxu0 0
        %2590 = vmatprep.subr.bf16.mxu0 0
        %2591 = vmatpush1.bf16.msra.mxu0 0
        %2592 = vmatprep.subr.bf16.mxu0 0
        %2593 = vmatpush1.bf16.msra.mxu0 0
        %2594 = vmatprep.subr.bf16.mxu0 0
        %2595 = vmatpush1.bf16.msra.mxu0 0
        %2596 = vmatprep.mubr.bf16.mxu0 0
        %2597 = vmatmul.mubr.bf16.gmra.mrb[0].mxu0 %v2562
        %v2598 = vpop.f32.mrb[0].mxu0
        %v2599 = vadd.f32 %v2548, %v2598
        %v2600 = vpop.f32.mrb[0].mxu0
        %v2601 = vpop.f32.mrb[0].mxu0
        %v2602 = vadd.f32 %v2548, %v2601
        %v2603 = vpop.f32.mrb[0].mxu0
        %2604 = vdwg.mxu0
        %v2605 = vpack.c.bf16 %v2599, %v2599
        %v2606 = vpack.c.bf16 %v2602, %v2602
        %2608 = vrot.lane.b32.xlu0 %v2605, 96
        %v2609 = vpop.permute.xlu0 %2608
        %vm2610 = vcmask 130048
        %v2612 = vsel %vm2610, %v2605, 0
        %v2615 = vsel %vm2610, %v2609, 0
        %2617 = vmatprep.subr.bf16.mxu0 0
        %2618 = vmatpush1.bf16.xpose.msra.mxu0 %v2615
        %2619 = vmatprep.subr.bf16.mxu0 0
        %2620 = vmatpush1.bf16.xpose.msra.mxu0 0
        %2621 = vmatprep.subr.bf16.mxu0 0
        %2622 = vmatpush1.bf16.xpose.msra.mxu0 0
        %2623 = vmatprep.subr.bf16.mxu0 0
        %2624 = vmatpush1.bf16.xpose.msra.mxu0 0
        %2625 = vmatprep.subr.bf16.mxu0 0
        %2626 = vmatpush1.bf16.xpose.msra.mxu0 0
        %2627 = vmatprep.subr.bf16.mxu0 0
        %2628 = vmatpush1.bf16.xpose.msra.mxu0 0
        %2629 = vmatprep.subr.bf16.mxu0 0
        %2630 = vmatpush1.bf16.xpose.msra.mxu0 0
        %2631 = vmatprep.subr.bf16.mxu0 0
        %2632 = vmatpush1.bf16.xpose.msra.mxu0 0
        %2633 = vmatprep.subr.bf16.mxu0 0
        %2634 = vmatpush1.bf16.xpose.msra.mxu0 0
        %2635 = vmatprep.subr.bf16.mxu0 0
        %2636 = vmatpush1.bf16.xpose.msra.mxu0 0
        %2637 = vmatprep.subr.bf16.mxu0 0
        %2638 = vmatpush1.bf16.xpose.msra.mxu0 0
        %2639 = vmatprep.subr.bf16.mxu0 0
        %2640 = vmatpush1.bf16.xpose.msra.mxu0 0
        %2641 = vmatprep.subr.bf16.mxu0 0
        %2642 = vmatpush1.bf16.xpose.msra.mxu0 0
        %2643 = vmatprep.subr.bf16.mxu0 0
        %2644 = vmatpush1.bf16.xpose.msra.mxu0 0
        %2645 = vmatprep.subr.bf16.mxu0 0
        %2646 = vmatpush1.bf16.xpose.msra.mxu0 0
        %2647 = vmatprep.subr.bf16.mxu0 0
        %2648 = vmatpush1.bf16.xpose.msra.mxu0 0
        %2649 = vmatprep.mubr.bf16.mxu0 0
        %2650 = vmatmul.mubr.bf16.gmra.mrb[0].mxu0 %v2612
        %v2651 = vpop.f32.mrb[0].mxu0
        %v2652 = vadd.f32 %v2465, %v2651
        %v2653 = vpop.f32.mrb[0].mxu0
        %v2654 = vpop.f32.mrb[0].mxu0
        %v2655 = vpop.f32.mrb[0].mxu0
        %2656 = vdwg.mxu0
        %2658 = vrot.lane.b32.xlu0 %v2606, 96
        %v2659 = vpop.permute.xlu0 %2658
        %v2661 = vsel %vm2610, %v2606, 0
        %v2664 = vsel %vm2610, %v2659, 0
        %2666 = vmatprep.subr.bf16.mxu0 0
        %2667 = vmatpush1.bf16.xpose.msra.mxu0 %v2664
        %2668 = vmatprep.subr.bf16.mxu0 0
        %2669 = vmatpush1.bf16.xpose.msra.mxu0 0
        %2670 = vmatprep.subr.bf16.mxu0 0
        %2671 = vmatpush1.bf16.xpose.msra.mxu0 0
        %2672 = vmatprep.subr.bf16.mxu0 0
        %2673 = vmatpush1.bf16.xpose.msra.mxu0 0
        %2674 = vmatprep.subr.bf16.mxu0 0
        %2675 = vmatpush1.bf16.xpose.msra.mxu0 0
        %2676 = vmatprep.subr.bf16.mxu0 0
        %2677 = vmatpush1.bf16.xpose.msra.mxu0 0
        %2678 = vmatprep.subr.bf16.mxu0 0
        %2679 = vmatpush1.bf16.xpose.msra.mxu0 0
        %2680 = vmatprep.subr.bf16.mxu0 0
        %2681 = vmatpush1.bf16.xpose.msra.mxu0 0
        %2682 = vmatprep.subr.bf16.mxu0 0
        %2683 = vmatpush1.bf16.xpose.msra.mxu0 0
        %2684 = vmatprep.subr.bf16.mxu0 0
        %2685 = vmatpush1.bf16.xpose.msra.mxu0 0
        %2686 = vmatprep.subr.bf16.mxu0 0
        %2687 = vmatpush1.bf16.xpose.msra.mxu0 0
        %2688 = vmatprep.subr.bf16.mxu0 0
        %2689 = vmatpush1.bf16.xpose.msra.mxu0 0
        %2690 = vmatprep.subr.bf16.mxu0 0
        %2691 = vmatpush1.bf16.xpose.msra.mxu0 0
        %2692 = vmatprep.subr.bf16.mxu0 0
        %2693 = vmatpush1.bf16.xpose.msra.mxu0 0
        %2694 = vmatprep.subr.bf16.mxu0 0
        %2695 = vmatpush1.bf16.xpose.msra.mxu0 0
        %2696 = vmatprep.subr.bf16.mxu0 0
        %2697 = vmatpush1.bf16.xpose.msra.mxu0 0
        %2698 = vmatprep.mubr.bf16.mxu0 0
        %2699 = vmatmul.mubr.bf16.gmra.mrb[0].mxu0 %v2661
        %v2700 = vpop.f32.mrb[0].mxu0
        %v2701 = vadd.f32 %v2465, %v2700
        %v2702 = vpop.f32.mrb[0].mxu0
        %v2703 = vpop.f32.mrb[0].mxu0
        %v2704 = vpop.f32.mrb[0].mxu0
        %2705 = vdwg.mxu0
        %vm2706 = vcmask 64512
        %v2707 = vsel %vm2706, %v2652, -inf
        %2708 = vmax.xlane.f32.xlu0 %v2707
        %v2709 = vpop.xlane.xlu0 %2708
        %v2710 = vsel %vm2706, %v2701, -inf
        %2711 = vmax.xlane.f32.xlu0 %v2710
        %v2712 = vpop.xlane.xlu0 %2711
        %v2713 = vsub.f32 %v2652, %v2709
        %v2714 = vsub.f32 %v2701, %v2712
        %v2715 = vmul.f32 %v2713, 1.442695
        %v2716 = vpow.pop %v2715
        %v2717 = vmul.f32 %v2714, 1.442695
        %v2718 = vpow.pop %v2717
        %v2719 = vsel %vm2706, %v2716, 0.0
        %2720 = vadd.xlane.f32.xlu0 %v2719
        %v2721 = vpop.xlane.xlu0 %2720
        %v2722 = vsel %vm2706, %v2718, 0.0
        %2723 = vadd.xlane.f32.xlu0 %v2722
        %v2724 = vpop.xlane.xlu0 %2723
        %v2725 = vrcp.pop %v2721
        %v2726 = vrcp.pop %v2724
        %v2727 = vmul.f32 %v2716, %v2725
        %v2728 = vmul.f32 %v2718, %v2726
        %v2729 = vpack.c.bf16 %v2727, %v2727
        %v2730 = vpack.c.bf16 %v2728, %v2728
        %2731 = vrot.lane.b32.xlu0 %v2605, 64
        %v2732 = vpop.permute.xlu0 %2731
        %v2734 = vsel %vm2706, %v2729, 0
        %vm2736 = vcmask 1043456
        %v2738 = vsel %vm2736, %v2732, 0
        %2740 = vmatprep.subr.bf16.mxu0 0
        %2741 = vmatpush1.bf16.msra.mxu0 %v2738
        %2742 = vmatprep.subr.bf16.mxu0 0
        %2743 = vmatpush1.bf16.msra.mxu0 0
        %2744 = vmatprep.subr.bf16.mxu0 0
        %2745 = vmatpush1.bf16.msra.mxu0 0
        %2746 = vmatprep.subr.bf16.mxu0 0
        %2747 = vmatpush1.bf16.msra.mxu0 0
        %2748 = vmatprep.subr.bf16.mxu0 0
        %2749 = vmatpush1.bf16.msra.mxu0 0
        %2750 = vmatprep.subr.bf16.mxu0 0
        %2751 = vmatpush1.bf16.msra.mxu0 0
        %2752 = vmatprep.subr.bf16.mxu0 0
        %2753 = vmatpush1.bf16.msra.mxu0 0
        %2754 = vmatprep.subr.bf16.mxu0 0
        %2755 = vmatpush1.bf16.msra.mxu0 0
        %2756 = vmatprep.subr.bf16.mxu0 0
        %2757 = vmatpush1.bf16.msra.mxu0 0
        %2758 = vmatprep.subr.bf16.mxu0 0
        %2759 = vmatpush1.bf16.msra.mxu0 0
        %2760 = vmatprep.subr.bf16.mxu0 0
        %2761 = vmatpush1.bf16.msra.mxu0 0
        %2762 = vmatprep.subr.bf16.mxu0 0
        %2763 = vmatpush1.bf16.msra.mxu0 0
        %2764 = vmatprep.subr.bf16.mxu0 0
        %2765 = vmatpush1.bf16.msra.mxu0 0
        %2766 = vmatprep.subr.bf16.mxu0 0
        %2767 = vmatpush1.bf16.msra.mxu0 0
        %2768 = vmatprep.subr.bf16.mxu0 0
        %2769 = vmatpush1.bf16.msra.mxu0 0
        %2770 = vmatprep.subr.bf16.mxu0 0
        %2771 = vmatpush1.bf16.msra.mxu0 0
        %2772 = vmatprep.mubr.bf16.mxu0 0
        %2773 = vmatmul.mubr.bf16.gmra.mrb[0].mxu0 %v2734
        %v2774 = vpop.f32.mrb[0].mxu0
        %v2775 = vadd.f32 0.0, %v2774
        %v2776 = vpop.f32.mrb[0].mxu0
        %v2777 = vpop.f32.mrb[0].mxu0
        %v2778 = vpop.f32.mrb[0].mxu0
        %2779 = vdwg.mxu0
        %2780 = vrot.lane.b32.xlu0 %v2606, 64
        %v2781 = vpop.permute.xlu0 %2780
        %v2783 = vsel %vm2706, %v2730, 0
        %v2786 = vsel %vm2736, %v2781, 0
        %2788 = vmatprep.subr.bf16.mxu0 0
        %2789 = vmatpush1.bf16.msra.mxu0 %v2786
        %2790 = vmatprep.subr.bf16.mxu0 0
        %2791 = vmatpush1.bf16.msra.mxu0 0
        %2792 = vmatprep.subr.bf16.mxu0 0
        %2793 = vmatpush1.bf16.msra.mxu0 0
        %2794 = vmatprep.subr.bf16.mxu0 0
        %2795 = vmatpush1.bf16.msra.mxu0 0
        %2796 = vmatprep.subr.bf16.mxu0 0
        %2797 = vmatpush1.bf16.msra.mxu0 0
        %2798 = vmatprep.subr.bf16.mxu0 0
        %2799 = vmatpush1.bf16.msra.mxu0 0
        %2800 = vmatprep.subr.bf16.mxu0 0
        %2801 = vmatpush1.bf16.msra.mxu0 0
        %2802 = vmatprep.subr.bf16.mxu0 0
        %2803 = vmatpush1.bf16.msra.mxu0 0
        %2804 = vmatprep.subr.bf16.mxu0 0
        %2805 = vmatpush1.bf16.msra.mxu0 0
        %2806 = vmatprep.subr.bf16.mxu0 0
        %2807 = vmatpush1.bf16.msra.mxu0 0
        %2808 = vmatprep.subr.bf16.mxu0 0
        %2809 = vmatpush1.bf16.msra.mxu0 0
        %2810 = vmatprep.subr.bf16.mxu0 0
        %2811 = vmatpush1.bf16.msra.mxu0 0
        %2812 = vmatprep.subr.bf16.mxu0 0
        %2813 = vmatpush1.bf16.msra.mxu0 0
        %2814 = vmatprep.subr.bf16.mxu0 0
        %2815 = vmatpush1.bf16.msra.mxu0 0
        %2816 = vmatprep.subr.bf16.mxu0 0
        %2817 = vmatpush1.bf16.msra.mxu0 0
        %2818 = vmatprep.subr.bf16.mxu0 0
        %2819 = vmatpush1.bf16.msra.mxu0 0
        %2820 = vmatprep.mubr.bf16.mxu0 0
        %2821 = vmatmul.mubr.bf16.gmra.mrb[0].mxu0 %v2783
        %v2822 = vpop.f32.mrb[0].mxu0
        %v2823 = vadd.f32 0.0, %v2822
        %v2824 = vpop.f32.mrb[0].mxu0
        %v2825 = vpop.f32.mrb[0].mxu0
        %v2826 = vpop.f32.mrb[0].mxu0
        %2827 = vdwg.mxu0
        %v2828 = vpack.c.bf16 %v2823, %v2775
        %2829 = vrot.lane.b32.xlu0 %v2605, 112
        %v2830 = vpop.permute.xlu0 %2829
        %2831 = vrot.lane.b32.xlu0 %v2605, 80
        %v2832 = vpop.permute.xlu0 %2831
        %v2834 = vsel %vm2610, %v2830, 0
        %v2837 = vsel %vm2610, %v2832, 0
        %2839 = vmatprep.subr.bf16.mxu0 0
        %2840 = vmatpush1.bf16.xpose.msra.mxu0 %v2837
        %2841 = vmatprep.subr.bf16.mxu0 0
        %2842 = vmatpush1.bf16.xpose.msra.mxu0 0
        %2843 = vmatprep.subr.bf16.mxu0 0
        %2844 = vmatpush1.bf16.xpose.msra.mxu0 0
        %2845 = vmatprep.subr.bf16.mxu0 0
        %2846 = vmatpush1.bf16.xpose.msra.mxu0 0
        %2847 = vmatprep.subr.bf16.mxu0 0
        %2848 = vmatpush1.bf16.xpose.msra.mxu0 0
        %2849 = vmatprep.subr.bf16.mxu0 0
        %2850 = vmatpush1.bf16.xpose.msra.mxu0 0
        %2851 = vmatprep.subr.bf16.mxu0 0
        %2852 = vmatpush1.bf16.xpose.msra.mxu0 0
        %2853 = vmatprep.subr.bf16.mxu0 0
        %2854 = vmatpush1.bf16.xpose.msra.mxu0 0
        %2855 = vmatprep.subr.bf16.mxu0 0
        %2856 = vmatpush1.bf16.xpose.msra.mxu0 0
        %2857 = vmatprep.subr.bf16.mxu0 0
        %2858 = vmatpush1.bf16.xpose.msra.mxu0 0
        %2859 = vmatprep.subr.bf16.mxu0 0
        %2860 = vmatpush1.bf16.xpose.msra.mxu0 0
        %2861 = vmatprep.subr.bf16.mxu0 0
        %2862 = vmatpush1.bf16.xpose.msra.mxu0 0
        %2863 = vmatprep.subr.bf16.mxu0 0
        %2864 = vmatpush1.bf16.xpose.msra.mxu0 0
        %2865 = vmatprep.subr.bf16.mxu0 0
        %2866 = vmatpush1.bf16.xpose.msra.mxu0 0
        %2867 = vmatprep.subr.bf16.mxu0 0
        %2868 = vmatpush1.bf16.xpose.msra.mxu0 0
        %2869 = vmatprep.subr.bf16.mxu0 0
        %2870 = vmatpush1.bf16.xpose.msra.mxu0 0
        %2871 = vmatprep.mubr.bf16.mxu0 0
        %2872 = vmatmul.mubr.bf16.gmra.mrb[0].mxu0 %v2834
        %v2873 = vpop.f32.mrb[0].mxu0
        %v2874 = vadd.f32 %v2465, %v2873
        %v2875 = vpop.f32.mrb[0].mxu0
        %v2876 = vpop.f32.mrb[0].mxu0
        %v2877 = vpop.f32.mrb[0].mxu0
        %2878 = vdwg.mxu0
        %2879 = vrot.lane.b32.xlu0 %v2606, 112
        %v2880 = vpop.permute.xlu0 %2879
        %2881 = vrot.lane.b32.xlu0 %v2606, 80
        %v2882 = vpop.permute.xlu0 %2881
        %v2884 = vsel %vm2610, %v2880, 0
        %v2887 = vsel %vm2610, %v2882, 0
        %2889 = vmatprep.subr.bf16.mxu0 0
        %2890 = vmatpush1.bf16.xpose.msra.mxu0 %v2887
        %2891 = vmatprep.subr.bf16.mxu0 0
        %2892 = vmatpush1.bf16.xpose.msra.mxu0 0
        %2893 = vmatprep.subr.bf16.mxu0 0
        %2894 = vmatpush1.bf16.xpose.msra.mxu0 0
        %2895 = vmatprep.subr.bf16.mxu0 0
        %2896 = vmatpush1.bf16.xpose.msra.mxu0 0
        %2897 = vmatprep.subr.bf16.mxu0 0
        %2898 = vmatpush1.bf16.xpose.msra.mxu0 0
        %2899 = vmatprep.subr.bf16.mxu0 0
        %2900 = vmatpush1.bf16.xpose.msra.mxu0 0
        %2901 = vmatprep.subr.bf16.mxu0 0
        %2902 = vmatpush1.bf16.xpose.msra.mxu0 0
        %2903 = vmatprep.subr.bf16.mxu0 0
        %2904 = vmatpush1.bf16.xpose.msra.mxu0 0
        %2905 = vmatprep.subr.bf16.mxu0 0
        %2906 = vmatpush1.bf16.xpose.msra.mxu0 0
        %2907 = vmatprep.subr.bf16.mxu0 0
        %2908 = vmatpush1.bf16.xpose.msra.mxu0 0
        %2909 = vmatprep.subr.bf16.mxu0 0
        %2910 = vmatpush1.bf16.xpose.msra.mxu0 0
        %2911 = vmatprep.subr.bf16.mxu0 0
        %2912 = vmatpush1.bf16.xpose.msra.mxu0 0
        %2913 = vmatprep.subr.bf16.mxu0 0
        %2914 = vmatpush1.bf16.xpose.msra.mxu0 0
        %2915 = vmatprep.subr.bf16.mxu0 0
        %2916 = vmatpush1.bf16.xpose.msra.mxu0 0
        %2917 = vmatprep.subr.bf16.mxu0 0
        %2918 = vmatpush1.bf16.xpose.msra.mxu0 0
        %2919 = vmatprep.subr.bf16.mxu0 0
        %2920 = vmatpush1.bf16.xpose.msra.mxu0 0
        %2921 = vmatprep.mubr.bf16.mxu0 0
        %2922 = vmatmul.mubr.bf16.gmra.mrb[0].mxu0 %v2884
        %v2923 = vpop.f32.mrb[0].mxu0
        %v2924 = vadd.f32 %v2465, %v2923
        %v2925 = vpop.f32.mrb[0].mxu0
        %v2926 = vpop.f32.mrb[0].mxu0
        %v2927 = vpop.f32.mrb[0].mxu0
        %2928 = vdwg.mxu0
        %v2929 = vsel %vm2706, %v2874, -inf
        %2930 = vmax.xlane.f32.xlu0 %v2929
        %v2931 = vpop.xlane.xlu0 %2930
        %v2932 = vsel %vm2706, %v2924, -inf
        %2933 = vmax.xlane.f32.xlu0 %v2932
        %v2934 = vpop.xlane.xlu0 %2933
        %v2935 = vsub.f32 %v2874, %v2931
        %v2936 = vsub.f32 %v2924, %v2934
        %v2937 = vmul.f32 %v2935, 1.442695
        %v2938 = vpow.pop %v2937
        %v2939 = vmul.f32 %v2936, 1.442695
        %v2940 = vpow.pop %v2939
        %v2941 = vsel %vm2706, %v2938, 0.0
        %2942 = vadd.xlane.f32.xlu0 %v2941
        %v2943 = vpop.xlane.xlu0 %2942
        %v2944 = vsel %vm2706, %v2940, 0.0
        %2945 = vadd.xlane.f32.xlu0 %v2944
        %v2946 = vpop.xlane.xlu0 %2945
        %v2947 = vrcp.pop %v2943
        %v2948 = vrcp.pop %v2946
        %v2949 = vmul.f32 %v2938, %v2947
        %v2950 = vmul.f32 %v2940, %v2948
        %v2951 = vpack.c.bf16 %v2949, %v2949
        %v2952 = vpack.c.bf16 %v2950, %v2950
        %2953 = vrot.lane.b32.xlu0 %v2605, 48
        %v2954 = vpop.permute.xlu0 %2953
        %v2956 = vsel %vm2706, %v2951, 0
        %v2959 = vsel %vm2736, %v2954, 0
        %2961 = vmatprep.subr.bf16.mxu0 0
        %2962 = vmatpush1.bf16.msra.mxu0 %v2959
        %2963 = vmatprep.subr.bf16.mxu0 0
        %2964 = vmatpush1.bf16.msra.mxu0 0
        %2965 = vmatprep.subr.bf16.mxu0 0
        %2966 = vmatpush1.bf16.msra.mxu0 0
        %2967 = vmatprep.subr.bf16.mxu0 0
        %2968 = vmatpush1.bf16.msra.mxu0 0
        %2969 = vmatprep.subr.bf16.mxu0 0
        %2970 = vmatpush1.bf16.msra.mxu0 0
        %2971 = vmatprep.subr.bf16.mxu0 0
        %2972 = vmatpush1.bf16.msra.mxu0 0
        %2973 = vmatprep.subr.bf16.mxu0 0
        %2974 = vmatpush1.bf16.msra.mxu0 0
        %2975 = vmatprep.subr.bf16.mxu0 0
        %2976 = vmatpush1.bf16.msra.mxu0 0
        %2977 = vmatprep.subr.bf16.mxu0 0
        %2978 = vmatpush1.bf16.msra.mxu0 0
        %2979 = vmatprep.subr.bf16.mxu0 0
        %2980 = vmatpush1.bf16.msra.mxu0 0
        %2981 = vmatprep.subr.bf16.mxu0 0
        %2982 = vmatpush1.bf16.msra.mxu0 0
        %2983 = vmatprep.subr.bf16.mxu0 0
        %2984 = vmatpush1.bf16.msra.mxu0 0
        %2985 = vmatprep.subr.bf16.mxu0 0
        %2986 = vmatpush1.bf16.msra.mxu0 0
        %2987 = vmatprep.subr.bf16.mxu0 0
        %2988 = vmatpush1.bf16.msra.mxu0 0
        %2989 = vmatprep.subr.bf16.mxu0 0
        %2990 = vmatpush1.bf16.msra.mxu0 0
        %2991 = vmatprep.subr.bf16.mxu0 0
        %2992 = vmatpush1.bf16.msra.mxu0 0
        %2993 = vmatprep.mubr.bf16.mxu0 0
        %2994 = vmatmul.mubr.bf16.gmra.mrb[0].mxu0 %v2956
        %v2995 = vpop.f32.mrb[0].mxu0
        %v2996 = vadd.f32 0.0, %v2995
        %v2997 = vpop.f32.mrb[0].mxu0
        %v2998 = vpop.f32.mrb[0].mxu0
        %v2999 = vpop.f32.mrb[0].mxu0
        %3000 = vdwg.mxu0
        %3001 = vrot.lane.b32.xlu0 %v2606, 48
        %v3002 = vpop.permute.xlu0 %3001
        %v3004 = vsel %vm2706, %v2952, 0
        %v3007 = vsel %vm2736, %v3002, 0
        %3009 = vmatprep.subr.bf16.mxu0 0
        %3010 = vmatpush1.bf16.msra.mxu0 %v3007
        %3011 = vmatprep.subr.bf16.mxu0 0
        %3012 = vmatpush1.bf16.msra.mxu0 0
        %3013 = vmatprep.subr.bf16.mxu0 0
        %3014 = vmatpush1.bf16.msra.mxu0 0
        %3015 = vmatprep.subr.bf16.mxu0 0
        %3016 = vmatpush1.bf16.msra.mxu0 0
        %3017 = vmatprep.subr.bf16.mxu0 0
        %3018 = vmatpush1.bf16.msra.mxu0 0
        %3019 = vmatprep.subr.bf16.mxu0 0
        %3020 = vmatpush1.bf16.msra.mxu0 0
        %3021 = vmatprep.subr.bf16.mxu0 0
        %3022 = vmatpush1.bf16.msra.mxu0 0
        %3023 = vmatprep.subr.bf16.mxu0 0
        %3024 = vmatpush1.bf16.msra.mxu0 0
        %3025 = vmatprep.subr.bf16.mxu0 0
        %3026 = vmatpush1.bf16.msra.mxu0 0
        %3027 = vmatprep.subr.bf16.mxu0 0
        %3028 = vmatpush1.bf16.msra.mxu0 0
        %3029 = vmatprep.subr.bf16.mxu0 0
        %3030 = vmatpush1.bf16.msra.mxu0 0
        %3031 = vmatprep.subr.bf16.mxu0 0
        %3032 = vmatpush1.bf16.msra.mxu0 0
        %3033 = vmatprep.subr.bf16.mxu0 0
        %3034 = vmatpush1.bf16.msra.mxu0 0
        %3035 = vmatprep.subr.bf16.mxu0 0
        %3036 = vmatpush1.bf16.msra.mxu0 0
        %3037 = vmatprep.subr.bf16.mxu0 0
        %3038 = vmatpush1.bf16.msra.mxu0 0
        %3039 = vmatprep.subr.bf16.mxu0 0
        %3040 = vmatpush1.bf16.msra.mxu0 0
        %3041 = vmatprep.mubr.bf16.mxu0 0
        %3042 = vmatmul.mubr.bf16.gmra.mrb[0].mxu0 %v3004
        %v3043 = vpop.f32.mrb[0].mxu0
        %v3044 = vadd.f32 0.0, %v3043
        %v3045 = vpop.f32.mrb[0].mxu0
        %v3046 = vpop.f32.mrb[0].mxu0
        %v3047 = vpop.f32.mrb[0].mxu0
        %3048 = vdwg.mxu0
        %v3049 = vpack.c.bf16 %v3044, %v2996
        %v3052 = vunpack.c.l.b16 %v2485
        %v3053 = vunpack.c.l.b16 %v2486
        %v3054 = vpack.c.b16 %v3053, %v3052
        %v3057 = vsel %vm2610, %v3049, 0
        %3059 = vmatprep.subr.bf16.mxu0 0
        %3060 = vmatpush1.bf16.msra.mxu0 %v3054
        %3061 = vmatprep.subr.bf16.mxu0 0
        %3062 = vmatpush1.bf16.msra.mxu0 0
        %3063 = vmatprep.subr.bf16.mxu0 0
        %3064 = vmatpush1.bf16.msra.mxu0 0
        %3065 = vmatprep.subr.bf16.mxu0 0
        %3066 = vmatpush1.bf16.msra.mxu0 0
        %3067 = vmatprep.subr.bf16.mxu0 0
        %3068 = vmatpush1.bf16.msra.mxu0 0
        %3069 = vmatprep.subr.bf16.mxu0 0
        %3070 = vmatpush1.bf16.msra.mxu0 0
        %3071 = vmatprep.subr.bf16.mxu0 0
        %3072 = vmatpush1.bf16.msra.mxu0 0
        %3073 = vmatprep.subr.bf16.mxu0 0
        %3074 = vmatpush1.bf16.msra.mxu0 0
        %3075 = vmatprep.subr.bf16.mxu0 0
        %3076 = vmatpush1.bf16.msra.mxu0 0
        %3077 = vmatprep.subr.bf16.mxu0 0
        %3078 = vmatpush1.bf16.msra.mxu0 0
        %3079 = vmatprep.subr.bf16.mxu0 0
        %3080 = vmatpush1.bf16.msra.mxu0 0
        %3081 = vmatprep.subr.bf16.mxu0 0
        %3082 = vmatpush1.bf16.msra.mxu0 0
        %3083 = vmatprep.subr.bf16.mxu0 0
        %3084 = vmatpush1.bf16.msra.mxu0 0
        %3085 = vmatprep.subr.bf16.mxu0 0
        %3086 = vmatpush1.bf16.msra.mxu0 0
        %3087 = vmatprep.subr.bf16.mxu0 0
        %3088 = vmatpush1.bf16.msra.mxu0 0
        %3089 = vmatprep.subr.bf16.mxu0 0
        %3090 = vmatpush1.bf16.msra.mxu0 0
        %3091 = vmatprep.mubr.bf16.mxu0 0
        %3092 = vmatmul.mubr.bf16.gmra.mrb[0].mxu0 %v3057
        %v3093 = vpop.f32.mrb[0].mxu0
        %v3094 = vadd.f32 0.0, %v3093
        %v3095 = vpop.f32.mrb[0].mxu0
        %v3096 = vpop.f32.mrb[0].mxu0
        %v3097 = vadd.f32 0.0, %v3096
        %v3098 = vpop.f32.mrb[0].mxu0
        %3099 = vdwg.mxu0
        %v3102 = vunpack.c.l.b16 %v2483
        %v3103 = vunpack.c.l.b16 %v2484
        %v3104 = vpack.c.b16 %v3103, %v3102
        %v3107 = vsel %vm2610, %v2828, 0
        %3109 = vmatprep.subr.bf16.mxu0 0
        %3110 = vmatpush1.bf16.msra.mxu0 %v3104
        %3111 = vmatprep.subr.bf16.mxu0 0
        %3112 = vmatpush1.bf16.msra.mxu0 0
        %3113 = vmatprep.subr.bf16.mxu0 0
        %3114 = vmatpush1.bf16.msra.mxu0 0
        %3115 = vmatprep.subr.bf16.mxu0 0
        %3116 = vmatpush1.bf16.msra.mxu0 0
        %3117 = vmatprep.subr.bf16.mxu0 0
        %3118 = vmatpush1.bf16.msra.mxu0 0
        %3119 = vmatprep.subr.bf16.mxu0 0
        %3120 = vmatpush1.bf16.msra.mxu0 0
        %3121 = vmatprep.subr.bf16.mxu0 0
        %3122 = vmatpush1.bf16.msra.mxu0 0
        %3123 = vmatprep.subr.bf16.mxu0 0
        %3124 = vmatpush1.bf16.msra.mxu0 0
        %3125 = vmatprep.subr.bf16.mxu0 0
        %3126 = vmatpush1.bf16.msra.mxu0 0
        %3127 = vmatprep.subr.bf16.mxu0 0
        %3128 = vmatpush1.bf16.msra.mxu0 0
        %3129 = vmatprep.subr.bf16.mxu0 0
        %3130 = vmatpush1.bf16.msra.mxu0 0
        %3131 = vmatprep.subr.bf16.mxu0 0
        %3132 = vmatpush1.bf16.msra.mxu0 0
        %3133 = vmatprep.subr.bf16.mxu0 0
        %3134 = vmatpush1.bf16.msra.mxu0 0
        %3135 = vmatprep.subr.bf16.mxu0 0
        %3136 = vmatpush1.bf16.msra.mxu0 0
        %3137 = vmatprep.subr.bf16.mxu0 0
        %3138 = vmatpush1.bf16.msra.mxu0 0
        %3139 = vmatprep.subr.bf16.mxu0 0
        %3140 = vmatpush1.bf16.msra.mxu0 0
        %3141 = vmatprep.mubr.bf16.mxu0 0
        %3142 = vmatmul.mubr.bf16.gmra.mrb[0].mxu0 %v3107
        %v3143 = vpop.f32.mrb[0].mxu0
        %v3144 = vadd.f32 %v3094, %v3143
        %v3145 = vpop.f32.mrb[0].mxu0
        %v3146 = vpop.f32.mrb[0].mxu0
        %v3147 = vadd.f32 %v3097, %v3146
        %v3148 = vpop.f32.mrb[0].mxu0
        %3149 = vdwg.mxu0
        %v3150 = vadd.f32 %v2456, %v3144
        %v3151 = vadd.f32 %v2457, %v3147
        %v3152 = vlaneseq
        %v3153 = vshrl.u32 %v3152, 7
        %v3154 = vsub.s32 0, %v3153
        %v3155 = vrot.slane %v2469, %v3154
        %v3156 = vadd.f32 %v3150, %v3155
        %v3157 = vadd.f32 %v3151, %v3155
        %v3158 = vsel %vm2504, %v3156, 0.0
        %3159 = vadd.xlane.f32.xlu0 %v3158
        %v3160 = vpop.xlane.xlu0 %3159
        %v3161 = vsel %vm2504, %v3157, 0.0
        %3162 = vadd.xlane.f32.xlu0 %v3161
        %v3163 = vpop.xlane.xlu0 %3162
        %v3164 = vmul.f32 %v3160, %v2511
        %v3165 = vmul.f32 %v3163, %v2511
        %v3166 = vsub.f32 %v3156, %v3164
        %v3167 = vsub.f32 %v3157, %v3165
        %v3168 = vmul.f32 %v3166, %v3166
        %v3169 = vmul.f32 %v3167, %v3167
        %v3170 = vsel %vm2504, %v3168, 0.0
        %3171 = vadd.xlane.f32.xlu0 %v3170
        %v3172 = vpop.xlane.xlu0 %3171
        %v3173 = vsel %vm2504, %v3169, 0.0
        %3174 = vadd.xlane.f32.xlu0 %v3173
        %v3175 = vpop.xlane.xlu0 %3174
        %v3176 = vmul.f32 %v3172, %v2511
        %v3177 = vmul.f32 %v3175, %v2511
        %v3178 = vadd.f32 %v3176, 1e-05
        %v3179 = vadd.f32 %v3177, 1e-05
        %v3180 = vrsqrt.pop %v3178
        %v3181 = vrsqrt.pop %v3179
        %v3182 = vmul.f32 %v3166, %v3180
        %v3183 = vmul.f32 %v3167, %v3181
        %v3184 = vlaneseq
        %v3185 = vshrl.u32 %v3184, 7
        %v3186 = vsub.s32 0, %v3185
        %v3187 = vrot.slane %v2470, %v3186
        %v3188 = vmul.f32 %v3182, %v3187
        %v3189 = vmul.f32 %v3183, %v3187
        %v3190 = vlaneseq
        %v3191 = vshrl.u32 %v3190, 7
        %v3192 = vsub.s32 0, %v3191
        %v3193 = vrot.slane %v2471, %v3192
        %v3194 = vadd.f32 %v3188, %v3193
        %v3195 = vadd.f32 %v3189, %v3193
        %v3196 = vpack.c.bf16 %v3195, %v3194
        %v3197 = vlaneseq
        %v3198 = vshrl.u32 %v3197, 7
        %v3199 = vsub.s32 0, %v3198
        %v3200 = vrot.slane %v2472, %v3199
        %v3205 = vunpack.c.l.b16 %v2479
        %v3206 = vunpack.c.l.b16 %v2480
        %v3207 = vunpack.c.l.b16 %v2481
        %v3208 = vunpack.c.l.b16 %v2482
        %v3209 = vpack.c.b16 %v3206, %v3205
        %v3210 = vpack.c.b16 %v3208, %v3207
        %v3214 = vsel %vm2504, %v3196, 0
        %3216 = vmatprep.subr.bf16.mxu0 0
        %3217 = vmatpush1.bf16.msra.mxu0 %v3209
        %3218 = vmatprep.subr.bf16.mxu0 0
        %3219 = vmatpush1.bf16.msra.mxu0 %v3210
        %3220 = vmatprep.subr.bf16.mxu0 0
        %3221 = vmatpush1.bf16.msra.mxu0 0
        %3222 = vmatprep.subr.bf16.mxu0 0
        %3223 = vmatpush1.bf16.msra.mxu0 0
        %3224 = vmatprep.subr.bf16.mxu0 0
        %3225 = vmatpush1.bf16.msra.mxu0 0
        %3226 = vmatprep.subr.bf16.mxu0 0
        %3227 = vmatpush1.bf16.msra.mxu0 0
        %3228 = vmatprep.subr.bf16.mxu0 0
        %3229 = vmatpush1.bf16.msra.mxu0 0
        %3230 = vmatprep.subr.bf16.mxu0 0
        %3231 = vmatpush1.bf16.msra.mxu0 0
        %3232 = vmatprep.subr.bf16.mxu0 0
        %3233 = vmatpush1.bf16.msra.mxu0 0
        %3234 = vmatprep.subr.bf16.mxu0 0
        %3235 = vmatpush1.bf16.msra.mxu0 0
        %3236 = vmatprep.subr.bf16.mxu0 0
        %3237 = vmatpush1.bf16.msra.mxu0 0
        %3238 = vmatprep.subr.bf16.mxu0 0
        %3239 = vmatpush1.bf16.msra.mxu0 0
        %3240 = vmatprep.subr.bf16.mxu0 0
        %3241 = vmatpush1.bf16.msra.mxu0 0
        %3242 = vmatprep.subr.bf16.mxu0 0
        %3243 = vmatpush1.bf16.msra.mxu0 0
        %3244 = vmatprep.subr.bf16.mxu0 0
        %3245 = vmatpush1.bf16.msra.mxu0 0
        %3246 = vmatprep.subr.bf16.mxu0 0
        %3247 = vmatpush1.bf16.msra.mxu0 0
        %3248 = vmatprep.mubr.bf16.mxu0 0
        %3249 = vmatmul.mubr.bf16.gmra.mrb[0].mxu0 %v3214
        %v3250 = vpop.f32.mrb[0].mxu0
        %v3251 = vadd.f32 %v3200, %v3250
        %v3252 = vpop.f32.mrb[0].mxu0
        %v3253 = vpop.f32.mrb[0].mxu0
        %v3254 = vadd.f32 %v3200, %v3253
        %v3255 = vpop.f32.mrb[0].mxu0
        %3256 = vdwg.mxu0
        %v3257 = vmul.f32 %v3251, %v3251
        %v3258 = vmul.f32 %v3254, %v3254
        %v3259 = vmul.f32 %v3251, %v3257
        %v3260 = vmul.f32 %v3254, %v3258
        %v3261 = vmul.f32 %v3259, 0.044715
        %v3262 = vmul.f32 %v3260, 0.044715
        %v3263 = vadd.f32 %v3251, %v3261
        %v3264 = vadd.f32 %v3254, %v3262
        %v3265 = vmul.f32 %v3263, 0.7978846
        %v3266 = vmul.f32 %v3264, 0.7978846
        %v3267 = vtanh.pop %v3265
        %v3268 = vtanh.pop %v3266
        %v3269 = vadd.f32 %v3267, 1.0
        %v3270 = vadd.f32 %v3268, 1.0
        %v3271 = vmul.f32 %v3269, 0.5
        %v3272 = vmul.f32 %v3270, 0.5
        %v3273 = vmul.f32 %v3251, %v3271
        %v3274 = vmul.f32 %v3254, %v3272
        %v3275 = vpack.c.bf16 %v3274, %v3273
        %v3276 = vlaneseq
        %v3277 = vshrl.u32 %v3276, 7
        %v3278 = vsub.s32 0, %v3277
        %v3279 = vrot.slane %v2473, %v3278
        %v3296 = vunpack.c.l.b16 %v2488
        %v3297 = vunpack.c.l.b16 %v2489
        %v3298 = vunpack.c.l.b16 %v2490
        %v3299 = vunpack.c.l.b16 %v2491
        %v3300 = vunpack.c.l.b16 %v2492
        %v3301 = vunpack.c.l.b16 %v2493
        %v3302 = vunpack.c.l.b16 %v2494
        %v3303 = vunpack.c.l.b16 %v2495
        %v3304 = vunpack.c.l.b16 %v2496
        %v3305 = vunpack.c.l.b16 %v2497
        %v3306 = vunpack.c.l.b16 %v2498
        %v3307 = vunpack.c.l.b16 %v2499
        %v3308 = vunpack.c.l.b16 %v2500
        %v3309 = vunpack.c.l.b16 %v2501
        %v3310 = vunpack.c.l.b16 %v2502
        %v3311 = vunpack.c.l.b16 %v2503
        %v3312 = vpack.c.b16 %v3297, %v3296
        %v3313 = vpack.c.b16 %v3299, %v3298
        %v3314 = vpack.c.b16 %v3301, %v3300
        %v3315 = vpack.c.b16 %v3303, %v3302
        %v3316 = vpack.c.b16 %v3305, %v3304
        %v3317 = vpack.c.b16 %v3307, %v3306
        %v3318 = vpack.c.b16 %v3309, %v3308
        %v3319 = vpack.c.b16 %v3311, %v3310
        %3328 = vmatprep.subr.bf16.mxu0 0
        %3329 = vmatpush1.bf16.msra.mxu0 %v3312
        %3330 = vmatprep.subr.bf16.mxu0 0
        %3331 = vmatpush1.bf16.msra.mxu0 %v3313
        %3332 = vmatprep.subr.bf16.mxu0 0
        %3333 = vmatpush1.bf16.msra.mxu0 %v3314
        %3334 = vmatprep.subr.bf16.mxu0 0
        %3335 = vmatpush1.bf16.msra.mxu0 %v3315
        %3336 = vmatprep.subr.bf16.mxu0 0
        %3337 = vmatpush1.bf16.msra.mxu0 %v3316
        %3338 = vmatprep.subr.bf16.mxu0 0
        %3339 = vmatpush1.bf16.msra.mxu0 %v3317
        %3340 = vmatprep.subr.bf16.mxu0 0
        %3341 = vmatpush1.bf16.msra.mxu0 %v3318
        %3342 = vmatprep.subr.bf16.mxu0 0
        %3343 = vmatpush1.bf16.msra.mxu0 %v3319
        %3344 = vmatprep.subr.bf16.mxu0 0
        %3345 = vmatpush1.bf16.msra.mxu0 0
        %3346 = vmatprep.subr.bf16.mxu0 0
        %3347 = vmatpush1.bf16.msra.mxu0 0
        %3348 = vmatprep.subr.bf16.mxu0 0
        %3349 = vmatpush1.bf16.msra.mxu0 0
        %3350 = vmatprep.subr.bf16.mxu0 0
        %3351 = vmatpush1.bf16.msra.mxu0 0
        %3352 = vmatprep.subr.bf16.mxu0 0
        %3353 = vmatpush1.bf16.msra.mxu0 0
        %3354 = vmatprep.subr.bf16.mxu0 0
        %3355 = vmatpush1.bf16.msra.mxu0 0
        %3356 = vmatprep.subr.bf16.mxu0 0
        %3357 = vmatpush1.bf16.msra.mxu0 0
        %3358 = vmatprep.subr.bf16.mxu0 0
        %3359 = vmatpush1.bf16.msra.mxu0 0
        %3360 = vmatprep.mubr.bf16.mxu0 0
        %3361 = vmatmul.mubr.bf16.gmra.mrb[0].mxu0 %v3275
        %v3362 = vpop.f32.mrb[0].mxu0
        %v3363 = vadd.f32 %v3279, %v3362
        %v3364 = vpop.f32.mrb[0].mxu0
        %v3365 = vpop.f32.mrb[0].mxu0
        %v3366 = vadd.f32 %v3279, %v3365
        %v3367 = vpop.f32.mrb[0].mxu0
        %3368 = vdwg.mxu0
        %v3369 = vadd.f32 %v3156, %v3363
        %v3370 = vadd.f32 %v3157, %v3366
        %v3371 = vld [vmem:[%s4 + $0x2c] sm:$0x1]
        %v3372 = vld [vmem:[%s4 + $0x2d] sm:$0x1]
        %v3373 = vld [vmem:[%s4 + $0x2e] sm:$0x1]
        %v3374 = vld [vmem:[%s4 + $0x2f] sm:$0x1]
        %v3375 = vld [vmem:[%s4 + $0x30] sm:$0x1]
        %v3376 = vld [vmem:[%s4 + $0x31] sm:$0x1]
        %v3377 = vld [vmem:[%s4 + $0x32] sm:$0x1]
        %v3378 = vld [vmem:[%s4 + $0x33] sm:$0x1]
        %s3379 = scalar_lea.vmem %s6, 144
        %v3380 = vld [vmem:[%s3379] sm:$0xf]
        %v3381 = vld [vmem:[%s3379 + $0xc] sm:$0xf]
        %v3382 = vld [vmem:[%s3379 + $0x18] sm:$0xf]
        %v3383 = vld [vmem:[%s3379 + $0x24] sm:$0xf]
        %v3384 = vld [vmem:[%s3379 + $0x4] sm:$0xf]
        %v3385 = vld [vmem:[%s3379 + $0x10] sm:$0xf]
        %v3386 = vld [vmem:[%s3379 + $0x1c] sm:$0xf]
        %v3387 = vld [vmem:[%s3379 + $0x28] sm:$0xf]
        %v3388 = vld [vmem:[%s3379 + $0x8] sm:$0xf]
        %v3389 = vld [vmem:[%s3379 + $0x14] sm:$0xf]
        %v3390 = vld [vmem:[%s3379 + $0x20] sm:$0xf]
        %v3391 = vld [vmem:[%s3379 + $0x2c] sm:$0xf]
        %s3392 = scalar_lea.vmem %s7, 192
        %v3393 = vld [vmem:[%s3392] sm:$0xf]
        %v3394 = vld [vmem:[%s3392 + $0x4] sm:$0xf]
        %v3395 = vld [vmem:[%s3392 + $0x8] sm:$0xf]
        %v3396 = vld [vmem:[%s3392 + $0xc] sm:$0xf]
        %v3397 = vld [vmem:[%s3392 + $0x10] sm:$0xf]
        %v3398 = vld [vmem:[%s3392 + $0x14] sm:$0xf]
        %v3399 = vld [vmem:[%s3392 + $0x18] sm:$0xf]
        %v3400 = vld [vmem:[%s3392 + $0x1c] sm:$0xf]
        %v3401 = vld [vmem:[%s3392 + $0x20] sm:$0xf]
        %v3402 = vld [vmem:[%s3392 + $0x24] sm:$0xf]
        %v3403 = vld [vmem:[%s3392 + $0x28] sm:$0xf]
        %v3404 = vld [vmem:[%s3392 + $0x2c] sm:$0xf]
        %v3405 = vld [vmem:[%s3392 + $0x30] sm:$0xf]
        %v3406 = vld [vmem:[%s3392 + $0x34] sm:$0xf]
        %v3407 = vld [vmem:[%s3392 + $0x38] sm:$0xf]
        %v3408 = vld [vmem:[%s3392 + $0x3c] sm:$0xf]
        %v3409 = vsel %vm2504, %v3369, 0.0
        %3410 = vadd.xlane.f32.xlu0 %v3409
        %v3411 = vpop.xlane.xlu0 %3410
        %v3412 = vsel %vm2504, %v3370, 0.0
        %3413 = vadd.xlane.f32.xlu0 %v3412
        %v3414 = vpop.xlane.xlu0 %3413
        %v3415 = vmul.f32 %v3411, %v2511
        %v3416 = vmul.f32 %v3414, %v2511
        %v3417 = vsub.f32 %v3369, %v3415
        %v3418 = vsub.f32 %v3370, %v3416
        %v3419 = vmul.f32 %v3417, %v3417
        %v3420 = vmul.f32 %v3418, %v3418
        %v3421 = vsel %vm2504, %v3419, 0.0
        %3422 = vadd.xlane.f32.xlu0 %v3421
        %v3423 = vpop.xlane.xlu0 %3422
        %v3424 = vsel %vm2504, %v3420, 0.0
        %3425 = vadd.xlane.f32.xlu0 %v3424
        %v3426 = vpop.xlane.xlu0 %3425
        %v3427 = vmul.f32 %v3423, %v2511
        %v3428 = vmul.f32 %v3426, %v2511
        %v3429 = vadd.f32 %v3427, 1e-05
        %v3430 = vadd.f32 %v3428, 1e-05
        %v3431 = vrsqrt.pop %v3429
        %v3432 = vrsqrt.pop %v3430
        %v3433 = vmul.f32 %v3417, %v3431
        %v3434 = vmul.f32 %v3418, %v3432
        %v3435 = vlaneseq
        %v3436 = vshrl.u32 %v3435, 7
        %v3437 = vsub.s32 0, %v3436
        %v3438 = vrot.slane %v3371, %v3437
        %v3439 = vmul.f32 %v3433, %v3438
        %v3440 = vmul.f32 %v3434, %v3438
        %v3441 = vlaneseq
        %v3442 = vshrl.u32 %v3441, 7
        %v3443 = vsub.s32 0, %v3442
        %v3444 = vrot.slane %v3372, %v3443
        %v3445 = vadd.f32 %v3439, %v3444
        %v3446 = vadd.f32 %v3440, %v3444
        %v3447 = vpack.c.bf16 %v3446, %v3445
        %v3448 = vlaneseq
        %v3449 = vshrl.u32 %v3448, 7
        %v3450 = vsub.s32 0, %v3449
        %v3451 = vrot.slane %v3373, %v3450
        %v3456 = vunpack.c.l.b16 %v3380
        %v3457 = vunpack.c.l.b16 %v3381
        %v3458 = vunpack.c.l.b16 %v3382
        %v3459 = vunpack.c.l.b16 %v3383
        %v3460 = vpack.c.b16 %v3457, %v3456
        %v3461 = vpack.c.b16 %v3459, %v3458
        %v3465 = vsel %vm2504, %v3447, 0
        %3467 = vmatprep.subr.bf16.mxu0 0
        %3468 = vmatpush1.bf16.msra.mxu0 %v3460
        %3469 = vmatprep.subr.bf16.mxu0 0
        %3470 = vmatpush1.bf16.msra.mxu0 %v3461
        %3471 = vmatprep.subr.bf16.mxu0 0
        %3472 = vmatpush1.bf16.msra.mxu0 0
        %3473 = vmatprep.subr.bf16.mxu0 0
        %3474 = vmatpush1.bf16.msra.mxu0 0
        %3475 = vmatprep.subr.bf16.mxu0 0
        %3476 = vmatpush1.bf16.msra.mxu0 0
        %3477 = vmatprep.subr.bf16.mxu0 0
        %3478 = vmatpush1.bf16.msra.mxu0 0
        %3479 = vmatprep.subr.bf16.mxu0 0
        %3480 = vmatpush1.bf16.msra.mxu0 0
        %3481 = vmatprep.subr.bf16.mxu0 0
        %3482 = vmatpush1.bf16.msra.mxu0 0
        %3483 = vmatprep.subr.bf16.mxu0 0
        %3484 = vmatpush1.bf16.msra.mxu0 0
        %3485 = vmatprep.subr.bf16.mxu0 0
        %3486 = vmatpush1.bf16.msra.mxu0 0
        %3487 = vmatprep.subr.bf16.mxu0 0
        %3488 = vmatpush1.bf16.msra.mxu0 0
        %3489 = vmatprep.subr.bf16.mxu0 0
        %3490 = vmatpush1.bf16.msra.mxu0 0
        %3491 = vmatprep.subr.bf16.mxu0 0
        %3492 = vmatpush1.bf16.msra.mxu0 0
        %3493 = vmatprep.subr.bf16.mxu0 0
        %3494 = vmatpush1.bf16.msra.mxu0 0
        %3495 = vmatprep.subr.bf16.mxu0 0
        %3496 = vmatpush1.bf16.msra.mxu0 0
        %3497 = vmatprep.subr.bf16.mxu0 0
        %3498 = vmatpush1.bf16.msra.mxu0 0
        %3499 = vmatprep.mubr.bf16.mxu0 0
        %3500 = vmatmul.mubr.bf16.gmra.mrb[0].mxu0 %v3465
        %v3501 = vpop.f32.mrb[0].mxu0
        %v3502 = vadd.f32 %v3451, %v3501
        %v3503 = vpop.f32.mrb[0].mxu0
        %v3504 = vpop.f32.mrb[0].mxu0
        %v3505 = vadd.f32 %v3451, %v3504
        %v3506 = vpop.f32.mrb[0].mxu0
        %3507 = vdwg.mxu0
        %v3508 = vpack.c.bf16 %v3502, %v3502
        %v3509 = vpack.c.bf16 %v3505, %v3505
        %3511 = vrot.lane.b32.xlu0 %v3508, 96
        %v3512 = vpop.permute.xlu0 %3511
        %v3514 = vsel %vm2610, %v3508, 0
        %v3517 = vsel %vm2610, %v3512, 0
        %3519 = vmatprep.subr.bf16.mxu0 0
        %3520 = vmatpush1.bf16.xpose.msra.mxu0 %v3517
        %3521 = vmatprep.subr.bf16.mxu0 0
        %3522 = vmatpush1.bf16.xpose.msra.mxu0 0
        %3523 = vmatprep.subr.bf16.mxu0 0
        %3524 = vmatpush1.bf16.xpose.msra.mxu0 0
        %3525 = vmatprep.subr.bf16.mxu0 0
        %3526 = vmatpush1.bf16.xpose.msra.mxu0 0
        %3527 = vmatprep.subr.bf16.mxu0 0
        %3528 = vmatpush1.bf16.xpose.msra.mxu0 0
        %3529 = vmatprep.subr.bf16.mxu0 0
        %3530 = vmatpush1.bf16.xpose.msra.mxu0 0
        %3531 = vmatprep.subr.bf16.mxu0 0
        %3532 = vmatpush1.bf16.xpose.msra.mxu0 0
        %3533 = vmatprep.subr.bf16.mxu0 0
        %3534 = vmatpush1.bf16.xpose.msra.mxu0 0
        %3535 = vmatprep.subr.bf16.mxu0 0
        %3536 = vmatpush1.bf16.xpose.msra.mxu0 0
        %3537 = vmatprep.subr.bf16.mxu0 0
        %3538 = vmatpush1.bf16.xpose.msra.mxu0 0
        %3539 = vmatprep.subr.bf16.mxu0 0
        %3540 = vmatpush1.bf16.xpose.msra.mxu0 0
        %3541 = vmatprep.subr.bf16.mxu0 0
        %3542 = vmatpush1.bf16.xpose.msra.mxu0 0
        %3543 = vmatprep.subr.bf16.mxu0 0
        %3544 = vmatpush1.bf16.xpose.msra.mxu0 0
        %3545 = vmatprep.subr.bf16.mxu0 0
        %3546 = vmatpush1.bf16.xpose.msra.mxu0 0
        %3547 = vmatprep.subr.bf16.mxu0 0
        %3548 = vmatpush1.bf16.xpose.msra.mxu0 0
        %3549 = vmatprep.subr.bf16.mxu0 0
        %3550 = vmatpush1.bf16.xpose.msra.mxu0 0
        %3551 = vmatprep.mubr.bf16.mxu0 0
        %3552 = vmatmul.mubr.bf16.gmra.mrb[0].mxu0 %v3514
        %v3553 = vpop.f32.mrb[0].mxu0
        %v3554 = vadd.f32 %v2465, %v3553
        %v3555 = vpop.f32.mrb[0].mxu0
        %v3556 = vpop.f32.mrb[0].mxu0
        %v3557 = vpop.f32.mrb[0].mxu0
        %3558 = vdwg.mxu0
        %3560 = vrot.lane.b32.xlu0 %v3509, 96
        %v3561 = vpop.permute.xlu0 %3560
        %v3563 = vsel %vm2610, %v3509, 0
        %v3566 = vsel %vm2610, %v3561, 0
        %3568 = vmatprep.subr.bf16.mxu0 0
        %3569 = vmatpush1.bf16.xpose.msra.mxu0 %v3566
        %3570 = vmatprep.subr.bf16.mxu0 0
        %3571 = vmatpush1.bf16.xpose.msra.mxu0 0
        %3572 = vmatprep.subr.bf16.mxu0 0
        %3573 = vmatpush1.bf16.xpose.msra.mxu0 0
        %3574 = vmatprep.subr.bf16.mxu0 0
        %3575 = vmatpush1.bf16.xpose.msra.mxu0 0
        %3576 = vmatprep.subr.bf16.mxu0 0
        %3577 = vmatpush1.bf16.xpose.msra.mxu0 0
        %3578 = vmatprep.subr.bf16.mxu0 0
        %3579 = vmatpush1.bf16.xpose.msra.mxu0 0
        %3580 = vmatprep.subr.bf16.mxu0 0
        %3581 = vmatpush1.bf16.xpose.msra.mxu0 0
        %3582 = vmatprep.subr.bf16.mxu0 0
        %3583 = vmatpush1.bf16.xpose.msra.mxu0 0
        %3584 = vmatprep.subr.bf16.mxu0 0
        %3585 = vmatpush1.bf16.xpose.msra.mxu0 0
        %3586 = vmatprep.subr.bf16.mxu0 0
        %3587 = vmatpush1.bf16.xpose.msra.mxu0 0
        %3588 = vmatprep.subr.bf16.mxu0 0
        %3589 = vmatpush1.bf16.xpose.msra.mxu0 0
        %3590 = vmatprep.subr.bf16.mxu0 0
        %3591 = vmatpush1.bf16.xpose.msra.mxu0 0
        %3592 = vmatprep.subr.bf16.mxu0 0
        %3593 = vmatpush1.bf16.xpose.msra.mxu0 0
        %3594 = vmatprep.subr.bf16.mxu0 0
        %3595 = vmatpush1.bf16.xpose.msra.mxu0 0
        %3596 = vmatprep.subr.bf16.mxu0 0
        %3597 = vmatpush1.bf16.xpose.msra.mxu0 0
        %3598 = vmatprep.subr.bf16.mxu0 0
        %3599 = vmatpush1.bf16.xpose.msra.mxu0 0
        %3600 = vmatprep.mubr.bf16.mxu0 0
        %3601 = vmatmul.mubr.bf16.gmra.mrb[0].mxu0 %v3563
        %v3602 = vpop.f32.mrb[0].mxu0
        %v3603 = vadd.f32 %v2465, %v3602
        %v3604 = vpop.f32.mrb[0].mxu0
        %v3605 = vpop.f32.mrb[0].mxu0
        %v3606 = vpop.f32.mrb[0].mxu0
        %3607 = vdwg.mxu0
        %v3608 = vsel %vm2706, %v3554, -inf
        %3609 = vmax.xlane.f32.xlu0 %v3608
        %v3610 = vpop.xlane.xlu0 %3609
        %v3611 = vsel %vm2706, %v3603, -inf
        %3612 = vmax.xlane.f32.xlu0 %v3611
        %v3613 = vpop.xlane.xlu0 %3612
        %v3614 = vsub.f32 %v3554, %v3610
        %v3615 = vsub.f32 %v3603, %v3613
        %v3616 = vmul.f32 %v3614, 1.442695
        %v3617 = vpow.pop %v3616
        %v3618 = vmul.f32 %v3615, 1.442695
        %v3619 = vpow.pop %v3618
        %v3620 = vsel %vm2706, %v3617, 0.0
        %3621 = vadd.xlane.f32.xlu0 %v3620
        %v3622 = vpop.xlane.xlu0 %3621
        %v3623 = vsel %vm2706, %v3619, 0.0
        %3624 = vadd.xlane.f32.xlu0 %v3623
        %v3625 = vpop.xlane.xlu0 %3624
        %v3626 = vrcp.pop %v3622
        %v3627 = vrcp.pop %v3625
        %v3628 = vmul.f32 %v3617, %v3626
        %v3629 = vmul.f32 %v3619, %v3627
        %v3630 = vpack.c.bf16 %v3628, %v3628
        %v3631 = vpack.c.bf16 %v3629, %v3629
        %3632 = vrot.lane.b32.xlu0 %v3508, 64
        %v3633 = vpop.permute.xlu0 %3632
        %v3635 = vsel %vm2706, %v3630, 0
        %v3638 = vsel %vm2736, %v3633, 0
        %3640 = vmatprep.subr.bf16.mxu0 0
        %3641 = vmatpush1.bf16.msra.mxu0 %v3638
        %3642 = vmatprep.subr.bf16.mxu0 0
        %3643 = vmatpush1.bf16.msra.mxu0 0
        %3644 = vmatprep.subr.bf16.mxu0 0
        %3645 = vmatpush1.bf16.msra.mxu0 0
        %3646 = vmatprep.subr.bf16.mxu0 0
        %3647 = vmatpush1.bf16.msra.mxu0 0
        %3648 = vmatprep.subr.bf16.mxu0 0
        %3649 = vmatpush1.bf16.msra.mxu0 0
        %3650 = vmatprep.subr.bf16.mxu0 0
        %3651 = vmatpush1.bf16.msra.mxu0 0
        %3652 = vmatprep.subr.bf16.mxu0 0
        %3653 = vmatpush1.bf16.msra.mxu0 0
        %3654 = vmatprep.subr.bf16.mxu0 0
        %3655 = vmatpush1.bf16.msra.mxu0 0
        %3656 = vmatprep.subr.bf16.mxu0 0
        %3657 = vmatpush1.bf16.msra.mxu0 0
        %3658 = vmatprep.subr.bf16.mxu0 0
        %3659 = vmatpush1.bf16.msra.mxu0 0
        %3660 = vmatprep.subr.bf16.mxu0 0
        %3661 = vmatpush1.bf16.msra.mxu0 0
        %3662 = vmatprep.subr.bf16.mxu0 0
        %3663 = vmatpush1.bf16.msra.mxu0 0
        %3664 = vmatprep.subr.bf16.mxu0 0
        %3665 = vmatpush1.bf16.msra.mxu0 0
        %3666 = vmatprep.subr.bf16.mxu0 0
        %3667 = vmatpush1.bf16.msra.mxu0 0
        %3668 = vmatprep.subr.bf16.mxu0 0
        %3669 = vmatpush1.bf16.msra.mxu0 0
        %3670 = vmatprep.subr.bf16.mxu0 0
        %3671 = vmatpush1.bf16.msra.mxu0 0
        %3672 = vmatprep.mubr.bf16.mxu0 0
        %3673 = vmatmul.mubr.bf16.gmra.mrb[0].mxu0 %v3635
        %v3674 = vpop.f32.mrb[0].mxu0
        %v3675 = vadd.f32 0.0, %v3674
        %v3676 = vpop.f32.mrb[0].mxu0
        %v3677 = vpop.f32.mrb[0].mxu0
        %v3678 = vpop.f32.mrb[0].mxu0
        %3679 = vdwg.mxu0
        %3680 = vrot.lane.b32.xlu0 %v3509, 64
        %v3681 = vpop.permute.xlu0 %3680
        %v3683 = vsel %vm2706, %v3631, 0
        %v3686 = vsel %vm2736, %v3681, 0
        %3688 = vmatprep.subr.bf16.mxu0 0
        %3689 = vmatpush1.bf16.msra.mxu0 %v3686
        %3690 = vmatprep.subr.bf16.mxu0 0
        %3691 = vmatpush1.bf16.msra.mxu0 0
        %3692 = vmatprep.subr.bf16.mxu0 0
        %3693 = vmatpush1.bf16.msra.mxu0 0
        %3694 = vmatprep.subr.bf16.mxu0 0
        %3695 = vmatpush1.bf16.msra.mxu0 0
        %3696 = vmatprep.subr.bf16.mxu0 0
        %3697 = vmatpush1.bf16.msra.mxu0 0
        %3698 = vmatprep.subr.bf16.mxu0 0
        %3699 = vmatpush1.bf16.msra.mxu0 0
        %3700 = vmatprep.subr.bf16.mxu0 0
        %3701 = vmatpush1.bf16.msra.mxu0 0
        %3702 = vmatprep.subr.bf16.mxu0 0
        %3703 = vmatpush1.bf16.msra.mxu0 0
        %3704 = vmatprep.subr.bf16.mxu0 0
        %3705 = vmatpush1.bf16.msra.mxu0 0
        %3706 = vmatprep.subr.bf16.mxu0 0
        %3707 = vmatpush1.bf16.msra.mxu0 0
        %3708 = vmatprep.subr.bf16.mxu0 0
        %3709 = vmatpush1.bf16.msra.mxu0 0
        %3710 = vmatprep.subr.bf16.mxu0 0
        %3711 = vmatpush1.bf16.msra.mxu0 0
        %3712 = vmatprep.subr.bf16.mxu0 0
        %3713 = vmatpush1.bf16.msra.mxu0 0
        %3714 = vmatprep.subr.bf16.mxu0 0
        %3715 = vmatpush1.bf16.msra.mxu0 0
        %3716 = vmatprep.subr.bf16.mxu0 0
        %3717 = vmatpush1.bf16.msra.mxu0 0
        %3718 = vmatprep.subr.bf16.mxu0 0
        %3719 = vmatpush1.bf16.msra.mxu0 0
        %3720 = vmatprep.mubr.bf16.mxu0 0
        %3721 = vmatmul.mubr.bf16.gmra.mrb[0].mxu0 %v3683
        %v3722 = vpop.f32.mrb[0].mxu0
        %v3723 = vadd.f32 0.0, %v3722
        %v3724 = vpop.f32.mrb[0].mxu0
        %v3725 = vpop.f32.mrb[0].mxu0
        %v3726 = vpop.f32.mrb[0].mxu0
        %3727 = vdwg.mxu0
        %v3728 = vpack.c.bf16 %v3723, %v3675
        %3729 = vrot.lane.b32.xlu0 %v3508, 112
        %v3730 = vpop.permute.xlu0 %3729
        %3731 = vrot.lane.b32.xlu0 %v3508, 80
        %v3732 = vpop.permute.xlu0 %3731
        %v3734 = vsel %vm2610, %v3730, 0
        %v3737 = vsel %vm2610, %v3732, 0
        %3739 = vmatprep.subr.bf16.mxu0 0
        %3740 = vmatpush1.bf16.xpose.msra.mxu0 %v3737
        %3741 = vmatprep.subr.bf16.mxu0 0
        %3742 = vmatpush1.bf16.xpose.msra.mxu0 0
        %3743 = vmatprep.subr.bf16.mxu0 0
        %3744 = vmatpush1.bf16.xpose.msra.mxu0 0
        %3745 = vmatprep.subr.bf16.mxu0 0
        %3746 = vmatpush1.bf16.xpose.msra.mxu0 0
        %3747 = vmatprep.subr.bf16.mxu0 0
        %3748 = vmatpush1.bf16.xpose.msra.mxu0 0
        %3749 = vmatprep.subr.bf16.mxu0 0
        %3750 = vmatpush1.bf16.xpose.msra.mxu0 0
        %3751 = vmatprep.subr.bf16.mxu0 0
        %3752 = vmatpush1.bf16.xpose.msra.mxu0 0
        %3753 = vmatprep.subr.bf16.mxu0 0
        %3754 = vmatpush1.bf16.xpose.msra.mxu0 0
        %3755 = vmatprep.subr.bf16.mxu0 0
        %3756 = vmatpush1.bf16.xpose.msra.mxu0 0
        %3757 = vmatprep.subr.bf16.mxu0 0
        %3758 = vmatpush1.bf16.xpose.msra.mxu0 0
        %3759 = vmatprep.subr.bf16.mxu0 0
        %3760 = vmatpush1.bf16.xpose.msra.mxu0 0
        %3761 = vmatprep.subr.bf16.mxu0 0
        %3762 = vmatpush1.bf16.xpose.msra.mxu0 0
        %3763 = vmatprep.subr.bf16.mxu0 0
        %3764 = vmatpush1.bf16.xpose.msra.mxu0 0
        %3765 = vmatprep.subr.bf16.mxu0 0
        %3766 = vmatpush1.bf16.xpose.msra.mxu0 0
        %3767 = vmatprep.subr.bf16.mxu0 0
        %3768 = vmatpush1.bf16.xpose.msra.mxu0 0
        %3769 = vmatprep.subr.bf16.mxu0 0
        %3770 = vmatpush1.bf16.xpose.msra.mxu0 0
        %3771 = vmatprep.mubr.bf16.mxu0 0
        %3772 = vmatmul.mubr.bf16.gmra.mrb[0].mxu0 %v3734
        %v3773 = vpop.f32.mrb[0].mxu0
        %v3774 = vadd.f32 %v2465, %v3773
        %v3775 = vpop.f32.mrb[0].mxu0
        %v3776 = vpop.f32.mrb[0].mxu0
        %v3777 = vpop.f32.mrb[0].mxu0
        %3778 = vdwg.mxu0
        %3779 = vrot.lane.b32.xlu0 %v3509, 112
        %v3780 = vpop.permute.xlu0 %3779
        %3781 = vrot.lane.b32.xlu0 %v3509, 80
        %v3782 = vpop.permute.xlu0 %3781
        %v3784 = vsel %vm2610, %v3780, 0
        %v3787 = vsel %vm2610, %v3782, 0
        %3789 = vmatprep.subr.bf16.mxu0 0
        %3790 = vmatpush1.bf16.xpose.msra.mxu0 %v3787
        %3791 = vmatprep.subr.bf16.mxu0 0
        %3792 = vmatpush1.bf16.xpose.msra.mxu0 0
        %3793 = vmatprep.subr.bf16.mxu0 0
        %3794 = vmatpush1.bf16.xpose.msra.mxu0 0
        %3795 = vmatprep.subr.bf16.mxu0 0
        %3796 = vmatpush1.bf16.xpose.msra.mxu0 0
        %3797 = vmatprep.subr.bf16.mxu0 0
        %3798 = vmatpush1.bf16.xpose.msra.mxu0 0
        %3799 = vmatprep.subr.bf16.mxu0 0
        %3800 = vmatpush1.bf16.xpose.msra.mxu0 0
        %3801 = vmatprep.subr.bf16.mxu0 0
        %3802 = vmatpush1.bf16.xpose.msra.mxu0 0
        %3803 = vmatprep.subr.bf16.mxu0 0
        %3804 = vmatpush1.bf16.xpose.msra.mxu0 0
        %3805 = vmatprep.subr.bf16.mxu0 0
        %3806 = vmatpush1.bf16.xpose.msra.mxu0 0
        %3807 = vmatprep.subr.bf16.mxu0 0
        %3808 = vmatpush1.bf16.xpose.msra.mxu0 0
        %3809 = vmatprep.subr.bf16.mxu0 0
        %3810 = vmatpush1.bf16.xpose.msra.mxu0 0
        %3811 = vmatprep.subr.bf16.mxu0 0
        %3812 = vmatpush1.bf16.xpose.msra.mxu0 0
        %3813 = vmatprep.subr.bf16.mxu0 0
        %3814 = vmatpush1.bf16.xpose.msra.mxu0 0
        %3815 = vmatprep.subr.bf16.mxu0 0
        %3816 = vmatpush1.bf16.xpose.msra.mxu0 0
        %3817 = vmatprep.subr.bf16.mxu0 0
        %3818 = vmatpush1.bf16.xpose.msra.mxu0 0
        %3819 = vmatprep.subr.bf16.mxu0 0
        %3820 = vmatpush1.bf16.xpose.msra.mxu0 0
        %3821 = vmatprep.mubr.bf16.mxu0 0
        %3822 = vmatmul.mubr.bf16.gmra.mrb[0].mxu0 %v3784
        %v3823 = vpop.f32.mrb[0].mxu0
        %v3824 = vadd.f32 %v2465, %v3823
        %v3825 = vpop.f32.mrb[0].mxu0
        %v3826 = vpop.f32.mrb[0].mxu0
        %v3827 = vpop.f32.mrb[0].mxu0
        %3828 = vdwg.mxu0
        %v3829 = vsel %vm2706, %v3774, -inf
        %3830 = vmax.xlane.f32.xlu0 %v3829
        %v3831 = vpop.xlane.xlu0 %3830
        %v3832 = vsel %vm2706, %v3824, -inf
        %3833 = vmax.xlane.f32.xlu0 %v3832
        %v3834 = vpop.xlane.xlu0 %3833
        %v3835 = vsub.f32 %v3774, %v3831
        %v3836 = vsub.f32 %v3824, %v3834
        %v3837 = vmul.f32 %v3835, 1.442695
        %v3838 = vpow.pop %v3837
        %v3839 = vmul.f32 %v3836, 1.442695
        %v3840 = vpow.pop %v3839
        %v3841 = vsel %vm2706, %v3838, 0.0
        %3842 = vadd.xlane.f32.xlu0 %v3841
        %v3843 = vpop.xlane.xlu0 %3842
        %v3844 = vsel %vm2706, %v3840, 0.0
        %3845 = vadd.xlane.f32.xlu0 %v3844
        %v3846 = vpop.xlane.xlu0 %3845
        %v3847 = vrcp.pop %v3843
        %v3848 = vrcp.pop %v3846
        %v3849 = vmul.f32 %v3838, %v3847
        %v3850 = vmul.f32 %v3840, %v3848
        %v3851 = vpack.c.bf16 %v3849, %v3849
        %v3852 = vpack.c.bf16 %v3850, %v3850
        %3853 = vrot.lane.b32.xlu0 %v3508, 48
        %v3854 = vpop.permute.xlu0 %3853
        %v3856 = vsel %vm2706, %v3851, 0
        %v3859 = vsel %vm2736, %v3854, 0
        %3861 = vmatprep.subr.bf16.mxu0 0
        %3862 = vmatpush1.bf16.msra.mxu0 %v3859
        %3863 = vmatprep.subr.bf16.mxu0 0
        %3864 = vmatpush1.bf16.msra.mxu0 0
        %3865 = vmatprep.subr.bf16.mxu0 0
        %3866 = vmatpush1.bf16.msra.mxu0 0
        %3867 = vmatprep.subr.bf16.mxu0 0
        %3868 = vmatpush1.bf16.msra.mxu0 0
        %3869 = vmatprep.subr.bf16.mxu0 0
        %3870 = vmatpush1.bf16.msra.mxu0 0
        %3871 = vmatprep.subr.bf16.mxu0 0
        %3872 = vmatpush1.bf16.msra.mxu0 0
        %3873 = vmatprep.subr.bf16.mxu0 0
        %3874 = vmatpush1.bf16.msra.mxu0 0
        %3875 = vmatprep.subr.bf16.mxu0 0
        %3876 = vmatpush1.bf16.msra.mxu0 0
        %3877 = vmatprep.subr.bf16.mxu0 0
        %3878 = vmatpush1.bf16.msra.mxu0 0
        %3879 = vmatprep.subr.bf16.mxu0 0
        %3880 = vmatpush1.bf16.msra.mxu0 0
        %3881 = vmatprep.subr.bf16.mxu0 0
        %3882 = vmatpush1.bf16.msra.mxu0 0
        %3883 = vmatprep.subr.bf16.mxu0 0
        %3884 = vmatpush1.bf16.msra.mxu0 0
        %3885 = vmatprep.subr.bf16.mxu0 0
        %3886 = vmatpush1.bf16.msra.mxu0 0
        %3887 = vmatprep.subr.bf16.mxu0 0
        %3888 = vmatpush1.bf16.msra.mxu0 0
        %3889 = vmatprep.subr.bf16.mxu0 0
        %3890 = vmatpush1.bf16.msra.mxu0 0
        %3891 = vmatprep.subr.bf16.mxu0 0
        %3892 = vmatpush1.bf16.msra.mxu0 0
        %3893 = vmatprep.mubr.bf16.mxu0 0
        %3894 = vmatmul.mubr.bf16.gmra.mrb[0].mxu0 %v3856
        %v3895 = vpop.f32.mrb[0].mxu0
        %v3896 = vadd.f32 0.0, %v3895
        %v3897 = vpop.f32.mrb[0].mxu0
        %v3898 = vpop.f32.mrb[0].mxu0
        %v3899 = vpop.f32.mrb[0].mxu0
        %3900 = vdwg.mxu0
        %3901 = vrot.lane.b32.xlu0 %v3509, 48
        %v3902 = vpop.permute.xlu0 %3901
        %v3904 = vsel %vm2706, %v3852, 0
        %v3907 = vsel %vm2736, %v3902, 0
        %3909 = vmatprep.subr.bf16.mxu0 0
        %3910 = vmatpush1.bf16.msra.mxu0 %v3907
        %3911 = vmatprep.subr.bf16.mxu0 0
        %3912 = vmatpush1.bf16.msra.mxu0 0
        %3913 = vmatprep.subr.bf16.mxu0 0
        %3914 = vmatpush1.bf16.msra.mxu0 0
        %3915 = vmatprep.subr.bf16.mxu0 0
        %3916 = vmatpush1.bf16.msra.mxu0 0
        %3917 = vmatprep.subr.bf16.mxu0 0
        %3918 = vmatpush1.bf16.msra.mxu0 0
        %3919 = vmatprep.subr.bf16.mxu0 0
        %3920 = vmatpush1.bf16.msra.mxu0 0
        %3921 = vmatprep.subr.bf16.mxu0 0
        %3922 = vmatpush1.bf16.msra.mxu0 0
        %3923 = vmatprep.subr.bf16.mxu0 0
        %3924 = vmatpush1.bf16.msra.mxu0 0
        %3925 = vmatprep.subr.bf16.mxu0 0
        %3926 = vmatpush1.bf16.msra.mxu0 0
        %3927 = vmatprep.subr.bf16.mxu0 0
        %3928 = vmatpush1.bf16.msra.mxu0 0
        %3929 = vmatprep.subr.bf16.mxu0 0
        %3930 = vmatpush1.bf16.msra.mxu0 0
        %3931 = vmatprep.subr.bf16.mxu0 0
        %3932 = vmatpush1.bf16.msra.mxu0 0
        %3933 = vmatprep.subr.bf16.mxu0 0
        %3934 = vmatpush1.bf16.msra.mxu0 0
        %3935 = vmatprep.subr.bf16.mxu0 0
        %3936 = vmatpush1.bf16.msra.mxu0 0
        %3937 = vmatprep.subr.bf16.mxu0 0
        %3938 = vmatpush1.bf16.msra.mxu0 0
        %3939 = vmatprep.subr.bf16.mxu0 0
        %3940 = vmatpush1.bf16.msra.mxu0 0
        %3941 = vmatprep.mubr.bf16.mxu0 0
        %3942 = vmatmul.mubr.bf16.gmra.mrb[0].mxu0 %v3904
        %v3943 = vpop.f32.mrb[0].mxu0
        %v3944 = vadd.f32 0.0, %v3943
        %v3945 = vpop.f32.mrb[0].mxu0
        %v3946 = vpop.f32.mrb[0].mxu0
        %v3947 = vpop.f32.mrb[0].mxu0
        %3948 = vdwg.mxu0
        %v3949 = vpack.c.bf16 %v3944, %v3896
        %v3952 = vunpack.c.l.b16 %v3390
        %v3953 = vunpack.c.l.b16 %v3391
        %v3954 = vpack.c.b16 %v3953, %v3952
        %v3957 = vsel %vm2610, %v3949, 0
        %3959 = vmatprep.subr.bf16.mxu0 0
        %3960 = vmatpush1.bf16.msra.mxu0 %v3954
        %3961 = vmatprep.subr.bf16.mxu0 0
        %3962 = vmatpush1.bf16.msra.mxu0 0
        %3963 = vmatprep.subr.bf16.mxu0 0
        %3964 = vmatpush1.bf16.msra.mxu0 0
        %3965 = vmatprep.subr.bf16.mxu0 0
        %3966 = vmatpush1.bf16.msra.mxu0 0
        %3967 = vmatprep.subr.bf16.mxu0 0
        %3968 = vmatpush1.bf16.msra.mxu0 0
        %3969 = vmatprep.subr.bf16.mxu0 0
        %3970 = vmatpush1.bf16.msra.mxu0 0
        %3971 = vmatprep.subr.bf16.mxu0 0
        %3972 = vmatpush1.bf16.msra.mxu0 0
        %3973 = vmatprep.subr.bf16.mxu0 0
        %3974 = vmatpush1.bf16.msra.mxu0 0
        %3975 = vmatprep.subr.bf16.mxu0 0
        %3976 = vmatpush1.bf16.msra.mxu0 0
        %3977 = vmatprep.subr.bf16.mxu0 0
        %3978 = vmatpush1.bf16.msra.mxu0 0
        %3979 = vmatprep.subr.bf16.mxu0 0
        %3980 = vmatpush1.bf16.msra.mxu0 0
        %3981 = vmatprep.subr.bf16.mxu0 0
        %3982 = vmatpush1.bf16.msra.mxu0 0
        %3983 = vmatprep.subr.bf16.mxu0 0
        %3984 = vmatpush1.bf16.msra.mxu0 0
        %3985 = vmatprep.subr.bf16.mxu0 0
        %3986 = vmatpush1.bf16.msra.mxu0 0
        %3987 = vmatprep.subr.bf16.mxu0 0
        %3988 = vmatpush1.bf16.msra.mxu0 0
        %3989 = vmatprep.subr.bf16.mxu0 0
        %3990 = vmatpush1.bf16.msra.mxu0 0
        %3991 = vmatprep.mubr.bf16.mxu0 0
        %3992 = vmatmul.mubr.bf16.gmra.mrb[0].mxu0 %v3957
        %v3993 = vpop.f32.mrb[0].mxu0
        %v3994 = vadd.f32 0.0, %v3993
        %v3995 = vpop.f32.mrb[0].mxu0
        %v3996 = vpop.f32.mrb[0].mxu0
        %v3997 = vadd.f32 0.0, %v3996
        %v3998 = vpop.f32.mrb[0].mxu0
        %3999 = vdwg.mxu0
        %v4002 = vunpack.c.l.b16 %v3388
        %v4003 = vunpack.c.l.b16 %v3389
        %v4004 = vpack.c.b16 %v4003, %v4002
        %v4007 = vsel %vm2610, %v3728, 0
        %4009 = vmatprep.subr.bf16.mxu0 0
        %4010 = vmatpush1.bf16.msra.mxu0 %v4004
        %4011 = vmatprep.subr.bf16.mxu0 0
        %4012 = vmatpush1.bf16.msra.mxu0 0
        %4013 = vmatprep.subr.bf16.mxu0 0
        %4014 = vmatpush1.bf16.msra.mxu0 0
        %4015 = vmatprep.subr.bf16.mxu0 0
        %4016 = vmatpush1.bf16.msra.mxu0 0
        %4017 = vmatprep.subr.bf16.mxu0 0
        %4018 = vmatpush1.bf16.msra.mxu0 0
        %4019 = vmatprep.subr.bf16.mxu0 0
        %4020 = vmatpush1.bf16.msra.mxu0 0
        %4021 = vmatprep.subr.bf16.mxu0 0
        %4022 = vmatpush1.bf16.msra.mxu0 0
        %4023 = vmatprep.subr.bf16.mxu0 0
        %4024 = vmatpush1.bf16.msra.mxu0 0
        %4025 = vmatprep.subr.bf16.mxu0 0
        %4026 = vmatpush1.bf16.msra.mxu0 0
        %4027 = vmatprep.subr.bf16.mxu0 0
        %4028 = vmatpush1.bf16.msra.mxu0 0
        %4029 = vmatprep.subr.bf16.mxu0 0
        %4030 = vmatpush1.bf16.msra.mxu0 0
        %4031 = vmatprep.subr.bf16.mxu0 0
        %4032 = vmatpush1.bf16.msra.mxu0 0
        %4033 = vmatprep.subr.bf16.mxu0 0
        %4034 = vmatpush1.bf16.msra.mxu0 0
        %4035 = vmatprep.subr.bf16.mxu0 0
        %4036 = vmatpush1.bf16.msra.mxu0 0
        %4037 = vmatprep.subr.bf16.mxu0 0
        %4038 = vmatpush1.bf16.msra.mxu0 0
        %4039 = vmatprep.subr.bf16.mxu0 0
        %4040 = vmatpush1.bf16.msra.mxu0 0
        %4041 = vmatprep.mubr.bf16.mxu0 0
        %4042 = vmatmul.mubr.bf16.gmra.mrb[0].mxu0 %v4007
        %v4043 = vpop.f32.mrb[0].mxu0
        %v4044 = vadd.f32 %v3994, %v4043
        %v4045 = vpop.f32.mrb[0].mxu0
        %v4046 = vpop.f32.mrb[0].mxu0
        %v4047 = vadd.f32 %v3997, %v4046
        %v4048 = vpop.f32.mrb[0].mxu0
        %4049 = vdwg.mxu0
        %v4050 = vadd.f32 %v3369, %v4044
        %v4051 = vadd.f32 %v3370, %v4047
        %v4052 = vlaneseq
        %v4053 = vshrl.u32 %v4052, 7
        %v4054 = vsub.s32 0, %v4053
        %v4055 = vrot.slane %v3374, %v4054
        %v4056 = vadd.f32 %v4050, %v4055
        %v4057 = vadd.f32 %v4051, %v4055
        %v4058 = vsel %vm2504, %v4056, 0.0
        %4059 = vadd.xlane.f32.xlu0 %v4058
        %v4060 = vpop.xlane.xlu0 %4059
        %v4061 = vsel %vm2504, %v4057, 0.0
        %4062 = vadd.xlane.f32.xlu0 %v4061
        %v4063 = vpop.xlane.xlu0 %4062
        %v4064 = vmul.f32 %v4060, %v2511
        %v4065 = vmul.f32 %v4063, %v2511
        %v4066 = vsub.f32 %v4056, %v4064
        %v4067 = vsub.f32 %v4057, %v4065
        %v4068 = vmul.f32 %v4066, %v4066
        %v4069 = vmul.f32 %v4067, %v4067
        %v4070 = vsel %vm2504, %v4068, 0.0
        %4071 = vadd.xlane.f32.xlu0 %v4070
        %v4072 = vpop.xlane.xlu0 %4071
        %v4073 = vsel %vm2504, %v4069, 0.0
        %4074 = vadd.xlane.f32.xlu0 %v4073
        %v4075 = vpop.xlane.xlu0 %4074
        %v4076 = vmul.f32 %v4072, %v2511
        %v4077 = vmul.f32 %v4075, %v2511
        %v4078 = vadd.f32 %v4076, 1e-05
        %v4079 = vadd.f32 %v4077, 1e-05
        %v4080 = vrsqrt.pop %v4078
        %v4081 = vrsqrt.pop %v4079
        %v4082 = vmul.f32 %v4066, %v4080
        %v4083 = vmul.f32 %v4067, %v4081
        %v4084 = vlaneseq
        %v4085 = vshrl.u32 %v4084, 7
        %v4086 = vsub.s32 0, %v4085
        %v4087 = vrot.slane %v3375, %v4086
        %v4088 = vmul.f32 %v4082, %v4087
        %v4089 = vmul.f32 %v4083, %v4087
        %v4090 = vlaneseq
        %v4091 = vshrl.u32 %v4090, 7
        %v4092 = vsub.s32 0, %v4091
        %v4093 = vrot.slane %v3376, %v4092
        %v4094 = vadd.f32 %v4088, %v4093
        %v4095 = vadd.f32 %v4089, %v4093
        %v4096 = vpack.c.bf16 %v4095, %v4094
        %v4097 = vlaneseq
        %v4098 = vshrl.u32 %v4097, 7
        %v4099 = vsub.s32 0, %v4098
        %v4100 = vrot.slane %v3377, %v4099
        %v4105 = vunpack.c.l.b16 %v3384
        %v4106 = vunpack.c.l.b16 %v3385
        %v4107 = vunpack.c.l.b16 %v3386
        %v4108 = vunpack.c.l.b16 %v3387
        %v4109 = vpack.c.b16 %v4106, %v4105
        %v4110 = vpack.c.b16 %v4108, %v4107
        %v4114 = vsel %vm2504, %v4096, 0
        %4116 = vmatprep.subr.bf16.mxu0 0
        %4117 = vmatpush1.bf16.msra.mxu0 %v4109
        %4118 = vmatprep.subr.bf16.mxu0 0
        %4119 = vmatpush1.bf16.msra.mxu0 %v4110
        %4120 = vmatprep.subr.bf16.mxu0 0
        %4121 = vmatpush1.bf16.msra.mxu0 0
        %4122 = vmatprep.subr.bf16.mxu0 0
        %4123 = vmatpush1.bf16.msra.mxu0 0
        %4124 = vmatprep.subr.bf16.mxu0 0
        %4125 = vmatpush1.bf16.msra.mxu0 0
        %4126 = vmatprep.subr.bf16.mxu0 0
        %4127 = vmatpush1.bf16.msra.mxu0 0
        %4128 = vmatprep.subr.bf16.mxu0 0
        %4129 = vmatpush1.bf16.msra.mxu0 0
        %4130 = vmatprep.subr.bf16.mxu0 0
        %4131 = vmatpush1.bf16.msra.mxu0 0
        %4132 = vmatprep.subr.bf16.mxu0 0
        %4133 = vmatpush1.bf16.msra.mxu0 0
        %4134 = vmatprep.subr.bf16.mxu0 0
        %4135 = vmatpush1.bf16.msra.mxu0 0
        %4136 = vmatprep.subr.bf16.mxu0 0
        %4137 = vmatpush1.bf16.msra.mxu0 0
        %4138 = vmatprep.subr.bf16.mxu0 0
        %4139 = vmatpush1.bf16.msra.mxu0 0
        %4140 = vmatprep.subr.bf16.mxu0 0
        %4141 = vmatpush1.bf16.msra.mxu0 0
        %4142 = vmatprep.subr.bf16.mxu0 0
        %4143 = vmatpush1.bf16.msra.mxu0 0
        %4144 = vmatprep.subr.bf16.mxu0 0
        %4145 = vmatpush1.bf16.msra.mxu0 0
        %4146 = vmatprep.subr.bf16.mxu0 0
        %4147 = vmatpush1.bf16.msra.mxu0 0
        %4148 = vmatprep.mubr.bf16.mxu0 0
        %4149 = vmatmul.mubr.bf16.gmra.mrb[0].mxu0 %v4114
        %v4150 = vpop.f32.mrb[0].mxu0
        %v4151 = vadd.f32 %v4100, %v4150
        %v4152 = vpop.f32.mrb[0].mxu0
        %v4153 = vpop.f32.mrb[0].mxu0
        %v4154 = vadd.f32 %v4100, %v4153
        %v4155 = vpop.f32.mrb[0].mxu0
        %4156 = vdwg.mxu0
        %v4157 = vmul.f32 %v4151, %v4151
        %v4158 = vmul.f32 %v4154, %v4154
        %v4159 = vmul.f32 %v4151, %v4157
        %v4160 = vmul.f32 %v4154, %v4158
        %v4161 = vmul.f32 %v4159, 0.044715
        %v4162 = vmul.f32 %v4160, 0.044715
        %v4163 = vadd.f32 %v4151, %v4161
        %v4164 = vadd.f32 %v4154, %v4162
        %v4165 = vmul.f32 %v4163, 0.7978846
        %v4166 = vmul.f32 %v4164, 0.7978846
        %v4167 = vtanh.pop %v4165
        %v4168 = vtanh.pop %v4166
        %v4169 = vadd.f32 %v4167, 1.0
        %v4170 = vadd.f32 %v4168, 1.0
        %v4171 = vmul.f32 %v4169, 0.5
        %v4172 = vmul.f32 %v4170, 0.5
        %v4173 = vmul.f32 %v4151, %v4171
        %v4174 = vmul.f32 %v4154, %v4172
        %v4175 = vpack.c.bf16 %v4174, %v4173
        %v4176 = vlaneseq
        %v4177 = vshrl.u32 %v4176, 7
        %v4178 = vsub.s32 0, %v4177
        %v4179 = vrot.slane %v3378, %v4178
        %v4196 = vunpack.c.l.b16 %v3393
        %v4197 = vunpack.c.l.b16 %v3394
        %v4198 = vunpack.c.l.b16 %v3395
        %v4199 = vunpack.c.l.b16 %v3396
        %v4200 = vunpack.c.l.b16 %v3397
        %v4201 = vunpack.c.l.b16 %v3398
        %v4202 = vunpack.c.l.b16 %v3399
        %v4203 = vunpack.c.l.b16 %v3400
        %v4204 = vunpack.c.l.b16 %v3401
        %v4205 = vunpack.c.l.b16 %v3402
        %v4206 = vunpack.c.l.b16 %v3403
        %v4207 = vunpack.c.l.b16 %v3404
        %v4208 = vunpack.c.l.b16 %v3405
        %v4209 = vunpack.c.l.b16 %v3406
        %v4210 = vunpack.c.l.b16 %v3407
        %v4211 = vunpack.c.l.b16 %v3408
        %v4212 = vpack.c.b16 %v4197, %v4196
        %v4213 = vpack.c.b16 %v4199, %v4198
        %v4214 = vpack.c.b16 %v4201, %v4200
        %v4215 = vpack.c.b16 %v4203, %v4202
        %v4216 = vpack.c.b16 %v4205, %v4204
        %v4217 = vpack.c.b16 %v4207, %v4206
        %v4218 = vpack.c.b16 %v4209, %v4208
        %v4219 = vpack.c.b16 %v4211, %v4210
        %4228 = vmatprep.subr.bf16.mxu0 0
        %4229 = vmatpush1.bf16.msra.mxu0 %v4212
        %4230 = vmatprep.subr.bf16.mxu0 0
        %4231 = vmatpush1.bf16.msra.mxu0 %v4213
        %4232 = vmatprep.subr.bf16.mxu0 0
        %4233 = vmatpush1.bf16.msra.mxu0 %v4214
        %4234 = vmatprep.subr.bf16.mxu0 0
        %4235 = vmatpush1.bf16.msra.mxu0 %v4215
        %4236 = vmatprep.subr.bf16.mxu0 0
        %4237 = vmatpush1.bf16.msra.mxu0 %v4216
        %4238 = vmatprep.subr.bf16.mxu0 0
        %4239 = vmatpush1.bf16.msra.mxu0 %v4217
        %4240 = vmatprep.subr.bf16.mxu0 0
        %4241 = vmatpush1.bf16.msra.mxu0 %v4218
        %4242 = vmatprep.subr.bf16.mxu0 0
        %4243 = vmatpush1.bf16.msra.mxu0 %v4219
        %4244 = vmatprep.subr.bf16.mxu0 0
        %4245 = vmatpush1.bf16.msra.mxu0 0
        %4246 = vmatprep.subr.bf16.mxu0 0
        %4247 = vmatpush1.bf16.msra.mxu0 0
        %4248 = vmatprep.subr.bf16.mxu0 0
        %4249 = vmatpush1.bf16.msra.mxu0 0
        %4250 = vmatprep.subr.bf16.mxu0 0
        %4251 = vmatpush1.bf16.msra.mxu0 0
        %4252 = vmatprep.subr.bf16.mxu0 0
        %4253 = vmatpush1.bf16.msra.mxu0 0
        %4254 = vmatprep.subr.bf16.mxu0 0
        %4255 = vmatpush1.bf16.msra.mxu0 0
        %4256 = vmatprep.subr.bf16.mxu0 0
        %4257 = vmatpush1.bf16.msra.mxu0 0
        %4258 = vmatprep.subr.bf16.mxu0 0
        %4259 = vmatpush1.bf16.msra.mxu0 0
        %4260 = vmatprep.mubr.bf16.mxu0 0
        %4261 = vmatmul.mubr.bf16.gmra.mrb[0].mxu0 %v4175
        %v4262 = vpop.f32.mrb[0].mxu0
        %v4263 = vadd.f32 %v4179, %v4262
        %v4264 = vpop.f32.mrb[0].mxu0
        %v4265 = vpop.f32.mrb[0].mxu0
        %v4266 = vadd.f32 %v4179, %v4265
        %v4267 = vpop.f32.mrb[0].mxu0
        %4268 = vdwg.mxu0
        %v4269 = vadd.f32 %v4056, %v4263
        %v4270 = vadd.f32 %v4057, %v4266
        %s4271 = sld [smem:[#allocation3]]
        %v4272 = vstv %s4271
        %vm4273 = vcmp.eq.s32.totalorder %v2459, %v4272
        %v4274 = vsel %vm4273, 1, 0
        %v4275 = vcvt.s32.f32 %v4274
        %v4276 = vmul.f32 %v4269, %v4275
        %v4277 = vsel %vm2504, %v4276, 0.0
        %v4278 = vrot.slane %v4277, 4
        %v4279 = vadd.f32 %v4277, %v4278
        %v4280 = vrot.slane %v4279, 2
        %v4281 = vadd.f32 %v4279, %v4280
        %v4282 = vrot.slane %v4281, 1
        %v4283 = vadd.f32 %v4281, %v4282
        %s4284 = sld [smem:[#allocation3 + $0x1]]
        %v4285 = vstv %s4284
        %vm4286 = vcmp.eq.s32.totalorder %v2459, %v4285
        %v4287 = vsel %vm4286, 1, 0
        %v4288 = vcvt.s32.f32 %v4287
        %v4289 = vmul.f32 %v4270, %v4288
        %v4290 = vsel %vm2504, %v4289, 0.0
        %v4291 = vrot.slane %v4290, 4
        %v4292 = vadd.f32 %v4290, %v4291
        %v4293 = vrot.slane %v4292, 2
        %v4294 = vadd.f32 %v4292, %v4293
        %v4295 = vrot.slane %v4294, 1
        %v4296 = vadd.f32 %v4294, %v4295
        %vm4297 = vcmask 1040384
        %v4298 = vsel %vm4297, %v4283, %v4296
        %v4299 = vld [vmem:[%s4 + $0x12] sm:$0x1]
        %v4300 = vld [vmem:[%s4 + $0x13] sm:$0x1]
        %s4301 = scalar_lea.vmem %s8, 16
        %v4302 = vld [vmem:[%s4301] sm:$0xf]
        %v4303 = vld [vmem:[%s4301 + $0x4] sm:$0xf]
        %v4304 = vld [vmem:[%s4301 + $0x8] sm:$0xf]
        %v4305 = vld [vmem:[%s4301 + $0xc] sm:$0xf]
        %vm4306 = vcmask 254976
        %v4307 = vsel %vm4306, %v4298, 0.0
        %4308 = vadd.xlane.f32.xlu0 %v4307
        %v4309 = vpop.xlane.xlu0 %4308
        %v4310 = vmul.f32 %v4309, %v2511
        %v4311 = vsub.f32 %v4298, %v4310
        %v4312 = vmul.f32 %v4311, %v4311
        %v4313 = vsel %vm4306, %v4312, 0.0
        %4314 = vadd.xlane.f32.xlu0 %v4313
        %v4315 = vpop.xlane.xlu0 %4314
        %v4316 = vmul.f32 %v4315, %v2511
        %v4317 = vadd.f32 %v4316, 1e-05
        %v4318 = vrsqrt.pop %v4317
        %v4319 = vmul.f32 %v4311, %v4318
        %v4320 = vlaneseq
        %v4321 = vshrl.u32 %v4320, 7
        %v4322 = vsub.s32 0, %v4321
        %v4323 = vrot.slane %v4299, %v4322
        %v4324 = vmul.f32 %v4319, %v4323
        %v4325 = vlaneseq
        %v4326 = vshrl.u32 %v4325, 7
        %v4327 = vsub.s32 0, %v4326
        %v4328 = vrot.slane %v4300, %v4327
        %v4329 = vadd.f32 %v4324, %v4328
        %v4330 = vpack.c.bf16 %v4329, %v4329
        %v4335 = vunpack.c.l.b16 %v4302
        %v4336 = vunpack.c.l.b16 %v4303
        %v4337 = vunpack.c.l.b16 %v4304
        %v4338 = vunpack.c.l.b16 %v4305
        %v4339 = vpack.c.b16 %v4336, %v4335
        %v4340 = vpack.c.b16 %v4338, %v4337
        %v4344 = vsel %vm2504, %v4330, 0
        %4346 = vmatprep.subr.bf16.mxu0 0
        %4347 = vmatpush1.bf16.msra.mxu0 %v4339
        %4348 = vmatprep.subr.bf16.mxu0 0
        %4349 = vmatpush1.bf16.msra.mxu0 %v4340
        %4350 = vmatprep.subr.bf16.mxu0 0
        %4351 = vmatpush1.bf16.msra.mxu0 0
        %4352 = vmatprep.subr.bf16.mxu0 0
        %4353 = vmatpush1.bf16.msra.mxu0 0
        %4354 = vmatprep.subr.bf16.mxu0 0
        %4355 = vmatpush1.bf16.msra.mxu0 0
        %4356 = vmatprep.subr.bf16.mxu0 0
        %4357 = vmatpush1.bf16.msra.mxu0 0
        %4358 = vmatprep.subr.bf16.mxu0 0
        %4359 = vmatpush1.bf16.msra.mxu0 0
        %4360 = vmatprep.subr.bf16.mxu0 0
        %4361 = vmatpush1.bf16.msra.mxu0 0
        %4362 = vmatprep.subr.bf16.mxu0 0
        %4363 = vmatpush1.bf16.msra.mxu0 0
        %4364 = vmatprep.subr.bf16.mxu0 0
        %4365 = vmatpush1.bf16.msra.mxu0 0
        %4366 = vmatprep.subr.bf16.mxu0 0
        %4367 = vmatpush1.bf16.msra.mxu0 0
        %4368 = vmatprep.subr.bf16.mxu0 0
        %4369 = vmatpush1.bf16.msra.mxu0 0
        %4370 = vmatprep.subr.bf16.mxu0 0
        %4371 = vmatpush1.bf16.msra.mxu0 0
        %4372 = vmatprep.subr.bf16.mxu0 0
        %4373 = vmatpush1.bf16.msra.mxu0 0
        %4374 = vmatprep.subr.bf16.mxu0 0
        %4375 = vmatpush1.bf16.msra.mxu0 0
        %4376 = vmatprep.subr.bf16.mxu0 0
        %4377 = vmatpush1.bf16.msra.mxu0 0
        %4378 = vmatprep.mubr.bf16.mxu0 0
        %4379 = vmatmul.mubr.bf16.gmra.mrb[0].mxu0 %v4344
        %v4380 = vpop.f32.mrb[0].mxu0
        %v4381 = vadd.f32 0.0, %v4380
        %v4382 = vpop.f32.mrb[0].mxu0
        %v4383 = vpop.f32.mrb[0].mxu0
        %v4384 = vpop.f32.mrb[0].mxu0
        %4385 = vdwg.mxu0
        %v4386 = vmul.f32 %v4381, %v4381
        %vm4387 = vcmask 123904
        %v4388 = vsel %vm4387, %v4386, 0.0
        %4389 = vadd.xlane.f32.xlu0 %v4388
        %v4390 = vpop.xlane.xlu0 %4389
        %v4391 = vmax.f32 %v4390, 1e-12
        %v4392 = vrsqrt.pop %v4391
        %v4393 = vmul.f32 %v4381, %v4392
        %4394 = vst.msk [vmem:[%s290] sm:$0x3] %vm4387, %v4393
      $region60: #{clip_wrapper_forward.1} parent=51 // pred_fallthru
        _
      %p4395 = scmp.lt.s32.totalorder %s26, 1
      %s4396 = scalar_select %p4395, %s26, 1
      %s4397 = smul.addr %s4396, 2
      %s4398 = scalar_lea.vmem %s9, %s4397
      // Predicated region
      $region61: #{clip_wrapper_forward.1} parent=51 // pred_check
        %p4399 = pneg %p212
      $region62: #{clip_wrapper_forward.1} parent=51 // pred_check_branch
        %4401 = sbr.rel (%p4399) target = $region64
      $region63: #{clip_wrapper_forward.1} parent=51 // pred_region
        _
      $region64: #{clip_wrapper_forward.1} parent=51 // pred_fallthru
        _
    $region52: #{clip_wrapper_forward.1} parent=5 // pred_fallthru
      _
    %p4402 = scmp.le.s32.totalorder 2, %s21
    // Predicated region
    $region65: #{clip_wrapper_forward.1} parent=5 // pred_check
      %p4403 = pneg %p4402
    $region66: #{clip_wrapper_forward.1} parent=5 // pred_check_branch
      %4405 = sbr.rel (%p4403) target = $region68
    $region67: #{clip_wrapper_forward.1} parent=5 // pred_region
      %s4406 = ssub.s32 %s21, 2
      // Predicated region
      $region69: #{clip_wrapper_forward.1} parent=67 // pred_check
        %p4407 = pneg %p218
      $region70: #{clip_wrapper_forward.1} parent=67 // pred_check_branch
        %4409 = sbr.rel (%p4407) target = $region72
      $region71: #{clip_wrapper_forward.1} parent=67 // pred_region
        %p4410 = scmp.lt.s32.totalorder %s27, 1
        %s4411 = scalar_select %p4410, %s27, 1
        %s4412 = smul.addr %s4411, 2
        %s4413 = scalar_lea.vmem %s9, %s4412
      $region72: #{clip_wrapper_forward.1} parent=67 // pred_fallthru
        _
    $region68: #{clip_wrapper_forward.1} parent=5 // pred_fallthru
      _
  $region6: #{clip_wrapper_forward.1} parent=0 // loop_footer
    %s25 = sadd.s32 1, %s21
  $region7: #{clip_wrapper_forward.1} parent=0 // loop_footer_branch
    %20 = sbr.rel target = $region3
  $region8: #{clip_wrapper_forward.1} parent=0 // loop_exit
    _

</llo_original>
